<compile_context>
chip_gen: v6e
topology: v6e:2x2x1
jax: 0.10.0
libtpu: 0.0.40
codegen_flags: <defaults>
</compile_context>

<pallas_src>
import functools

import jax
import jax.numpy as jnp
from jax.experimental import pallas as pl
from jax.experimental.pallas import tpu as pltpu


def encoder_kernel(xq_ref, xkv_ref, wq_ref, wkv_ref,
                   ln1g_ref, ln1b_ref,
                   w1_ref, b1_ref, w2_ref, b2_ref,
                   ln2g_ref, ln2b_ref,
                   out_ref,
                   k_ref, v_ref,
                   *, num_heads, eps=1e-5):
    bf16 = jnp.bfloat16
    f32 = jnp.float32

    xq = xq_ref[0].astype(f32)                 # (tS, E) query-row tile (f32 residual path)
    tS, E = xq.shape
    H = num_heads
    D = E // H
    S = xkv_ref.shape[1]

    # ---- K/V projection: ONCE per batch row (first seq tile only), stored
    # head-major in VMEM scratch so later tiles skip the matmul and the relayout.
    @pl.when(pl.program_id(1) == 0)
    def _():
        kv = jnp.dot(xkv_ref[0], wkv_ref[...],
                     preferred_element_type=f32)                 # (S, 2E), f32 acc
        for h in range(H):                                       # static loop, 2-D slices only
            k_ref[h] = kv[:, h * D:(h + 1) * D].astype(bf16)     # (S, D)
            v_ref[h] = kv[:, E + h * D:E + (h + 1) * D].astype(bf16)

    # ---- Q projection (softmax scale 1/sqrt(E) pre-folded into wq_t) ----
    q = jnp.dot(xq.astype(bf16), wq_ref[...],
                preferred_element_type=f32)                      # (tS, E)

    # Head-batched attention with a leading head axis.  Per-head lane slices +
    # stack avoid a sublane-crossing (tS, H, D) transpose per tile.
    qh = jnp.stack([q[:, h * D:(h + 1) * D] for h in range(H)],
                   axis=0).astype(bf16)                          # (H, tS, D)

    s = jnp.einsum("hqd,hkd->hqk", qh, k_ref[...],
                   preferred_element_type=f32)                   # (H, tS, S)
    m = jnp.max(s, axis=-1, keepdims=True)
    p = jnp.exp(s - m)
    p = p / jnp.sum(p, axis=-1, keepdims=True)                   # exact softmax
    o = jnp.einsum("hqk,hkd->hqd", p.astype(bf16), v_ref[...],
                   preferred_element_type=f32)                   # (H, tS, D)
    attn = jnp.concatenate([o[h] for h in range(H)], axis=-1)    # (tS, E)

    # ---- residual + LayerNorm 1 (f32 statistics) ----
    h1 = xq + attn
    mu1 = jnp.mean(h1, axis=-1, keepdims=True)
    var1 = jnp.mean((h1 - mu1) ** 2, axis=-1, keepdims=True)
    y1 = (h1 - mu1) * jax.lax.rsqrt(var1 + eps) * ln1g_ref[0] + ln1b_ref[0]

    # ---- feed-forward: Linear(E->F) -> ReLU -> Linear(F->E), bf16 MXU dots ----
    ff = jnp.dot(y1.astype(bf16), w1_ref[...],
                 preferred_element_type=f32) + b1_ref[0]
    ff = jnp.maximum(ff, 0.0)
    ff = jnp.dot(ff.astype(bf16), w2_ref[...],
                 preferred_element_type=f32) + b2_ref[0]

    # ---- residual + LayerNorm 2 (f32 statistics) ----
    h2 = y1 + ff
    mu2 = jnp.mean(h2, axis=-1, keepdims=True)
    var2 = jnp.mean((h2 - mu2) ** 2, axis=-1, keepdims=True)
    y2 = (h2 - mu2) * jax.lax.rsqrt(var2 + eps) * ln2g_ref[0] + ln2b_ref[0]
    out_ref[0] = y2.astype(out_ref.dtype)


def _const_index_map(ndim):
    return lambda b, s: (0,) * ndim


def _make_specs(S, E, F, tS, weight_buffer_count):
    def const_spec(shape):
        kwargs = {}
        if weight_buffer_count is not None:
            # Constant-index blocks never change -> no double-buffering needed.
            kwargs["pipeline_mode"] = pl.Buffered(weight_buffer_count)
        return pl.BlockSpec(shape, _const_index_map(len(shape)), **kwargs)

    in_specs = [
        pl.BlockSpec((1, tS, E), lambda b, s: (b, s, 0)),   # x   f32 query-row tile
        pl.BlockSpec((1, S, E), lambda b, s: (b, 0, 0)),    # x   bf16 full seq (re-DMA'd only on new b)
        const_spec((E, E)),          # wq_t  (bf16, 1/sqrt(E) pre-folded)
        const_spec((E, 2 * E)),      # wkv_t (bf16)
        const_spec((1, E)),          # ln1 gamma
        const_spec((1, E)),          # ln1 beta
        const_spec((E, F)),          # w1_t  (bf16)
        const_spec((1, F)),          # b1
        const_spec((F, E)),          # w2_t  (bf16)
        const_spec((1, E)),          # b2
        const_spec((1, E)),          # ln2 gamma
        const_spec((1, E)),          # ln2 beta
    ]
    out_spec = pl.BlockSpec((1, tS, E), lambda b, s: (b, s, 0))   # lane-dense (E % 128 == 0)
    return in_specs, out_spec


def _encoder_pallas_call(x, x_kv, params, *, num_heads, seq_tile,
                         vmem_limit_bytes, weight_buffer_count):
    B, S, E = x.shape
    F = params["w1_t"].shape[1]
    H = num_heads
    D = E // H
    tS = seq_tile
    nS = S // tS
    in_specs, out_spec = _make_specs(S, E, F, tS, weight_buffer_count)
    kernel = functools.partial(encoder_kernel, num_heads=num_heads)
    return pl.pallas_call(
        kernel,
        out_shape=jax.ShapeDtypeStruct((B, S, E), x.dtype),
        grid_spec=pltpu.PrefetchScalarGridSpec(
            num_scalar_prefetch=0,
            grid=(B, nS),
            in_specs=in_specs,
            out_specs=out_spec,
            scratch_shapes=[
                pltpu.VMEM((H, S, D), jnp.bfloat16),   # K, head-major, persists per batch row
                pltpu.VMEM((H, S, D), jnp.bfloat16),   # V
            ],
        ),
        compiler_params=pltpu.CompilerParams(
            # Batch rows are independent ("parallel": shards across v7x's 2 TCs when
            # B >= 2; if B == 1 in production, make the seq-tile axis the parallel
            # one instead).  The seq-tile axis must stay "arbitrary": the K/V
            # scratch is filled at s == 0 and reused by the remaining tiles.
            dimension_semantics=("parallel", "arbitrary"),
            vmem_limit_bytes=vmem_limit_bytes,
        ),
    )(x, x_kv,
      params["wq_t"], params["wkv_t"],
      params["ln1_g"], params["ln1_b"],
      params["w1_t"], params["b1"], params["w2_t"], params["b2"],
      params["ln2_g"], params["ln2_b"])


def encoder_forward(x, params, *, num_heads, seq_tile=None,
                    vmem_limit_bytes=48 * 1024 * 1024):
    """x: (B, S, E) float32.  params: dict from make_params.

    Tuning: seq_tile >= 128 on v5e, >= 256 on v6e (and raise vmem_limit_bytes
    toward ~96 MiB there); keep vmem_limit_bytes <= ~48 MiB on v7x.
    """
    B, S, E = x.shape
    tS = S if seq_tile is None else seq_tile
    assert S % tS == 0, "seq_tile must divide S"
    # K/V path only ever feeds bf16 MXU operands -> ship the full-sequence copy as
    # bf16 (halves the largest per-step DMA).  The f32 query tile keeps full
    # precision for the residual / LayerNorm path.
    x_kv = x.astype(jnp.bfloat16)
    call = functools.partial(_encoder_pallas_call, x, x_kv, params,
                             num_heads=num_heads, seq_tile=tS,
                             vmem_limit_bytes=vmem_limit_bytes)
    try:
        return call(weight_buffer_count=1)
    except Exception:
        # pipeline_mode=pl.Buffered(1) not supported on this JAX build -> fall back
        # to default double-buffered weight blocks (correctness unchanged).
        return call(weight_buffer_count=None)


def reference_forward(x, params, *, num_heads, eps=1e-5):
    """Pure-JAX reference mirroring the PyTorch module with the same mixed-precision
    policy as the kernel (bf16 dot inputs, f32 accumulation & statistics).  The
    1/sqrt(E) softmax scale is already folded into params['wq_t']."""
    bf16 = jnp.bfloat16
    B, S, E = x.shape
    H = num_heads
    D = E // H
    x16 = x.astype(bf16)

    q = jnp.dot(x16, params["wq_t"], preferred_element_type=jnp.float32)
    kv = jnp.dot(x16, params["wkv_t"], preferred_element_type=jnp.float32)
    k, v = kv[..., :E], kv[..., E:]

    qh = q.reshape(B, S, H, D).transpose(0, 2, 1, 3).astype(bf16)
    kh = k.reshape(B, S, H, D).transpose(0, 2, 1, 3).astype(bf16)
    vh = v.reshape(B, S, H, D).transpose(0, 2, 1, 3).astype(bf16)
    s = jnp.einsum("bhqd,bhkd->bhqk", qh, kh, preferred_element_type=jnp.float32)
    s = s - jnp.max(s, axis=-1, keepdims=True)
    p = jnp.exp(s)
    p = p / jnp.sum(p, axis=-1, keepdims=True)
    attn = jnp.einsum("bhqk,bhkd->bhqd", p.astype(bf16), vh,
                      preferred_element_type=jnp.float32)
    attn = attn.transpose(0, 2, 1, 3).reshape(B, S, E)

    def ln(z, g, b):
        mu = jnp.mean(z, axis=-1, keepdims=True)
        var = jnp.mean((z - mu) ** 2, axis=-1, keepdims=True)
        return (z - mu) * jax.lax.rsqrt(var + eps) * g + b

    y1 = ln(x + attn, params["ln1_g"][0], params["ln1_b"][0])
    ff = jnp.dot(y1.astype(bf16), params["w1_t"],
                 preferred_element_type=jnp.float32) + params["b1"][0]
    ff = jnp.maximum(ff, 0.0)
    ff = jnp.dot(ff.astype(bf16), params["w2_t"],
                 preferred_element_type=jnp.float32) + params["b2"][0]
    return ln(y1 + ff, params["ln2_g"][0], params["ln2_b"][0])


def make_params(key, E, F):
    ks = jax.random.split(key, 7)
    scale = 0.1
    # nn.Linear stores (out, in); we store the transpose (in, out).  K|V are fused.
    wq = scale * jax.random.normal(ks[0], (E, E), jnp.float32)
    wk = scale * jax.random.normal(ks[1], (E, E), jnp.float32)
    wv = scale * jax.random.normal(ks[2], (E, E), jnp.float32)
    # Fold the (intentionally non-standard: 1/sqrt(embedding_dim), NOT head_dim)
    # softmax scale of the source module into the Q projection weight.
    wq_scaled = wq * (1.0 / jnp.sqrt(jnp.float32(E)))
    return {
        "wq_t": wq_scaled.astype(jnp.bfloat16),
        "wkv_t": jnp.concatenate([wk, wv], axis=1).astype(jnp.bfloat16),
        "ln1_g": jnp.ones((1, E), jnp.float32),
        "ln1_b": jnp.zeros((1, E), jnp.float32),
        "w1_t": (scale * jax.random.normal(ks[3], (E, F), jnp.float32)).astype(jnp.bfloat16),
        "b1": scale * jax.random.normal(ks[4], (1, F), jnp.float32),
        "w2_t": (scale * jax.random.normal(ks[5], (F, E), jnp.float32)).astype(jnp.bfloat16),
        "b2": scale * jax.random.normal(ks[6], (1, E), jnp.float32),
        "ln2_g": jnp.ones((1, E), jnp.float32),
        "ln2_b": jnp.zeros((1, E), jnp.float32),
    }


if __name__ == "__main__":
    B, S, E = 2, 16, 128        # batch, sequence, embedding (E lane-dense: 128)
    H = 4                       # attention_count
    EXPAN = 4                   # expan_factor
    F = EXPAN * E
    SEQ_TILE = 8                # grid = (B, S // SEQ_TILE) = (2, 2); exercises K/V scratch reuse

    key = jax.random.PRNGKey(0)
    kx, kp = jax.random.split(key)
    x = jax.random.normal(kx, (B, S, E), jnp.float32)
    params = make_params(kp, E, F)

    out = encoder_forward(x, params, num_heads=H, seq_tile=SEQ_TILE)
    out = jax.block_until_ready(out)

    ref = reference_forward(x, params, num_heads=H)
    assert out.shape == (B, S, E)
    max_err = float(jnp.max(jnp.abs(out - ref)))
    assert jnp.allclose(out, ref, atol=5e-3, rtol=5e-3), (
        f"mismatch vs JAX reference (max abs err {max_err})")

    print("KERNEL_OK")
</pallas_src>

<mosaic_0001>
module attributes {stable_mosaic.version = 11 : i64} {
  func.func @encoder_kernel(%arg0: i32, %arg1: i32, %arg2: memref<1x8x128xf32, #tpu.memory_space<vmem>>, %arg3: memref<1x16x128xbf16, #tpu.memory_space<vmem>>, %arg4: memref<128x128xbf16, #tpu.memory_space<vmem>>, %arg5: memref<128x256xbf16, #tpu.memory_space<vmem>>, %arg6: memref<1x128xf32, #tpu.memory_space<vmem>>, %arg7: memref<1x128xf32, #tpu.memory_space<vmem>>, %arg8: memref<128x512xbf16, #tpu.memory_space<vmem>>, %arg9: memref<1x512xf32, #tpu.memory_space<vmem>>, %arg10: memref<512x128xbf16, #tpu.memory_space<vmem>>, %arg11: memref<1x128xf32, #tpu.memory_space<vmem>>, %arg12: memref<1x128xf32, #tpu.memory_space<vmem>>, %arg13: memref<1x128xf32, #tpu.memory_space<vmem>>, %arg14: memref<1x8x128xf32, #tpu.memory_space<vmem>>, %arg15: memref<4x16x32xbf16, #tpu.memory_space<vmem>>, %arg16: memref<4x16x32xbf16, #tpu.memory_space<vmem>>) attributes {dimension_semantics = [#tpu.dimension_semantics<parallel>, #tpu.dimension_semantics<arbitrary>], iteration_bounds = array<i64: 2, 2>, scalar_prefetch = 0 : i64, scratch_operands = 2 : i64, tpu.core_type = #tpu.core_type<tc>, window_params = [{transform_indices = @transform_0, window_bounds = array<i64: 1, 8, 128>}, {transform_indices = @transform_1, window_bounds = array<i64: 1, 16, 128>}, {pipeline_mode = #tpu.pipeline_mode<synchronous>, transform_indices = @transform_2, window_bounds = array<i64: 128, 128>}, {pipeline_mode = #tpu.pipeline_mode<synchronous>, transform_indices = @transform_3, window_bounds = array<i64: 128, 256>}, {pipeline_mode = #tpu.pipeline_mode<synchronous>, transform_indices = @transform_4, window_bounds = array<i64: 1, 128>}, {pipeline_mode = #tpu.pipeline_mode<synchronous>, transform_indices = @transform_5, window_bounds = array<i64: 1, 128>}, {pipeline_mode = #tpu.pipeline_mode<synchronous>, transform_indices = @transform_6, window_bounds = array<i64: 128, 512>}, {pipeline_mode = #tpu.pipeline_mode<synchronous>, transform_indices = @transform_7, window_bounds = array<i64: 1, 512>}, {pipeline_mode = #tpu.pipeline_mode<synchronous>, transform_indices = @transform_8, window_bounds = array<i64: 512, 128>}, {pipeline_mode = #tpu.pipeline_mode<synchronous>, transform_indices = @transform_9, window_bounds = array<i64: 1, 128>}, {pipeline_mode = #tpu.pipeline_mode<synchronous>, transform_indices = @transform_10, window_bounds = array<i64: 1, 128>}, {pipeline_mode = #tpu.pipeline_mode<synchronous>, transform_indices = @transform_11, window_bounds = array<i64: 1, 128>}, {transform_indices = @transform_12, window_bounds = array<i64: 1, 8, 128>}]} {
    %c0 = arith.constant 0 : index
    %c0_0 = arith.constant 0 : index
    %c0_1 = arith.constant 0 : index
    %0 = vector.load %arg2[%c0, %c0_0, %c0_1] : memref<1x8x128xf32, #tpu.memory_space<vmem>>, vector<1x8x128xf32>
    %1 = vector.shape_cast %0 : vector<1x8x128xf32> to vector<8x128xf32>
    %c0_i32 = arith.constant 0 : i32
    %2 = arith.cmpi eq, %arg1, %c0_i32 : i32
    %3 = arith.extui %2 : i1 to i32
    %c0_i32_2 = arith.constant 0 : i32
    %4 = arith.cmpi ne, %3, %c0_i32_2 : i32
    scf.if %4 {
      %c0_47 = arith.constant 0 : index
      %c0_48 = arith.constant 0 : index
      %c0_49 = arith.constant 0 : index
      %120 = vector.load %arg3[%c0_47, %c0_48, %c0_49] : memref<1x16x128xbf16, #tpu.memory_space<vmem>>, vector<1x16x128xbf16>
      %121 = vector.shape_cast %120 : vector<1x16x128xbf16> to vector<16x128xbf16>
      %c0_50 = arith.constant 0 : index
      %c0_51 = arith.constant 0 : index
      %122 = vector.load %arg5[%c0_50, %c0_51] : memref<128x256xbf16, #tpu.memory_space<vmem>>, vector<128x256xbf16>
      %cst_52 = arith.constant dense<0.000000e+00> : vector<16x256xf32>
      %123 = tpu.matmul %121, %122, %cst_52 {dimension_numbers = #tpu.dot_dimension_numbers<[1], [0], [0], [1], [0, 0, 1, 1], [], []>} : vector<16x128xbf16>, vector<128x256xbf16>, vector<16x256xf32> -> vector<16x256xf32>
      %124 = vector.extract_strided_slice %123 {offsets = [0, 0], sizes = [16, 32], strides = [1, 1]} : vector<16x256xf32> to vector<16x32xf32>
      %125 = arith.truncf %124 : vector<16x32xf32> to vector<16x32xbf16>
      %c0_53 = arith.constant 0 : index
      %c0_54 = arith.constant 0 : index
      %c0_55 = arith.constant 0 : index
      %126 = vector.load %arg15[%c0_53, %c0_54, %c0_55] : memref<4x16x32xbf16, #tpu.memory_space<vmem>>, vector<1x16x32xbf16>
      %127 = vector.shape_cast %126 : vector<1x16x32xbf16> to vector<16x32xbf16>
      %128 = vector.shape_cast %125 : vector<16x32xbf16> to vector<1x16x32xbf16>
      tpu.vector_store %arg15[%c0_53, %c0_54, %c0_55], %128 {strides = array<i32>} : memref<4x16x32xbf16, #tpu.memory_space<vmem>>, vector<1x16x32xbf16>,
      %129 = vector.extract_strided_slice %123 {offsets = [0, 128], sizes = [16, 32], strides = [1, 1]} : vector<16x256xf32> to vector<16x32xf32>
      %130 = arith.truncf %129 : vector<16x32xf32> to vector<16x32xbf16>
      %c0_56 = arith.constant 0 : index
      %c0_57 = arith.constant 0 : index
      %c0_58 = arith.constant 0 : index
      %131 = vector.load %arg16[%c0_56, %c0_57, %c0_58] : memref<4x16x32xbf16, #tpu.memory_space<vmem>>, vector<1x16x32xbf16>
      %132 = vector.shape_cast %131 : vector<1x16x32xbf16> to vector<16x32xbf16>
      %133 = vector.shape_cast %130 : vector<16x32xbf16> to vector<1x16x32xbf16>
      tpu.vector_store %arg16[%c0_56, %c0_57, %c0_58], %133 {strides = array<i32>} : memref<4x16x32xbf16, #tpu.memory_space<vmem>>, vector<1x16x32xbf16>,
      %134 = vector.extract_strided_slice %123 {offsets = [0, 32], sizes = [16, 32], strides = [1, 1]} : vector<16x256xf32> to vector<16x32xf32>
      %135 = arith.truncf %134 : vector<16x32xf32> to vector<16x32xbf16>
      %c1 = arith.constant 1 : index
      %c0_59 = arith.constant 0 : index
      %c0_60 = arith.constant 0 : index
      %136 = vector.load %arg15[%c1, %c0_59, %c0_60] : memref<4x16x32xbf16, #tpu.memory_space<vmem>>, vector<1x16x32xbf16>
      %137 = vector.shape_cast %136 : vector<1x16x32xbf16> to vector<16x32xbf16>
      %138 = vector.shape_cast %135 : vector<16x32xbf16> to vector<1x16x32xbf16>
      tpu.vector_store %arg15[%c1, %c0_59, %c0_60], %138 {strides = array<i32>} : memref<4x16x32xbf16, #tpu.memory_space<vmem>>, vector<1x16x32xbf16>,
      %139 = vector.extract_strided_slice %123 {offsets = [0, 160], sizes = [16, 32], strides = [1, 1]} : vector<16x256xf32> to vector<16x32xf32>
      %140 = arith.truncf %139 : vector<16x32xf32> to vector<16x32xbf16>
      %c1_61 = arith.constant 1 : index
      %c0_62 = arith.constant 0 : index
      %c0_63 = arith.constant 0 : index
      %141 = vector.load %arg16[%c1_61, %c0_62, %c0_63] : memref<4x16x32xbf16, #tpu.memory_space<vmem>>, vector<1x16x32xbf16>
      %142 = vector.shape_cast %141 : vector<1x16x32xbf16> to vector<16x32xbf16>
      %143 = vector.shape_cast %140 : vector<16x32xbf16> to vector<1x16x32xbf16>
      tpu.vector_store %arg16[%c1_61, %c0_62, %c0_63], %143 {strides = array<i32>} : memref<4x16x32xbf16, #tpu.memory_space<vmem>>, vector<1x16x32xbf16>,
      %144 = vector.extract_strided_slice %123 {offsets = [0, 64], sizes = [16, 32], strides = [1, 1]} : vector<16x256xf32> to vector<16x32xf32>
      %145 = arith.truncf %144 : vector<16x32xf32> to vector<16x32xbf16>
      %c2 = arith.constant 2 : index
      %c0_64 = arith.constant 0 : index
      %c0_65 = arith.constant 0 : index
      %146 = vector.load %arg15[%c2, %c0_64, %c0_65] : memref<4x16x32xbf16, #tpu.memory_space<vmem>>, vector<1x16x32xbf16>
      %147 = vector.shape_cast %146 : vector<1x16x32xbf16> to vector<16x32xbf16>
      %148 = vector.shape_cast %145 : vector<16x32xbf16> to vector<1x16x32xbf16>
      tpu.vector_store %arg15[%c2, %c0_64, %c0_65], %148 {strides = array<i32>} : memref<4x16x32xbf16, #tpu.memory_space<vmem>>, vector<1x16x32xbf16>,
      %149 = vector.extract_strided_slice %123 {offsets = [0, 192], sizes = [16, 32], strides = [1, 1]} : vector<16x256xf32> to vector<16x32xf32>
      %150 = arith.truncf %149 : vector<16x32xf32> to vector<16x32xbf16>
      %c2_66 = arith.constant 2 : index
      %c0_67 = arith.constant 0 : index
      %c0_68 = arith.constant 0 : index
      %151 = vector.load %arg16[%c2_66, %c0_67, %c0_68] : memref<4x16x32xbf16, #tpu.memory_space<vmem>>, vector<1x16x32xbf16>
      %152 = vector.shape_cast %151 : vector<1x16x32xbf16> to vector<16x32xbf16>
      %153 = vector.shape_cast %150 : vector<16x32xbf16> to vector<1x16x32xbf16>
      tpu.vector_store %arg16[%c2_66, %c0_67, %c0_68], %153 {strides = array<i32>} : memref<4x16x32xbf16, #tpu.memory_space<vmem>>, vector<1x16x32xbf16>,
      %154 = vector.extract_strided_slice %123 {offsets = [0, 96], sizes = [16, 32], strides = [1, 1]} : vector<16x256xf32> to vector<16x32xf32>
      %155 = arith.truncf %154 : vector<16x32xf32> to vector<16x32xbf16>
      %c3 = arith.constant 3 : index
      %c0_69 = arith.constant 0 : index
      %c0_70 = arith.constant 0 : index
      %156 = vector.load %arg15[%c3, %c0_69, %c0_70] : memref<4x16x32xbf16, #tpu.memory_space<vmem>>, vector<1x16x32xbf16>
      %157 = vector.shape_cast %156 : vector<1x16x32xbf16> to vector<16x32xbf16>
      %158 = vector.shape_cast %155 : vector<16x32xbf16> to vector<1x16x32xbf16>
      tpu.vector_store %arg15[%c3, %c0_69, %c0_70], %158 {strides = array<i32>} : memref<4x16x32xbf16, #tpu.memory_space<vmem>>, vector<1x16x32xbf16>,
      %159 = vector.extract_strided_slice %123 {offsets = [0, 224], sizes = [16, 32], strides = [1, 1]} : vector<16x256xf32> to vector<16x32xf32>
      %160 = arith.truncf %159 : vector<16x32xf32> to vector<16x32xbf16>
      %c3_71 = arith.constant 3 : index
      %c0_72 = arith.constant 0 : index
      %c0_73 = arith.constant 0 : index
      %161 = vector.load %arg16[%c3_71, %c0_72, %c0_73] : memref<4x16x32xbf16, #tpu.memory_space<vmem>>, vector<1x16x32xbf16>
      %162 = vector.shape_cast %161 : vector<1x16x32xbf16> to vector<16x32xbf16>
      %163 = vector.shape_cast %160 : vector<16x32xbf16> to vector<1x16x32xbf16>
      tpu.vector_store %arg16[%c3_71, %c0_72, %c0_73], %163 {strides = array<i32>} : memref<4x16x32xbf16, #tpu.memory_space<vmem>>, vector<1x16x32xbf16>,
    } else {
    }
    %5 = arith.truncf %1 : vector<8x128xf32> to vector<8x128xbf16>
    %c0_3 = arith.constant 0 : index
    %c0_4 = arith.constant 0 : index
    %6 = vector.load %arg4[%c0_3, %c0_4] : memref<128x128xbf16, #tpu.memory_space<vmem>>, vector<128x128xbf16>
    %cst = arith.constant dense<0.000000e+00> : vector<8x128xf32>
    %7 = tpu.matmul %5, %6, %cst {dimension_numbers = #tpu.dot_dimension_numbers<[1], [0], [0], [1], [0, 0, 1, 1], [], []>} : vector<8x128xbf16>, vector<128x128xbf16>, vector<8x128xf32> -> vector<8x128xf32>
    %8 = vector.extract_strided_slice %7 {offsets = [0, 0], sizes = [8, 32], strides = [1, 1]} : vector<8x128xf32> to vector<8x32xf32>
    %9 = vector.extract_strided_slice %7 {offsets = [0, 32], sizes = [8, 32], strides = [1, 1]} : vector<8x128xf32> to vector<8x32xf32>
    %10 = vector.extract_strided_slice %7 {offsets = [0, 64], sizes = [8, 32], strides = [1, 1]} : vector<8x128xf32> to vector<8x32xf32>
    %11 = vector.extract_strided_slice %7 {offsets = [0, 96], sizes = [8, 32], strides = [1, 1]} : vector<8x128xf32> to vector<8x32xf32>
    %12 = vector.shape_cast %8 : vector<8x32xf32> to vector<1x8x32xf32>
    %13 = vector.shape_cast %9 : vector<8x32xf32> to vector<1x8x32xf32>
    %14 = vector.shape_cast %10 : vector<8x32xf32> to vector<1x8x32xf32>
    %15 = vector.shape_cast %11 : vector<8x32xf32> to vector<1x8x32xf32>
    %16 = tpu.concatenate %12, %13, %14, %15 in 0 : vector<1x8x32xf32>, vector<1x8x32xf32>, vector<1x8x32xf32>, vector<1x8x32xf32> -> vector<4x8x32xf32>
    %17 = arith.truncf %16 : vector<4x8x32xf32> to vector<4x8x32xbf16>
    %c0_5 = arith.constant 0 : index
    %c0_6 = arith.constant 0 : index
    %c0_7 = arith.constant 0 : index
    %18 = vector.load %arg15[%c0_5, %c0_6, %c0_7] : memref<4x16x32xbf16, #tpu.memory_space<vmem>>, vector<4x16x32xbf16>
    "tpu.trace_start"() <{level = 10 : i32, message = "hqd,hkd->hqk"}> : () -> ()
    %cst_8 = arith.constant dense<0.000000e+00> : vector<4x8x16xf32>
    %19 = tpu.matmul %17, %18, %cst_8 {dimension_numbers = #tpu.dot_dimension_numbers<[2], [2], [1], [1], [0, 0, 0, 1, 1, 1], [0], [0]>} : vector<4x8x32xbf16>, vector<4x16x32xbf16>, vector<4x8x16xf32> -> vector<4x8x16xf32>
    "tpu.trace_stop"() : () -> ()
    %cst_9 = arith.constant dense<0xFF800000> : vector<4x8xf32>
    %20 = vector.multi_reduction <maximumf>, %19, %cst_9 [2] : vector<4x8x16xf32> to vector<4x8xf32>
    %21 = vector.shape_cast %20 : vector<4x8xf32> to vector<4x8x1xf32>
    %22 = vector.broadcast %21 : vector<4x8x1xf32> to vector<4x8x16xf32>
    %23 = arith.subf %19, %22 : vector<4x8x16xf32>
    %24 = math.exp %23 : vector<4x8x16xf32>
    %cst_10 = arith.constant dense<0.000000e+00> : vector<4x8xf32>
    %25 = vector.multi_reduction <add>, %24, %cst_10 [2] : vector<4x8x16xf32> to vector<4x8xf32>
    %26 = vector.shape_cast %25 : vector<4x8xf32> to vector<4x8x1xf32>
    %27 = vector.broadcast %26 : vector<4x8x1xf32> to vector<4x8x16xf32>
    %28 = arith.divf %24, %27 : vector<4x8x16xf32>
    %29 = arith.truncf %28 : vector<4x8x16xf32> to vector<4x8x16xbf16>
    %c0_11 = arith.constant 0 : index
    %c0_12 = arith.constant 0 : index
    %c0_13 = arith.constant 0 : index
    %30 = vector.load %arg16[%c0_11, %c0_12, %c0_13] : memref<4x16x32xbf16, #tpu.memory_space<vmem>>, vector<4x16x32xbf16>
    "tpu.trace_start"() <{level = 10 : i32, message = "hqk,hkd->hqd"}> : () -> ()
    %cst_14 = arith.constant dense<0.000000e+00> : vector<4x8x32xf32>
    %31 = tpu.matmul %29, %30, %cst_14 {dimension_numbers = #tpu.dot_dimension_numbers<[2], [1], [1], [2], [0, 0, 0, 1, 1, 2], [0], [0]>} : vector<4x8x16xbf16>, vector<4x16x32xbf16>, vector<4x8x32xf32> -> vector<4x8x32xf32>
    "tpu.trace_stop"() : () -> ()
    %32 = vector.extract_strided_slice %31 {offsets = [0, 0, 0], sizes = [1, 8, 32], strides = [1, 1, 1]} : vector<4x8x32xf32> to vector<1x8x32xf32>
    %33 = vector.shape_cast %32 : vector<1x8x32xf32> to vector<8x32xf32>
    %34 = vector.extract_strided_slice %31 {offsets = [1, 0, 0], sizes = [1, 8, 32], strides = [1, 1, 1]} : vector<4x8x32xf32> to vector<1x8x32xf32>
    %35 = vector.shape_cast %34 : vector<1x8x32xf32> to vector<8x32xf32>
    %36 = vector.extract_strided_slice %31 {offsets = [2, 0, 0], sizes = [1, 8, 32], strides = [1, 1, 1]} : vector<4x8x32xf32> to vector<1x8x32xf32>
    %37 = vector.shape_cast %36 : vector<1x8x32xf32> to vector<8x32xf32>
    %38 = vector.extract_strided_slice %31 {offsets = [3, 0, 0], sizes = [1, 8, 32], strides = [1, 1, 1]} : vector<4x8x32xf32> to vector<1x8x32xf32>
    %39 = vector.shape_cast %38 : vector<1x8x32xf32> to vector<8x32xf32>
    %40 = tpu.concatenate %33, %35, %37, %39 in 1 : vector<8x32xf32>, vector<8x32xf32>, vector<8x32xf32>, vector<8x32xf32> -> vector<8x128xf32>
    %41 = arith.addf %1, %40 : vector<8x128xf32>
    %cst_15 = arith.constant dense<0.000000e+00> : vector<8xf32>
    %42 = vector.multi_reduction <add>, %41, %cst_15 [1] : vector<8x128xf32> to vector<8xf32>
    %43 = vector.shape_cast %42 : vector<8xf32> to vector<8x1xf32>
    %cst_16 = arith.constant 1.280000e+02 : f32
    %44 = vector.broadcast %cst_16 : f32 to vector<8x1xf32>
    %45 = arith.divf %43, %44 : vector<8x1xf32>
    %46 = vector.broadcast %45 : vector<8x1xf32> to vector<8x128xf32>
    %47 = arith.subf %41, %46 : vector<8x128xf32>
    %48 = arith.mulf %47, %47 : vector<8x128xf32>
    %cst_17 = arith.constant dense<0.000000e+00> : vector<8xf32>
    %49 = vector.multi_reduction <add>, %48, %cst_17 [1] : vector<8x128xf32> to vector<8xf32>
    %50 = vector.shape_cast %49 : vector<8xf32> to vector<8x1xf32>
    %cst_18 = arith.constant 1.280000e+02 : f32
    %51 = vector.broadcast %cst_18 : f32 to vector<8x1xf32>
    %52 = arith.divf %50, %51 : vector<8x1xf32>
    %53 = vector.broadcast %45 : vector<8x1xf32> to vector<8x128xf32>
    %54 = arith.subf %41, %53 : vector<8x128xf32>
    %cst_19 = arith.constant 9.99999974E-6 : f32
    %55 = vector.broadcast %cst_19 : f32 to vector<8x1xf32>
    %56 = arith.addf %52, %55 : vector<8x1xf32>
    %57 = math.rsqrt %56 : vector<8x1xf32>
    %58 = vector.broadcast %57 : vector<8x1xf32> to vector<8x128xf32>
    %59 = arith.mulf %54, %58 : vector<8x128xf32>
    %c0_20 = arith.constant 0 : index
    %c0_21 = arith.constant 0 : index
    %60 = vector.load %arg6[%c0_20, %c0_21] : memref<1x128xf32, #tpu.memory_space<vmem>>, vector<1x128xf32>
    %61 = vector.shape_cast %60 : vector<1x128xf32> to vector<128xf32>
    %62 = vector.shape_cast %61 : vector<128xf32> to vector<1x128xf32>
    %63 = vector.broadcast %62 : vector<1x128xf32> to vector<8x128xf32>
    %64 = arith.mulf %59, %63 : vector<8x128xf32>
    %c0_22 = arith.constant 0 : index
    %c0_23 = arith.constant 0 : index
    %65 = vector.load %arg7[%c0_22, %c0_23] : memref<1x128xf32, #tpu.memory_space<vmem>>, vector<1x128xf32>
    %66 = vector.shape_cast %65 : vector<1x128xf32> to vector<128xf32>
    %67 = vector.shape_cast %66 : vector<128xf32> to vector<1x128xf32>
    %68 = vector.broadcast %67 : vector<1x128xf32> to vector<8x128xf32>
    %69 = arith.addf %64, %68 : vector<8x128xf32>
    %70 = arith.truncf %69 : vector<8x128xf32> to vector<8x128xbf16>
    %c0_24 = arith.constant 0 : index
    %c0_25 = arith.constant 0 : index
    %71 = vector.load %arg8[%c0_24, %c0_25] : memref<128x512xbf16, #tpu.memory_space<vmem>>, vector<128x512xbf16>
    %cst_26 = arith.constant dense<0.000000e+00> : vector<8x512xf32>
    %72 = tpu.matmul %70, %71, %cst_26 {dimension_numbers = #tpu.dot_dimension_numbers<[1], [0], [0], [1], [0, 0, 1, 1], [], []>} : vector<8x128xbf16>, vector<128x512xbf16>, vector<8x512xf32> -> vector<8x512xf32>
    %c0_27 = arith.constant 0 : index
    %c0_28 = arith.constant 0 : index
    %73 = vector.load %arg9[%c0_27, %c0_28] : memref<1x512xf32, #tpu.memory_space<vmem>>, vector<1x512xf32>
    %74 = vector.shape_cast %73 : vector<1x512xf32> to vector<512xf32>
    %75 = vector.shape_cast %74 : vector<512xf32> to vector<1x512xf32>
    %76 = vector.broadcast %75 : vector<1x512xf32> to vector<8x512xf32>
    %77 = arith.addf %72, %76 : vector<8x512xf32>
    %cst_29 = arith.constant 0.000000e+00 : f32
    %78 = vector.broadcast %cst_29 : f32 to vector<8x512xf32>
    %79 = arith.maximumf %77, %78 : vector<8x512xf32>
    %80 = arith.truncf %79 : vector<8x512xf32> to vector<8x512xbf16>
    %c0_30 = arith.constant 0 : index
    %c0_31 = arith.constant 0 : index
    %81 = vector.load %arg10[%c0_30, %c0_31] : memref<512x128xbf16, #tpu.memory_space<vmem>>, vector<512x128xbf16>
    %cst_32 = arith.constant dense<0.000000e+00> : vector<8x128xf32>
    %82 = tpu.matmul %80, %81, %cst_32 {dimension_numbers = #tpu.dot_dimension_numbers<[1], [0], [0], [1], [0, 0, 1, 1], [], []>} : vector<8x512xbf16>, vector<512x128xbf16>, vector<8x128xf32> -> vector<8x128xf32>
    %c0_33 = arith.constant 0 : index
    %c0_34 = arith.constant 0 : index
    %83 = vector.load %arg11[%c0_33, %c0_34] : memref<1x128xf32, #tpu.memory_space<vmem>>, vector<1x128xf32>
    %84 = vector.shape_cast %83 : vector<1x128xf32> to vector<128xf32>
    %85 = vector.shape_cast %84 : vector<128xf32> to vector<1x128xf32>
    %86 = vector.broadcast %85 : vector<1x128xf32> to vector<8x128xf32>
    %87 = arith.addf %82, %86 : vector<8x128xf32>
    %88 = arith.addf %69, %87 : vector<8x128xf32>
    %cst_35 = arith.constant dense<0.000000e+00> : vector<8xf32>
    %89 = vector.multi_reduction <add>, %88, %cst_35 [1] : vector<8x128xf32> to vector<8xf32>
    %90 = vector.shape_cast %89 : vector<8xf32> to vector<8x1xf32>
    %cst_36 = arith.constant 1.280000e+02 : f32
    %91 = vector.broadcast %cst_36 : f32 to vector<8x1xf32>
    %92 = arith.divf %90, %91 : vector<8x1xf32>
    %93 = vector.broadcast %92 : vector<8x1xf32> to vector<8x128xf32>
    %94 = arith.subf %88, %93 : vector<8x128xf32>
    %95 = arith.mulf %94, %94 : vector<8x128xf32>
    %cst_37 = arith.constant dense<0.000000e+00> : vector<8xf32>
    %96 = vector.multi_reduction <add>, %95, %cst_37 [1] : vector<8x128xf32> to vector<8xf32>
    %97 = vector.shape_cast %96 : vector<8xf32> to vector<8x1xf32>
    %cst_38 = arith.constant 1.280000e+02 : f32
    %98 = vector.broadcast %cst_38 : f32 to vector<8x1xf32>
    %99 = arith.divf %97, %98 : vector<8x1xf32>
    %100 = vector.broadcast %92 : vector<8x1xf32> to vector<8x128xf32>
    %101 = arith.subf %88, %100 : vector<8x128xf32>
    %cst_39 = arith.constant 9.99999974E-6 : f32
    %102 = vector.broadcast %cst_39 : f32 to vector<8x1xf32>
    %103 = arith.addf %99, %102 : vector<8x1xf32>
    %104 = math.rsqrt %103 : vector<8x1xf32>
    %105 = vector.broadcast %104 : vector<8x1xf32> to vector<8x128xf32>
    %106 = arith.mulf %101, %105 : vector<8x128xf32>
    %c0_40 = arith.constant 0 : index
    %c0_41 = arith.constant 0 : index
    %107 = vector.load %arg12[%c0_40, %c0_41] : memref<1x128xf32, #tpu.memory_space<vmem>>, vector<1x128xf32>
    %108 = vector.shape_cast %107 : vector<1x128xf32> to vector<128xf32>
    %109 = vector.shape_cast %108 : vector<128xf32> to vector<1x128xf32>
    %110 = vector.broadcast %109 : vector<1x128xf32> to vector<8x128xf32>
    %111 = arith.mulf %106, %110 : vector<8x128xf32>
    %c0_42 = arith.constant 0 : index
    %c0_43 = arith.constant 0 : index
    %112 = vector.load %arg13[%c0_42, %c0_43] : memref<1x128xf32, #tpu.memory_space<vmem>>, vector<1x128xf32>
    %113 = vector.shape_cast %112 : vector<1x128xf32> to vector<128xf32>
    %114 = vector.shape_cast %113 : vector<128xf32> to vector<1x128xf32>
    %115 = vector.broadcast %114 : vector<1x128xf32> to vector<8x128xf32>
    %116 = arith.addf %111, %115 : vector<8x128xf32>
    %c0_44 = arith.constant 0 : index
    %c0_45 = arith.constant 0 : index
    %c0_46 = arith.constant 0 : index
    %117 = vector.load %arg14[%c0_44, %c0_45, %c0_46] : memref<1x8x128xf32, #tpu.memory_space<vmem>>, vector<1x8x128xf32>
    %118 = vector.shape_cast %117 : vector<1x8x128xf32> to vector<8x128xf32>
    %119 = vector.shape_cast %116 : vector<8x128xf32> to vector<1x8x128xf32>
    tpu.vector_store %arg14[%c0_44, %c0_45, %c0_46], %119 {strides = array<i32>} : memref<1x8x128xf32, #tpu.memory_space<vmem>>, vector<1x8x128xf32>,
    return
  }
  func.func @transform_0(%arg0: i32, %arg1: i32) -> (i32, i32, i32) {
    %c0_i32 = arith.constant 0 : i32
    %c0_i32_0 = arith.constant 0 : i32
    return %arg0, %arg1, %c0_i32 : i32, i32, i32
  }
  func.func @transform_1(%arg0: i32, %arg1: i32) -> (i32, i32, i32) {
    %c0_i32 = arith.constant 0 : i32
    %c0_i32_0 = arith.constant 0 : i32
    %c0_i32_1 = arith.constant 0 : i32
    return %arg0, %c0_i32, %c0_i32_0 : i32, i32, i32
  }
  func.func @transform_2(%arg0: i32, %arg1: i32) -> (i32, i32) {
    %c0_i32 = arith.constant 0 : i32
    %c0_i32_0 = arith.constant 0 : i32
    %c0_i32_1 = arith.constant 0 : i32
    return %c0_i32, %c0_i32_0 : i32, i32
  }
  func.func @transform_3(%arg0: i32, %arg1: i32) -> (i32, i32) {
    %c0_i32 = arith.constant 0 : i32
    %c0_i32_0 = arith.constant 0 : i32
    %c0_i32_1 = arith.constant 0 : i32
    return %c0_i32, %c0_i32_0 : i32, i32
  }
  func.func @transform_4(%arg0: i32, %arg1: i32) -> (i32, i32) {
    %c0_i32 = arith.constant 0 : i32
    %c0_i32_0 = arith.constant 0 : i32
    %c0_i32_1 = arith.constant 0 : i32
    return %c0_i32, %c0_i32_0 : i32, i32
  }
  func.func @transform_5(%arg0: i32, %arg1: i32) -> (i32, i32) {
    %c0_i32 = arith.constant 0 : i32
    %c0_i32_0 = arith.constant 0 : i32
    %c0_i32_1 = arith.constant 0 : i32
    return %c0_i32, %c0_i32_0 : i32, i32
  }
  func.func @transform_6(%arg0: i32, %arg1: i32) -> (i32, i32) {
    %c0_i32 = arith.constant 0 : i32
    %c0_i32_0 = arith.constant 0 : i32
    %c0_i32_1 = arith.constant 0 : i32
    return %c0_i32, %c0_i32_0 : i32, i32
  }
  func.func @transform_7(%arg0: i32, %arg1: i32) -> (i32, i32) {
    %c0_i32 = arith.constant 0 : i32
    %c0_i32_0 = arith.constant 0 : i32
    %c0_i32_1 = arith.constant 0 : i32
    return %c0_i32, %c0_i32_0 : i32, i32
  }
  func.func @transform_8(%arg0: i32, %arg1: i32) -> (i32, i32) {
    %c0_i32 = arith.constant 0 : i32
    %c0_i32_0 = arith.constant 0 : i32
    %c0_i32_1 = arith.constant 0 : i32
    return %c0_i32, %c0_i32_0 : i32, i32
  }
  func.func @transform_9(%arg0: i32, %arg1: i32) -> (i32, i32) {
    %c0_i32 = arith.constant 0 : i32
    %c0_i32_0 = arith.constant 0 : i32
    %c0_i32_1 = arith.constant 0 : i32
    return %c0_i32, %c0_i32_0 : i32, i32
  }
  func.func @transform_10(%arg0: i32, %arg1: i32) -> (i32, i32) {
    %c0_i32 = arith.constant 0 : i32
    %c0_i32_0 = arith.constant 0 : i32
    %c0_i32_1 = arith.constant 0 : i32
    return %c0_i32, %c0_i32_0 : i32, i32
  }
  func.func @transform_11(%arg0: i32, %arg1: i32) -> (i32, i32) {
    %c0_i32 = arith.constant 0 : i32
    %c0_i32_0 = arith.constant 0 : i32
    %c0_i32_1 = arith.constant 0 : i32
    return %c0_i32, %c0_i32_0 : i32, i32
  }
  func.func @transform_12(%arg0: i32, %arg1: i32) -> (i32, i32, i32) {
    %c0_i32 = arith.constant 0 : i32
    %c0_i32_0 = arith.constant 0 : i32
    return %arg0, %arg1, %c0_i32 : i32, i32, i32
  }
}

module attributes {stable_mosaic.version = 11 : i64} {
  func.func @encoder_kernel(%arg0: i32, %arg1: i32, %arg2: memref<1x8x128xf32, #tpu.memory_space<vmem>>, %arg3: memref<1x16x128xbf16, #tpu.memory_space<vmem>>, %arg4: memref<128x128xbf16, #tpu.memory_space<vmem>>, %arg5: memref<128x256xbf16, #tpu.memory_space<vmem>>, %arg6: memref<1x128xf32, #tpu.memory_space<vmem>>, %arg7: memref<1x128xf32, #tpu.memory_space<vmem>>, %arg8: memref<128x512xbf16, #tpu.memory_space<vmem>>, %arg9: memref<1x512xf32, #tpu.memory_space<vmem>>, %arg10: memref<512x128xbf16, #tpu.memory_space<vmem>>, %arg11: memref<1x128xf32, #tpu.memory_space<vmem>>, %arg12: memref<1x128xf32, #tpu.memory_space<vmem>>, %arg13: memref<1x128xf32, #tpu.memory_space<vmem>>, %arg14: memref<1x8x128xf32, #tpu.memory_space<vmem>>, %arg15: memref<4x16x32xbf16, #tpu.memory_space<vmem>>, %arg16: memref<4x16x32xbf16, #tpu.memory_space<vmem>>) attributes {dimension_semantics = [#tpu.dimension_semantics<parallel>, #tpu.dimension_semantics<arbitrary>], iteration_bounds = array<i64: 2, 2>, scalar_prefetch = 0 : i64, scratch_operands = 2 : i64, tpu.core_type = #tpu.core_type<tc>, window_params = [{transform_indices = @transform_0, window_bounds = array<i64: 1, 8, 128>}, {transform_indices = @transform_1, window_bounds = array<i64: 1, 16, 128>}, {pipeline_mode = #tpu.pipeline_mode<synchronous>, transform_indices = @transform_2, window_bounds = array<i64: 128, 128>}, {pipeline_mode = #tpu.pipeline_mode<synchronous>, transform_indices = @transform_3, window_bounds = array<i64: 128, 256>}, {pipeline_mode = #tpu.pipeline_mode<synchronous>, transform_indices = @transform_4, window_bounds = array<i64: 1, 128>}, {pipeline_mode = #tpu.pipeline_mode<synchronous>, transform_indices = @transform_5, window_bounds = array<i64: 1, 128>}, {pipeline_mode = #tpu.pipeline_mode<synchronous>, transform_indices = @transform_6, window_bounds = array<i64: 128, 512>}, {pipeline_mode = #tpu.pipeline_mode<synchronous>, transform_indices = @transform_7, window_bounds = array<i64: 1, 512>}, {pipeline_mode = #tpu.pipeline_mode<synchronous>, transform_indices = @transform_8, window_bounds = array<i64: 512, 128>}, {pipeline_mode = #tpu.pipeline_mode<synchronous>, transform_indices = @transform_9, window_bounds = array<i64: 1, 128>}, {pipeline_mode = #tpu.pipeline_mode<synchronous>, transform_indices = @transform_10, window_bounds = array<i64: 1, 128>}, {pipeline_mode = #tpu.pipeline_mode<synchronous>, transform_indices = @transform_11, window_bounds = array<i64: 1, 128>}, {transform_indices = @transform_12, window_bounds = array<i64: 1, 8, 128>}]} {
    %c0 = arith.constant 0 : index
    %c0_0 = arith.constant 0 : index
    %c0_1 = arith.constant 0 : index
    %0 = vector.load %arg2[%c0, %c0_0, %c0_1] : memref<1x8x128xf32, #tpu.memory_space<vmem>>, vector<1x8x128xf32>
    %1 = vector.shape_cast %0 : vector<1x8x128xf32> to vector<8x128xf32>
    %c0_i32 = arith.constant 0 : i32
    %2 = arith.cmpi eq, %arg1, %c0_i32 : i32
    %3 = arith.extui %2 : i1 to i32
    %c0_i32_2 = arith.constant 0 : i32
    %4 = arith.cmpi ne, %3, %c0_i32_2 : i32
    scf.if %4 {
      %c0_47 = arith.constant 0 : index
      %c0_48 = arith.constant 0 : index
      %c0_49 = arith.constant 0 : index
      %120 = vector.load %arg3[%c0_47, %c0_48, %c0_49] : memref<1x16x128xbf16, #tpu.memory_space<vmem>>, vector<1x16x128xbf16>
      %121 = vector.shape_cast %120 : vector<1x16x128xbf16> to vector<16x128xbf16>
      %c0_50 = arith.constant 0 : index
      %c0_51 = arith.constant 0 : index
      %122 = vector.load %arg5[%c0_50, %c0_51] : memref<128x256xbf16, #tpu.memory_space<vmem>>, vector<128x256xbf16>
      %cst_52 = arith.constant dense<0.000000e+00> : vector<16x256xf32>
      %123 = tpu.matmul %121, %122, %cst_52 {dimension_numbers = #tpu.dot_dimension_numbers<[1], [0], [0], [1], [0, 0, 1, 1], [], []>} : vector<16x128xbf16>, vector<128x256xbf16>, vector<16x256xf32> -> vector<16x256xf32>
      %124 = vector.extract_strided_slice %123 {offsets = [0, 0], sizes = [16, 32], strides = [1, 1]} : vector<16x256xf32> to vector<16x32xf32>
      %125 = arith.truncf %124 : vector<16x32xf32> to vector<16x32xbf16>
      %c0_53 = arith.constant 0 : index
      %c0_54 = arith.constant 0 : index
      %c0_55 = arith.constant 0 : index
      %126 = vector.load %arg15[%c0_53, %c0_54, %c0_55] : memref<4x16x32xbf16, #tpu.memory_space<vmem>>, vector<1x16x32xbf16>
      %127 = vector.shape_cast %126 : vector<1x16x32xbf16> to vector<16x32xbf16>
      %128 = vector.shape_cast %125 : vector<16x32xbf16> to vector<1x16x32xbf16>
      tpu.vector_store %arg15[%c0_53, %c0_54, %c0_55], %128 {strides = array<i32>} : memref<4x16x32xbf16, #tpu.memory_space<vmem>>, vector<1x16x32xbf16>,
      %129 = vector.extract_strided_slice %123 {offsets = [0, 128], sizes = [16, 32], strides = [1, 1]} : vector<16x256xf32> to vector<16x32xf32>
      %130 = arith.truncf %129 : vector<16x32xf32> to vector<16x32xbf16>
      %c0_56 = arith.constant 0 : index
      %c0_57 = arith.constant 0 : index
      %c0_58 = arith.constant 0 : index
      %131 = vector.load %arg16[%c0_56, %c0_57, %c0_58] : memref<4x16x32xbf16, #tpu.memory_space<vmem>>, vector<1x16x32xbf16>
      %132 = vector.shape_cast %131 : vector<1x16x32xbf16> to vector<16x32xbf16>
      %133 = vector.shape_cast %130 : vector<16x32xbf16> to vector<1x16x32xbf16>
      tpu.vector_store %arg16[%c0_56, %c0_57, %c0_58], %133 {strides = array<i32>} : memref<4x16x32xbf16, #tpu.memory_space<vmem>>, vector<1x16x32xbf16>,
      %134 = vector.extract_strided_slice %123 {offsets = [0, 32], sizes = [16, 32], strides = [1, 1]} : vector<16x256xf32> to vector<16x32xf32>
      %135 = arith.truncf %134 : vector<16x32xf32> to vector<16x32xbf16>
      %c1 = arith.constant 1 : index
      %c0_59 = arith.constant 0 : index
      %c0_60 = arith.constant 0 : index
      %136 = vector.load %arg15[%c1, %c0_59, %c0_60] : memref<4x16x32xbf16, #tpu.memory_space<vmem>>, vector<1x16x32xbf16>
      %137 = vector.shape_cast %136 : vector<1x16x32xbf16> to vector<16x32xbf16>
      %138 = vector.shape_cast %135 : vector<16x32xbf16> to vector<1x16x32xbf16>
      tpu.vector_store %arg15[%c1, %c0_59, %c0_60], %138 {strides = array<i32>} : memref<4x16x32xbf16, #tpu.memory_space<vmem>>, vector<1x16x32xbf16>,
      %139 = vector.extract_strided_slice %123 {offsets = [0, 160], sizes = [16, 32], strides = [1, 1]} : vector<16x256xf32> to vector<16x32xf32>
      %140 = arith.truncf %139 : vector<16x32xf32> to vector<16x32xbf16>
      %c1_61 = arith.constant 1 : index
      %c0_62 = arith.constant 0 : index
      %c0_63 = arith.constant 0 : index
      %141 = vector.load %arg16[%c1_61, %c0_62, %c0_63] : memref<4x16x32xbf16, #tpu.memory_space<vmem>>, vector<1x16x32xbf16>
      %142 = vector.shape_cast %141 : vector<1x16x32xbf16> to vector<16x32xbf16>
      %143 = vector.shape_cast %140 : vector<16x32xbf16> to vector<1x16x32xbf16>
      tpu.vector_store %arg16[%c1_61, %c0_62, %c0_63], %143 {strides = array<i32>} : memref<4x16x32xbf16, #tpu.memory_space<vmem>>, vector<1x16x32xbf16>,
      %144 = vector.extract_strided_slice %123 {offsets = [0, 64], sizes = [16, 32], strides = [1, 1]} : vector<16x256xf32> to vector<16x32xf32>
      %145 = arith.truncf %144 : vector<16x32xf32> to vector<16x32xbf16>
      %c2 = arith.constant 2 : index
      %c0_64 = arith.constant 0 : index
      %c0_65 = arith.constant 0 : index
      %146 = vector.load %arg15[%c2, %c0_64, %c0_65] : memref<4x16x32xbf16, #tpu.memory_space<vmem>>, vector<1x16x32xbf16>
      %147 = vector.shape_cast %146 : vector<1x16x32xbf16> to vector<16x32xbf16>
      %148 = vector.shape_cast %145 : vector<16x32xbf16> to vector<1x16x32xbf16>
      tpu.vector_store %arg15[%c2, %c0_64, %c0_65], %148 {strides = array<i32>} : memref<4x16x32xbf16, #tpu.memory_space<vmem>>, vector<1x16x32xbf16>,
      %149 = vector.extract_strided_slice %123 {offsets = [0, 192], sizes = [16, 32], strides = [1, 1]} : vector<16x256xf32> to vector<16x32xf32>
      %150 = arith.truncf %149 : vector<16x32xf32> to vector<16x32xbf16>
      %c2_66 = arith.constant 2 : index
      %c0_67 = arith.constant 0 : index
      %c0_68 = arith.constant 0 : index
      %151 = vector.load %arg16[%c2_66, %c0_67, %c0_68] : memref<4x16x32xbf16, #tpu.memory_space<vmem>>, vector<1x16x32xbf16>
      %152 = vector.shape_cast %151 : vector<1x16x32xbf16> to vector<16x32xbf16>
      %153 = vector.shape_cast %150 : vector<16x32xbf16> to vector<1x16x32xbf16>
      tpu.vector_store %arg16[%c2_66, %c0_67, %c0_68], %153 {strides = array<i32>} : memref<4x16x32xbf16, #tpu.memory_space<vmem>>, vector<1x16x32xbf16>,
      %154 = vector.extract_strided_slice %123 {offsets = [0, 96], sizes = [16, 32], strides = [1, 1]} : vector<16x256xf32> to vector<16x32xf32>
      %155 = arith.truncf %154 : vector<16x32xf32> to vector<16x32xbf16>
      %c3 = arith.constant 3 : index
      %c0_69 = arith.constant 0 : index
      %c0_70 = arith.constant 0 : index
      %156 = vector.load %arg15[%c3, %c0_69, %c0_70] : memref<4x16x32xbf16, #tpu.memory_space<vmem>>, vector<1x16x32xbf16>
      %157 = vector.shape_cast %156 : vector<1x16x32xbf16> to vector<16x32xbf16>
      %158 = vector.shape_cast %155 : vector<16x32xbf16> to vector<1x16x32xbf16>
      tpu.vector_store %arg15[%c3, %c0_69, %c0_70], %158 {strides = array<i32>} : memref<4x16x32xbf16, #tpu.memory_space<vmem>>, vector<1x16x32xbf16>,
      %159 = vector.extract_strided_slice %123 {offsets = [0, 224], sizes = [16, 32], strides = [1, 1]} : vector<16x256xf32> to vector<16x32xf32>
      %160 = arith.truncf %159 : vector<16x32xf32> to vector<16x32xbf16>
      %c3_71 = arith.constant 3 : index
      %c0_72 = arith.constant 0 : index
      %c0_73 = arith.constant 0 : index
      %161 = vector.load %arg16[%c3_71, %c0_72, %c0_73] : memref<4x16x32xbf16, #tpu.memory_space<vmem>>, vector<1x16x32xbf16>
      %162 = vector.shape_cast %161 : vector<1x16x32xbf16> to vector<16x32xbf16>
      %163 = vector.shape_cast %160 : vector<16x32xbf16> to vector<1x16x32xbf16>
      tpu.vector_store %arg16[%c3_71, %c0_72, %c0_73], %163 {strides = array<i32>} : memref<4x16x32xbf16, #tpu.memory_space<vmem>>, vector<1x16x32xbf16>,
    } else {
    }
    %5 = arith.truncf %1 : vector<8x128xf32> to vector<8x128xbf16>
    %c0_3 = arith.constant 0 : index
    %c0_4 = arith.constant 0 : index
    %6 = vector.load %arg4[%c0_3, %c0_4] : memref<128x128xbf16, #tpu.memory_space<vmem>>, vector<128x128xbf16>
    %cst = arith.constant dense<0.000000e+00> : vector<8x128xf32>
    %7 = tpu.matmul %5, %6, %cst {dimension_numbers = #tpu.dot_dimension_numbers<[1], [0], [0], [1], [0, 0, 1, 1], [], []>} : vector<8x128xbf16>, vector<128x128xbf16>, vector<8x128xf32> -> vector<8x128xf32>
    %8 = vector.extract_strided_slice %7 {offsets = [0, 0], sizes = [8, 32], strides = [1, 1]} : vector<8x128xf32> to vector<8x32xf32>
    %9 = vector.extract_strided_slice %7 {offsets = [0, 32], sizes = [8, 32], strides = [1, 1]} : vector<8x128xf32> to vector<8x32xf32>
    %10 = vector.extract_strided_slice %7 {offsets = [0, 64], sizes = [8, 32], strides = [1, 1]} : vector<8x128xf32> to vector<8x32xf32>
    %11 = vector.extract_strided_slice %7 {offsets = [0, 96], sizes = [8, 32], strides = [1, 1]} : vector<8x128xf32> to vector<8x32xf32>
    %12 = vector.shape_cast %8 : vector<8x32xf32> to vector<1x8x32xf32>
    %13 = vector.shape_cast %9 : vector<8x32xf32> to vector<1x8x32xf32>
    %14 = vector.shape_cast %10 : vector<8x32xf32> to vector<1x8x32xf32>
    %15 = vector.shape_cast %11 : vector<8x32xf32> to vector<1x8x32xf32>
    %16 = tpu.concatenate %12, %13, %14, %15 in 0 : vector<1x8x32xf32>, vector<1x8x32xf32>, vector<1x8x32xf32>, vector<1x8x32xf32> -> vector<4x8x32xf32>
    %17 = arith.truncf %16 : vector<4x8x32xf32> to vector<4x8x32xbf16>
    %c0_5 = arith.constant 0 : index
    %c0_6 = arith.constant 0 : index
    %c0_7 = arith.constant 0 : index
    %18 = vector.load %arg15[%c0_5, %c0_6, %c0_7] : memref<4x16x32xbf16, #tpu.memory_space<vmem>>, vector<4x16x32xbf16>
    "tpu.trace_start"() <{level = 10 : i32, message = "hqd,hkd->hqk"}> : () -> ()
    %cst_8 = arith.constant dense<0.000000e+00> : vector<4x8x16xf32>
    %19 = tpu.matmul %17, %18, %cst_8 {dimension_numbers = #tpu.dot_dimension_numbers<[2], [2], [1], [1], [0, 0, 0, 1, 1, 1], [0], [0]>} : vector<4x8x32xbf16>, vector<4x16x32xbf16>, vector<4x8x16xf32> -> vector<4x8x16xf32>
    "tpu.trace_stop"() : () -> ()
    %cst_9 = arith.constant dense<0xFF800000> : vector<4x8xf32>
    %20 = vector.multi_reduction <maximumf>, %19, %cst_9 [2] : vector<4x8x16xf32> to vector<4x8xf32>
    %21 = vector.shape_cast %20 : vector<4x8xf32> to vector<4x8x1xf32>
    %22 = vector.broadcast %21 : vector<4x8x1xf32> to vector<4x8x16xf32>
    %23 = arith.subf %19, %22 : vector<4x8x16xf32>
    %24 = math.exp %23 : vector<4x8x16xf32>
    %cst_10 = arith.constant dense<0.000000e+00> : vector<4x8xf32>
    %25 = vector.multi_reduction <add>, %24, %cst_10 [2] : vector<4x8x16xf32> to vector<4x8xf32>
    %26 = vector.shape_cast %25 : vector<4x8xf32> to vector<4x8x1xf32>
    %27 = vector.broadcast %26 : vector<4x8x1xf32> to vector<4x8x16xf32>
    %28 = arith.divf %24, %27 : vector<4x8x16xf32>
    %29 = arith.truncf %28 : vector<4x8x16xf32> to vector<4x8x16xbf16>
    %c0_11 = arith.constant 0 : index
    %c0_12 = arith.constant 0 : index
    %c0_13 = arith.constant 0 : index
    %30 = vector.load %arg16[%c0_11, %c0_12, %c0_13] : memref<4x16x32xbf16, #tpu.memory_space<vmem>>, vector<4x16x32xbf16>
    "tpu.trace_start"() <{level = 10 : i32, message = "hqk,hkd->hqd"}> : () -> ()
    %cst_14 = arith.constant dense<0.000000e+00> : vector<4x8x32xf32>
    %31 = tpu.matmul %29, %30, %cst_14 {dimension_numbers = #tpu.dot_dimension_numbers<[2], [1], [1], [2], [0, 0, 0, 1, 1, 2], [0], [0]>} : vector<4x8x16xbf16>, vector<4x16x32xbf16>, vector<4x8x32xf32> -> vector<4x8x32xf32>
    "tpu.trace_stop"() : () -> ()
    %32 = vector.extract_strided_slice %31 {offsets = [0, 0, 0], sizes = [1, 8, 32], strides = [1, 1, 1]} : vector<4x8x32xf32> to vector<1x8x32xf32>
    %33 = vector.shape_cast %32 : vector<1x8x32xf32> to vector<8x32xf32>
    %34 = vector.extract_strided_slice %31 {offsets = [1, 0, 0], sizes = [1, 8, 32], strides = [1, 1, 1]} : vector<4x8x32xf32> to vector<1x8x32xf32>
    %35 = vector.shape_cast %34 : vector<1x8x32xf32> to vector<8x32xf32>
    %36 = vector.extract_strided_slice %31 {offsets = [2, 0, 0], sizes = [1, 8, 32], strides = [1, 1, 1]} : vector<4x8x32xf32> to vector<1x8x32xf32>
    %37 = vector.shape_cast %36 : vector<1x8x32xf32> to vector<8x32xf32>
    %38 = vector.extract_strided_slice %31 {offsets = [3, 0, 0], sizes = [1, 8, 32], strides = [1, 1, 1]} : vector<4x8x32xf32> to vector<1x8x32xf32>
    %39 = vector.shape_cast %38 : vector<1x8x32xf32> to vector<8x32xf32>
    %40 = tpu.concatenate %33, %35, %37, %39 in 1 : vector<8x32xf32>, vector<8x32xf32>, vector<8x32xf32>, vector<8x32xf32> -> vector<8x128xf32>
    %41 = arith.addf %1, %40 : vector<8x128xf32>
    %cst_15 = arith.constant dense<0.000000e+00> : vector<8xf32>
    %42 = vector.multi_reduction <add>, %41, %cst_15 [1] : vector<8x128xf32> to vector<8xf32>
    %43 = vector.shape_cast %42 : vector<8xf32> to vector<8x1xf32>
    %cst_16 = arith.constant 1.280000e+02 : f32
    %44 = vector.broadcast %cst_16 : f32 to vector<8x1xf32>
    %45 = arith.divf %43, %44 : vector<8x1xf32>
    %46 = vector.broadcast %45 : vector<8x1xf32> to vector<8x128xf32>
    %47 = arith.subf %41, %46 : vector<8x128xf32>
    %48 = arith.mulf %47, %47 : vector<8x128xf32>
    %cst_17 = arith.constant dense<0.000000e+00> : vector<8xf32>
    %49 = vector.multi_reduction <add>, %48, %cst_17 [1] : vector<8x128xf32> to vector<8xf32>
    %50 = vector.shape_cast %49 : vector<8xf32> to vector<8x1xf32>
    %cst_18 = arith.constant 1.280000e+02 : f32
    %51 = vector.broadcast %cst_18 : f32 to vector<8x1xf32>
    %52 = arith.divf %50, %51 : vector<8x1xf32>
    %53 = vector.broadcast %45 : vector<8x1xf32> to vector<8x128xf32>
    %54 = arith.subf %41, %53 : vector<8x128xf32>
    %cst_19 = arith.constant 9.99999974E-6 : f32
    %55 = vector.broadcast %cst_19 : f32 to vector<8x1xf32>
    %56 = arith.addf %52, %55 : vector<8x1xf32>
    %57 = math.rsqrt %56 : vector<8x1xf32>
    %58 = vector.broadcast %57 : vector<8x1xf32> to vector<8x128xf32>
    %59 = arith.mulf %54, %58 : vector<8x128xf32>
    %c0_20 = arith.constant 0 : index
    %c0_21 = arith.constant 0 : index
    %60 = vector.load %arg6[%c0_20, %c0_21] : memref<1x128xf32, #tpu.memory_space<vmem>>, vector<1x128xf32>
    %61 = vector.shape_cast %60 : vector<1x128xf32> to vector<128xf32>
    %62 = vector.shape_cast %61 : vector<128xf32> to vector<1x128xf32>
    %63 = vector.broadcast %62 : vector<1x128xf32> to vector<8x128xf32>
    %64 = arith.mulf %59, %63 : vector<8x128xf32>
    %c0_22 = arith.constant 0 : index
    %c0_23 = arith.constant 0 : index
    %65 = vector.load %arg7[%c0_22, %c0_23] : memref<1x128xf32, #tpu.memory_space<vmem>>, vector<1x128xf32>
    %66 = vector.shape_cast %65 : vector<1x128xf32> to vector<128xf32>
    %67 = vector.shape_cast %66 : vector<128xf32> to vector<1x128xf32>
    %68 = vector.broadcast %67 : vector<1x128xf32> to vector<8x128xf32>
    %69 = arith.addf %64, %68 : vector<8x128xf32>
    %70 = arith.truncf %69 : vector<8x128xf32> to vector<8x128xbf16>
    %c0_24 = arith.constant 0 : index
    %c0_25 = arith.constant 0 : index
    %71 = vector.load %arg8[%c0_24, %c0_25] : memref<128x512xbf16, #tpu.memory_space<vmem>>, vector<128x512xbf16>
    %cst_26 = arith.constant dense<0.000000e+00> : vector<8x512xf32>
    %72 = tpu.matmul %70, %71, %cst_26 {dimension_numbers = #tpu.dot_dimension_numbers<[1], [0], [0], [1], [0, 0, 1, 1], [], []>} : vector<8x128xbf16>, vector<128x512xbf16>, vector<8x512xf32> -> vector<8x512xf32>
    %c0_27 = arith.constant 0 : index
    %c0_28 = arith.constant 0 : index
    %73 = vector.load %arg9[%c0_27, %c0_28] : memref<1x512xf32, #tpu.memory_space<vmem>>, vector<1x512xf32>
    %74 = vector.shape_cast %73 : vector<1x512xf32> to vector<512xf32>
    %75 = vector.shape_cast %74 : vector<512xf32> to vector<1x512xf32>
    %76 = vector.broadcast %75 : vector<1x512xf32> to vector<8x512xf32>
    %77 = arith.addf %72, %76 : vector<8x512xf32>
    %cst_29 = arith.constant 0.000000e+00 : f32
    %78 = vector.broadcast %cst_29 : f32 to vector<8x512xf32>
    %79 = arith.maximumf %77, %78 : vector<8x512xf32>
    %80 = arith.truncf %79 : vector<8x512xf32> to vector<8x512xbf16>
    %c0_30 = arith.constant 0 : index
    %c0_31 = arith.constant 0 : index
    %81 = vector.load %arg10[%c0_30, %c0_31] : memref<512x128xbf16, #tpu.memory_space<vmem>>, vector<512x128xbf16>
    %cst_32 = arith.constant dense<0.000000e+00> : vector<8x128xf32>
    %82 = tpu.matmul %80, %81, %cst_32 {dimension_numbers = #tpu.dot_dimension_numbers<[1], [0], [0], [1], [0, 0, 1, 1], [], []>} : vector<8x512xbf16>, vector<512x128xbf16>, vector<8x128xf32> -> vector<8x128xf32>
    %c0_33 = arith.constant 0 : index
    %c0_34 = arith.constant 0 : index
    %83 = vector.load %arg11[%c0_33, %c0_34] : memref<1x128xf32, #tpu.memory_space<vmem>>, vector<1x128xf32>
    %84 = vector.shape_cast %83 : vector<1x128xf32> to vector<128xf32>
    %85 = vector.shape_cast %84 : vector<128xf32> to vector<1x128xf32>
    %86 = vector.broadcast %85 : vector<1x128xf32> to vector<8x128xf32>
    %87 = arith.addf %82, %86 : vector<8x128xf32>
    %88 = arith.addf %69, %87 : vector<8x128xf32>
    %cst_35 = arith.constant dense<0.000000e+00> : vector<8xf32>
    %89 = vector.multi_reduction <add>, %88, %cst_35 [1] : vector<8x128xf32> to vector<8xf32>
    %90 = vector.shape_cast %89 : vector<8xf32> to vector<8x1xf32>
    %cst_36 = arith.constant 1.280000e+02 : f32
    %91 = vector.broadcast %cst_36 : f32 to vector<8x1xf32>
    %92 = arith.divf %90, %91 : vector<8x1xf32>
    %93 = vector.broadcast %92 : vector<8x1xf32> to vector<8x128xf32>
    %94 = arith.subf %88, %93 : vector<8x128xf32>
    %95 = arith.mulf %94, %94 : vector<8x128xf32>
    %cst_37 = arith.constant dense<0.000000e+00> : vector<8xf32>
    %96 = vector.multi_reduction <add>, %95, %cst_37 [1] : vector<8x128xf32> to vector<8xf32>
    %97 = vector.shape_cast %96 : vector<8xf32> to vector<8x1xf32>
    %cst_38 = arith.constant 1.280000e+02 : f32
    %98 = vector.broadcast %cst_38 : f32 to vector<8x1xf32>
    %99 = arith.divf %97, %98 : vector<8x1xf32>
    %100 = vector.broadcast %92 : vector<8x1xf32> to vector<8x128xf32>
    %101 = arith.subf %88, %100 : vector<8x128xf32>
    %cst_39 = arith.constant 9.99999974E-6 : f32
    %102 = vector.broadcast %cst_39 : f32 to vector<8x1xf32>
    %103 = arith.addf %99, %102 : vector<8x1xf32>
    %104 = math.rsqrt %103 : vector<8x1xf32>
    %105 = vector.broadcast %104 : vector<8x1xf32> to vector<8x128xf32>
    %106 = arith.mulf %101, %105 : vector<8x128xf32>
    %c0_40 = arith.constant 0 : index
    %c0_41 = arith.constant 0 : index
    %107 = vector.load %arg12[%c0_40, %c0_41] : memref<1x128xf32, #tpu.memory_space<vmem>>, vector<1x128xf32>
    %108 = vector.shape_cast %107 : vector<1x128xf32> to vector<128xf32>
    %109 = vector.shape_cast %108 : vector<128xf32> to vector<1x128xf32>
    %110 = vector.broadcast %109 : vector<1x128xf32> to vector<8x128xf32>
    %111 = arith.mulf %106, %110 : vector<8x128xf32>
    %c0_42 = arith.constant 0 : index
    %c0_43 = arith.constant 0 : index
    %112 = vector.load %arg13[%c0_42, %c0_43] : memref<1x128xf32, #tpu.memory_space<vmem>>, vector<1x128xf32>
    %113 = vector.shape_cast %112 : vector<1x128xf32> to vector<128xf32>
    %114 = vector.shape_cast %113 : vector<128xf32> to vector<1x128xf32>
    %115 = vector.broadcast %114 : vector<1x128xf32> to vector<8x128xf32>
    %116 = arith.addf %111, %115 : vector<8x128xf32>
    %c0_44 = arith.constant 0 : index
    %c0_45 = arith.constant 0 : index
    %c0_46 = arith.constant 0 : index
    %117 = vector.load %arg14[%c0_44, %c0_45, %c0_46] : memref<1x8x128xf32, #tpu.memory_space<vmem>>, vector<1x8x128xf32>
    %118 = vector.shape_cast %117 : vector<1x8x128xf32> to vector<8x128xf32>
    %119 = vector.shape_cast %116 : vector<8x128xf32> to vector<1x8x128xf32>
    tpu.vector_store %arg14[%c0_44, %c0_45, %c0_46], %119 {strides = array<i32>} : memref<1x8x128xf32, #tpu.memory_space<vmem>>, vector<1x8x128xf32>,
    return
  }
  func.func @transform_0(%arg0: i32, %arg1: i32) -> (i32, i32, i32) {
    %c0_i32 = arith.constant 0 : i32
    %c0_i32_0 = arith.constant 0 : i32
    return %arg0, %arg1, %c0_i32 : i32, i32, i32
  }
  func.func @transform_1(%arg0: i32, %arg1: i32) -> (i32, i32, i32) {
    %c0_i32 = arith.constant 0 : i32
    %c0_i32_0 = arith.constant 0 : i32
    %c0_i32_1 = arith.constant 0 : i32
    return %arg0, %c0_i32, %c0_i32_0 : i32, i32, i32
  }
  func.func @transform_2(%arg0: i32, %arg1: i32) -> (i32, i32) {
    %c0_i32 = arith.constant 0 : i32
    %c0_i32_0 = arith.constant 0 : i32
    %c0_i32_1 = arith.constant 0 : i32
    return %c0_i32, %c0_i32_0 : i32, i32
  }
  func.func @transform_3(%arg0: i32, %arg1: i32) -> (i32, i32) {
    %c0_i32 = arith.constant 0 : i32
    %c0_i32_0 = arith.constant 0 : i32
    %c0_i32_1 = arith.constant 0 : i32
    return %c0_i32, %c0_i32_0 : i32, i32
  }
  func.func @transform_4(%arg0: i32, %arg1: i32) -> (i32, i32) {
    %c0_i32 = arith.constant 0 : i32
    %c0_i32_0 = arith.constant 0 : i32
    %c0_i32_1 = arith.constant 0 : i32
    return %c0_i32, %c0_i32_0 : i32, i32
  }
  func.func @transform_5(%arg0: i32, %arg1: i32) -> (i32, i32) {
    %c0_i32 = arith.constant 0 : i32
    %c0_i32_0 = arith.constant 0 : i32
    %c0_i32_1 = arith.constant 0 : i32
    return %c0_i32, %c0_i32_0 : i32, i32
  }
  func.func @transform_6(%arg0: i32, %arg1: i32) -> (i32, i32) {
    %c0_i32 = arith.constant 0 : i32
    %c0_i32_0 = arith.constant 0 : i32
    %c0_i32_1 = arith.constant 0 : i32
    return %c0_i32, %c0_i32_0 : i32, i32
  }
  func.func @transform_7(%arg0: i32, %arg1: i32) -> (i32, i32) {
    %c0_i32 = arith.constant 0 : i32
    %c0_i32_0 = arith.constant 0 : i32
    %c0_i32_1 = arith.constant 0 : i32
    return %c0_i32, %c0_i32_0 : i32, i32
  }
  func.func @transform_8(%arg0: i32, %arg1: i32) -> (i32, i32) {
    %c0_i32 = arith.constant 0 : i32
    %c0_i32_0 = arith.constant 0 : i32
    %c0_i32_1 = arith.constant 0 : i32
    return %c0_i32, %c0_i32_0 : i32, i32
  }
  func.func @transform_9(%arg0: i32, %arg1: i32) -> (i32, i32) {
    %c0_i32 = arith.constant 0 : i32
    %c0_i32_0 = arith.constant 0 : i32
    %c0_i32_1 = arith.constant 0 : i32
    return %c0_i32, %c0_i32_0 : i32, i32
  }
  func.func @transform_10(%arg0: i32, %arg1: i32) -> (i32, i32) {
    %c0_i32 = arith.constant 0 : i32
    %c0_i32_0 = arith.constant 0 : i32
    %c0_i32_1 = arith.constant 0 : i32
    return %c0_i32, %c0_i32_0 : i32, i32
  }
  func.func @transform_11(%arg0: i32, %arg1: i32) -> (i32, i32) {
    %c0_i32 = arith.constant 0 : i32
    %c0_i32_0 = arith.constant 0 : i32
    %c0_i32_1 = arith.constant 0 : i32
    return %c0_i32, %c0_i32_0 : i32, i32
  }
  func.func @transform_12(%arg0: i32, %arg1: i32) -> (i32, i32, i32) {
    %c0_i32 = arith.constant 0 : i32
    %c0_i32_0 = arith.constant 0 : i32
    return %arg0, %arg1, %c0_i32 : i32, i32, i32
  }
}

</mosaic_0001>

<llo_original>
// kernel: tpu_custom_call.1
$region0: #{tpu_custom_call.1}
  #allocation0 [shape = 'u32[]', space=smem, size = 0x4, offset = 0x4, fixed_abs, tag = 'smem constant byte address 0x4 - core index']
  #allocation1 [shape = 'u32[144,128]{1,0:T(1,128)}', space=vmem, size = 0x12000, scoped, tag = 'internal scratch']
  #allocation2 [shape = 'bf16[4,16,32]{2,1,0:T(8,128)(2,1)}', space=vmem, size = 0x4000, scoped, tag = 'scratch operand']
  #allocation3 [shape = 'bf16[4,16,32]{2,1,0:T(8,128)(2,1)}', space=vmem, size = 0x4000, scoped, tag = 'scratch operand']
  %s0 = inlined_call_operand.hbm [shape: f32[2,16,128], index: 0, kind: input, shape index: {}]
  %s1 = inlined_call_operand.hbm [shape: bf16[2,16,128], index: 1, kind: input, shape index: {}]
  %s2 = inlined_call_operand.hbm [shape: bf16[128,128], index: 2, kind: input, shape index: {}]
  %s3 = inlined_call_operand.hbm [shape: bf16[128,256], index: 3, kind: input, shape index: {}]
  %s4 = inlined_call_operand.vmem [shape: f32[1,128], index: 4, kind: input, shape index: {}]
  %s5 = inlined_call_operand.vmem [shape: f32[1,128], index: 5, kind: input, shape index: {}]
  %s6 = inlined_call_operand.hbm [shape: bf16[128,512], index: 6, kind: input, shape index: {}]
  %s7 = inlined_call_operand.vmem [shape: f32[1,512], index: 7, kind: input, shape index: {}]
  %s8 = inlined_call_operand.hbm [shape: bf16[512,128], index: 8, kind: input, shape index: {}]
  %s9 = inlined_call_operand.vmem [shape: f32[1,128], index: 9, kind: input, shape index: {}]
  %s10 = inlined_call_operand.vmem [shape: f32[1,128], index: 10, kind: input, shape index: {}]
  %s11 = inlined_call_operand.vmem [shape: f32[1,128], index: 11, kind: input, shape index: {}]
  %s12 = inlined_call_operand.hbm [shape: f32[2,16,128], index: 12, kind: output, shape index: {}]
  %s13 = sld [smem:[#allocation0]]
  $region109: #{tpu_custom_call.1} parent=0
    _
  %s15 = ssub.s32 1, %s13
  %s16 = scalar_select 0, %s15, %s13
  $region1: #{tpu_custom_call.1} parent=0
    #allocation4 [shape = 'u8[8192]{0}', space=vmem, size = 0x2000, scoped, tag = 'input window, operand 0']
    #allocation5 [shape = 's32[2]{0}', space=sflag, size = 0x8, scoped, tag = 'scoped memory for tpu_custom_call.1']
    #allocation6 [shape = 's32[2]{0}', space=sflag, size = 0x8, scoped, tag = 'scoped memory for tpu_custom_call.1']
    #allocation7 [shape = 'u8[8192]{0}', space=vmem, size = 0x2000, scoped, tag = 'input window, operand 1']
    #allocation8 [shape = 's32[2]{0}', space=sflag, size = 0x8, scoped, tag = 'scoped memory for tpu_custom_call.1']
    #allocation9 [shape = 'u8[32768]{0}', space=vmem, size = 0x8000, scoped, tag = 'input window, operand 2, single buffered']
    #allocation10 [shape = 'u8[65536]{0}', space=vmem, size = 0x10000, scoped, tag = 'input window, operand 3, single buffered']
    #allocation11 [shape = 's32[1]{0}', space=sflag, size = 0x4, scoped, tag = 'scoped memory for tpu_custom_call.1']
    #allocation12 [shape = 'u8[131072]{0}', space=vmem, size = 0x20000, scoped, tag = 'input window, operand 6, single buffered']
    #allocation13 [shape = 'u8[131072]{0}', space=vmem, size = 0x20000, scoped, tag = 'input window, operand 8, single buffered']
    #allocation14 [shape = 's32[1]{0}', space=sflag, size = 0x4, scoped, tag = 'scoped memory for tpu_custom_call.1']
    #allocation15 [shape = 'u8[8192]{0}', space=vmem, size = 0x2000, scoped, tag = 'output window, operand 0']
    %17 = vsyncpa [#allocation5], 0
    %s18 = scalar_lea.sflag [#allocation5], 1
    %19 = vsyncpa %s18, 0
    %20 = vsyncpa [#allocation8], 0
    %s21 = scalar_lea.sflag [#allocation8], 1
    %22 = vsyncpa %s21, 0
    %23 = vsyncpa [#allocation11], 0
    %24 = vsyncpa [#allocation14], 0
    %25 = vsyncpa [#allocation6], 0
    %s26 = scalar_lea.sflag [#allocation6], 1
    %27 = vsyncpa %s26, 0
    loop: start=0, step=1, limit=6
    $region2: #{tpu_custom_call.1} parent=1 // loop_pre_header
      _
    $region3: #{tpu_custom_call.1} parent=1 // loop_header
      %s29 = sphi 0, %s33
      %p30 = scmp.ge.s32.totalorder %s29, 6
      %s36 = sphi 0, %s48
      %s37 = sphi 0, %s44
      %s38 = sphi 0, %s36
      %s39 = sphi 0, %s37
      %s40 = sphi 0, %s38
      %s41 = sphi 0, %s39
      %s53 = sphi 0, %s55
      %s56 = sphi 0, %s53
      %s57 = sphi 0, %s56
      %s73 = sphi 0, %s57
      %s79 = sphi 0, %s81
      %s82 = sphi 0, %s79
      %s83 = sphi 0, %s82
      %s99 = sphi 0, %s83
      %s103 = sphi 0, %s103
      %s105 = sphi 0, %s103
      %s106 = sphi 0, %s105
      %s120 = sphi 0, %s106
      %s124 = sphi 0, %s124
      %s126 = sphi 0, %s124
      %s127 = sphi 0, %s126
      %s141 = sphi 0, %s127
      %s145 = sphi 0, %s145
      %s147 = sphi 0, %s145
      %s148 = sphi 0, %s147
      %s162 = sphi 0, %s148
      %s166 = sphi 0, %s166
      %s168 = sphi 0, %s166
      %s169 = sphi 0, %s168
      %s183 = sphi 0, %s169
      %s187 = sphi 0, %s187
      %s189 = sphi 0, %s187
      %s190 = sphi 0, %s189
      %s204 = sphi 0, %s190
      %s208 = sphi 0, %s208
      %s210 = sphi 0, %s208
      %s211 = sphi 0, %s210
      %s225 = sphi 0, %s211
      %s229 = sphi 0, %s229
      %s231 = sphi 0, %s229
      %s232 = sphi 0, %s231
      %s246 = sphi 0, %s232
      %s250 = sphi 0, %s250
      %s252 = sphi 0, %s250
      %s253 = sphi 0, %s252
      %s267 = sphi 0, %s253
      %s271 = sphi 0, %s271
      %s273 = sphi 0, %s271
      %s274 = sphi 0, %s273
      %s288 = sphi 0, %s274
      %s292 = sphi 0, %s292
      %s294 = sphi 0, %s292
      %s295 = sphi 0, %s294
      %s309 = sphi 0, %s295
      %s317 = sphi 0, %s319
      %s320 = sphi 0, %s317
      %s321 = sphi 0, %s320
      %s337 = sphi 0, %s321
    $region4: #{tpu_custom_call.1} parent=1 // loop_header_branch
      %32 = sbr.rel (%p30) target = $region8
    $region5: #{tpu_custom_call.1} parent=1 // loop_body
      %s34 = ssub.s32 %s29, 1
      %s35 = ssub.s32 %s29, 2
      %s42 = sadd.s32 1, %s37
      %p43 = scmp.ge.s32.totalorder %s42, 2
      %s44 = scalar_select %p43, 0, %s42
      %s45 = sadd.s32 1, %s36
      %s46 = scalar_select %p43, %s45, %s36
      %p47 = scmp.ge.s32.totalorder %s46, 2
      %s48 = scalar_select %p47, 0, %s46
      %s49 = ssub.s32 %s36, %s48
      %s50 = ssub.s32 %s37, %s44
      %s51 = sor.u32 %s49, %s50
      %p52 = scmp.eq.s32.totalorder %s51, 0
      %s54 = sadd.s32 %s53, 1
      %s55 = scalar_select %p52, %s53, %s54
      %p58 = pneg %p52
      %p59 = scmp.eq.s32.totalorder %s29, 3
      %p60 = por %p58, %p59
      %p61 = scmp.ne.s32.totalorder %s53, %s56
      %p62 = scmp.eq.s32.totalorder %s29, 0
      %p63 = por %p61, %p62
      %p64 = scmp.ne.s32.totalorder %s53, %s56
      %p65 = scmp.eq.s32.totalorder %s34, 3
      %p66 = por %p64, %p65
      %p67 = scmp.ne.s32.totalorder %s56, %s57
      %p68 = scmp.eq.s32.totalorder %s34, 0
      %p69 = por %p67, %p68
      %p70 = scmp.ne.s32.totalorder %s56, %s57
      %p71 = scmp.eq.s32.totalorder %s35, 3
      %p72 = por %p70, %p71
      %p74 = scmp.ne.s32.totalorder %s57, %s73
      %p75 = scmp.eq.s32.totalorder %s35, 0
      %p76 = por %p74, %p75
      %s77 = ssub.s32 %s36, %s48
      %p78 = scmp.eq.s32.totalorder %s77, 0
      %s80 = sadd.s32 %s79, 1
      %s81 = scalar_select %p78, %s79, %s80
      %p84 = pneg %p78
      %p85 = scmp.eq.s32.totalorder %s29, 3
      %p86 = por %p84, %p85
      %p87 = scmp.ne.s32.totalorder %s79, %s82
      %p88 = scmp.eq.s32.totalorder %s29, 0
      %p89 = por %p87, %p88
      %p90 = scmp.ne.s32.totalorder %s79, %s82
      %p91 = scmp.eq.s32.totalorder %s34, 3
      %p92 = por %p90, %p91
      %p93 = scmp.ne.s32.totalorder %s82, %s83
      %p94 = scmp.eq.s32.totalorder %s34, 0
      %p95 = por %p93, %p94
      %p96 = scmp.ne.s32.totalorder %s82, %s83
      %p97 = scmp.eq.s32.totalorder %s35, 3
      %p98 = por %p96, %p97
      %p100 = scmp.ne.s32.totalorder %s83, %s99
      %p101 = scmp.eq.s32.totalorder %s35, 0
      %p102 = por %p100, %p101
      %s104 = sadd.s32 %s103, 1
      %p107 = scmp.eq.s32.totalorder %s29, 3
      %p108 = scmp.ne.s32.totalorder %s103, %s105
      %p109 = scmp.eq.s32.totalorder %s29, 0
      %p110 = por %p108, %p109
      %p111 = scmp.ne.s32.totalorder %s103, %s105
      %p112 = scmp.eq.s32.totalorder %s34, 3
      %p113 = por %p111, %p112
      %p114 = scmp.ne.s32.totalorder %s105, %s106
      %p115 = scmp.eq.s32.totalorder %s34, 0
      %p116 = por %p114, %p115
      %p117 = scmp.ne.s32.totalorder %s105, %s106
      %p118 = scmp.eq.s32.totalorder %s35, 3
      %p119 = por %p117, %p118
      %p121 = scmp.ne.s32.totalorder %s106, %s120
      %p122 = scmp.eq.s32.totalorder %s35, 0
      %p123 = por %p121, %p122
      %s125 = sadd.s32 %s124, 1
      %p128 = scmp.eq.s32.totalorder %s29, 3
      %p129 = scmp.ne.s32.totalorder %s124, %s126
      %p130 = scmp.eq.s32.totalorder %s29, 0
      %p131 = por %p129, %p130
      %p132 = scmp.ne.s32.totalorder %s124, %s126
      %p133 = scmp.eq.s32.totalorder %s34, 3
      %p134 = por %p132, %p133
      %p135 = scmp.ne.s32.totalorder %s126, %s127
      %p136 = scmp.eq.s32.totalorder %s34, 0
      %p137 = por %p135, %p136
      %p138 = scmp.ne.s32.totalorder %s126, %s127
      %p139 = scmp.eq.s32.totalorder %s35, 3
      %p140 = por %p138, %p139
      %p142 = scmp.ne.s32.totalorder %s127, %s141
      %p143 = scmp.eq.s32.totalorder %s35, 0
      %p144 = por %p142, %p143
      %s146 = sadd.s32 %s145, 1
      %p149 = scmp.eq.s32.totalorder %s29, 3
      %p150 = scmp.ne.s32.totalorder %s145, %s147
      %p151 = scmp.eq.s32.totalorder %s29, 0
      %p152 = por %p150, %p151
      %p153 = scmp.ne.s32.totalorder %s145, %s147
      %p154 = scmp.eq.s32.totalorder %s34, 3
      %p155 = por %p153, %p154
      %p156 = scmp.ne.s32.totalorder %s147, %s148
      %p157 = scmp.eq.s32.totalorder %s34, 0
      %p158 = por %p156, %p157
      %p159 = scmp.ne.s32.totalorder %s147, %s148
      %p160 = scmp.eq.s32.totalorder %s35, 3
      %p161 = por %p159, %p160
      %p163 = scmp.ne.s32.totalorder %s148, %s162
      %p164 = scmp.eq.s32.totalorder %s35, 0
      %p165 = por %p163, %p164
      %s167 = sadd.s32 %s166, 1
      %p170 = scmp.eq.s32.totalorder %s29, 3
      %p171 = scmp.ne.s32.totalorder %s166, %s168
      %p172 = scmp.eq.s32.totalorder %s29, 0
      %p173 = por %p171, %p172
      %p174 = scmp.ne.s32.totalorder %s166, %s168
      %p175 = scmp.eq.s32.totalorder %s34, 3
      %p176 = por %p174, %p175
      %p177 = scmp.ne.s32.totalorder %s168, %s169
      %p178 = scmp.eq.s32.totalorder %s34, 0
      %p179 = por %p177, %p178
      %p180 = scmp.ne.s32.totalorder %s168, %s169
      %p181 = scmp.eq.s32.totalorder %s35, 3
      %p182 = por %p180, %p181
      %p184 = scmp.ne.s32.totalorder %s169, %s183
      %p185 = scmp.eq.s32.totalorder %s35, 0
      %p186 = por %p184, %p185
      %s188 = sadd.s32 %s187, 1
      %p191 = scmp.eq.s32.totalorder %s29, 3
      %p192 = scmp.ne.s32.totalorder %s187, %s189
      %p193 = scmp.eq.s32.totalorder %s29, 0
      %p194 = por %p192, %p193
      %p195 = scmp.ne.s32.totalorder %s187, %s189
      %p196 = scmp.eq.s32.totalorder %s34, 3
      %p197 = por %p195, %p196
      %p198 = scmp.ne.s32.totalorder %s189, %s190
      %p199 = scmp.eq.s32.totalorder %s34, 0
      %p200 = por %p198, %p199
      %p201 = scmp.ne.s32.totalorder %s189, %s190
      %p202 = scmp.eq.s32.totalorder %s35, 3
      %p203 = por %p201, %p202
      %p205 = scmp.ne.s32.totalorder %s190, %s204
      %p206 = scmp.eq.s32.totalorder %s35, 0
      %p207 = por %p205, %p206
      %s209 = sadd.s32 %s208, 1
      %p212 = scmp.eq.s32.totalorder %s29, 3
      %p213 = scmp.ne.s32.totalorder %s208, %s210
      %p214 = scmp.eq.s32.totalorder %s29, 0
      %p215 = por %p213, %p214
      %p216 = scmp.ne.s32.totalorder %s208, %s210
      %p217 = scmp.eq.s32.totalorder %s34, 3
      %p218 = por %p216, %p217
      %p219 = scmp.ne.s32.totalorder %s210, %s211
      %p220 = scmp.eq.s32.totalorder %s34, 0
      %p221 = por %p219, %p220
      %p222 = scmp.ne.s32.totalorder %s210, %s211
      %p223 = scmp.eq.s32.totalorder %s35, 3
      %p224 = por %p222, %p223
      %p226 = scmp.ne.s32.totalorder %s211, %s225
      %p227 = scmp.eq.s32.totalorder %s35, 0
      %p228 = por %p226, %p227
      %s230 = sadd.s32 %s229, 1
      %p233 = scmp.eq.s32.totalorder %s29, 3
      %p234 = scmp.ne.s32.totalorder %s229, %s231
      %p235 = scmp.eq.s32.totalorder %s29, 0
      %p236 = por %p234, %p235
      %p237 = scmp.ne.s32.totalorder %s229, %s231
      %p238 = scmp.eq.s32.totalorder %s34, 3
      %p239 = por %p237, %p238
      %p240 = scmp.ne.s32.totalorder %s231, %s232
      %p241 = scmp.eq.s32.totalorder %s34, 0
      %p242 = por %p240, %p241
      %p243 = scmp.ne.s32.totalorder %s231, %s232
      %p244 = scmp.eq.s32.totalorder %s35, 3
      %p245 = por %p243, %p244
      %p247 = scmp.ne.s32.totalorder %s232, %s246
      %p248 = scmp.eq.s32.totalorder %s35, 0
      %p249 = por %p247, %p248
      %s251 = sadd.s32 %s250, 1
      %p254 = scmp.eq.s32.totalorder %s29, 3
      %p255 = scmp.ne.s32.totalorder %s250, %s252
      %p256 = scmp.eq.s32.totalorder %s29, 0
      %p257 = por %p255, %p256
      %p258 = scmp.ne.s32.totalorder %s250, %s252
      %p259 = scmp.eq.s32.totalorder %s34, 3
      %p260 = por %p258, %p259
      %p261 = scmp.ne.s32.totalorder %s252, %s253
      %p262 = scmp.eq.s32.totalorder %s34, 0
      %p263 = por %p261, %p262
      %p264 = scmp.ne.s32.totalorder %s252, %s253
      %p265 = scmp.eq.s32.totalorder %s35, 3
      %p266 = por %p264, %p265
      %p268 = scmp.ne.s32.totalorder %s253, %s267
      %p269 = scmp.eq.s32.totalorder %s35, 0
      %p270 = por %p268, %p269
      %s272 = sadd.s32 %s271, 1
      %p275 = scmp.eq.s32.totalorder %s29, 3
      %p276 = scmp.ne.s32.totalorder %s271, %s273
      %p277 = scmp.eq.s32.totalorder %s29, 0
      %p278 = por %p276, %p277
      %p279 = scmp.ne.s32.totalorder %s271, %s273
      %p280 = scmp.eq.s32.totalorder %s34, 3
      %p281 = por %p279, %p280
      %p282 = scmp.ne.s32.totalorder %s273, %s274
      %p283 = scmp.eq.s32.totalorder %s34, 0
      %p284 = por %p282, %p283
      %p285 = scmp.ne.s32.totalorder %s273, %s274
      %p286 = scmp.eq.s32.totalorder %s35, 3
      %p287 = por %p285, %p286
      %p289 = scmp.ne.s32.totalorder %s274, %s288
      %p290 = scmp.eq.s32.totalorder %s35, 0
      %p291 = por %p289, %p290
      %s293 = sadd.s32 %s292, 1
      %p296 = scmp.eq.s32.totalorder %s29, 3
      %p297 = scmp.ne.s32.totalorder %s292, %s294
      %p298 = scmp.eq.s32.totalorder %s29, 0
      %p299 = por %p297, %p298
      %p300 = scmp.ne.s32.totalorder %s292, %s294
      %p301 = scmp.eq.s32.totalorder %s34, 3
      %p302 = por %p300, %p301
      %p303 = scmp.ne.s32.totalorder %s294, %s295
      %p304 = scmp.eq.s32.totalorder %s34, 0
      %p305 = por %p303, %p304
      %p306 = scmp.ne.s32.totalorder %s294, %s295
      %p307 = scmp.eq.s32.totalorder %s35, 3
      %p308 = por %p306, %p307
      %p310 = scmp.ne.s32.totalorder %s295, %s309
      %p311 = scmp.eq.s32.totalorder %s35, 0
      %p312 = por %p310, %p311
      %s313 = ssub.s32 %s36, %s48
      %s314 = ssub.s32 %s37, %s44
      %s315 = sor.u32 %s313, %s314
      %p316 = scmp.eq.s32.totalorder %s315, 0
      %s318 = sadd.s32 %s317, 1
      %s319 = scalar_select %p316, %s317, %s318
      %p322 = pneg %p316
      %p323 = scmp.eq.s32.totalorder %s29, 3
      %p324 = por %p322, %p323
      %p325 = scmp.ne.s32.totalorder %s317, %s320
      %p326 = scmp.eq.s32.totalorder %s29, 0
      %p327 = por %p325, %p326
      %p328 = scmp.ne.s32.totalorder %s317, %s320
      %p329 = scmp.eq.s32.totalorder %s34, 3
      %p330 = por %p328, %p329
      %p331 = scmp.ne.s32.totalorder %s320, %s321
      %p332 = scmp.eq.s32.totalorder %s34, 0
      %p333 = por %p331, %p332
      %p334 = scmp.ne.s32.totalorder %s320, %s321
      %p335 = scmp.eq.s32.totalorder %s35, 3
      %p336 = por %p334, %p335
      %p338 = scmp.ne.s32.totalorder %s321, %s337
      %p339 = scmp.eq.s32.totalorder %s35, 0
      %p340 = por %p338, %p339
      %p341 = scmp.le.s32.totalorder 1, %s29
      %p342 = scmp.lt.s32.totalorder %s29, 5
      %p343 = pnand %p341, %p342
      %p344 = pneg %p343
      // Predicated region
      $region9: #{tpu_custom_call.1} parent=5 // pred_check
        _
      $region10: #{tpu_custom_call.1} parent=5 // pred_check_branch
        %346 = sbr.rel (%p343) target = $region12
      $region11: #{tpu_custom_call.1} parent=5 // pred_region
        %s347 = ssub.s32 %s29, 1
        // Predicated region
        $region13: #{tpu_custom_call.1} parent=11 // pred_check
          %p348 = pneg %p116
        $region14: #{tpu_custom_call.1} parent=11 // pred_check_branch
          %350 = sbr.rel (%p348) target = $region16
        $region15: #{tpu_custom_call.1} parent=11 // pred_region
          %s352 = ssub.s32 1024, 1024
          %353 = vsyncadd [#allocation8], %s352
          %s354 = sshll.u32 [#allocation9], 4
          %s355 = int_to_ptr.vmem [resolvable:$true] %s354
          %360 = dma.hbm_to_vmem [thread:$0]  %s2, 1024, %s355, [#allocation8], 64, 64, 4
        $region16: #{tpu_custom_call.1} parent=11 // pred_fallthru
          _
        // Predicated region
        $region17: #{tpu_custom_call.1} parent=11 // pred_check
          %p361 = pneg %p137
        $region18: #{tpu_custom_call.1} parent=11 // pred_check_branch
          %363 = sbr.rel (%p361) target = $region20
        $region19: #{tpu_custom_call.1} parent=11 // pred_region
          %s365 = ssub.s32 2048, 2048
          %366 = vsyncadd [#allocation11], %s365
          %s367 = sshll.u32 [#allocation10], 4
          %s368 = int_to_ptr.vmem [resolvable:$true] %s367
          %373 = dma.hbm_to_vmem [thread:$0]  %s3, 2048, %s368, [#allocation11], 128, 128, 8
        $region20: #{tpu_custom_call.1} parent=11 // pred_fallthru
          _
        // Predicated region
        $region21: #{tpu_custom_call.1} parent=11 // pred_check
          %p374 = pneg %p158
        $region22: #{tpu_custom_call.1} parent=11 // pred_check_branch
          %376 = sbr.rel (%p374) target = $region24
        $region23: #{tpu_custom_call.1} parent=11 // pred_region
          _
        $region24: #{tpu_custom_call.1} parent=11 // pred_fallthru
          _
        // Predicated region
        $region25: #{tpu_custom_call.1} parent=11 // pred_check
          %p377 = pneg %p179
        $region26: #{tpu_custom_call.1} parent=11 // pred_check_branch
          %379 = sbr.rel (%p377) target = $region28
        $region27: #{tpu_custom_call.1} parent=11 // pred_region
          _
        $region28: #{tpu_custom_call.1} parent=11 // pred_fallthru
          _
        // Predicated region
        $region29: #{tpu_custom_call.1} parent=11 // pred_check
          %p380 = pneg %p200
        $region30: #{tpu_custom_call.1} parent=11 // pred_check_branch
          %382 = sbr.rel (%p380) target = $region32
        $region31: #{tpu_custom_call.1} parent=11 // pred_region
          %s384 = ssub.s32 4096, 4096
          %385 = vsyncadd [#allocation11], %s384
          %s386 = sshll.u32 [#allocation12], 4
          %s387 = int_to_ptr.vmem [resolvable:$true] %s386
          %392 = dma.hbm_to_vmem [thread:$0]  %s6, 4096, %s387, [#allocation11], 256, 256, 16
        $region32: #{tpu_custom_call.1} parent=11 // pred_fallthru
          _
        // Predicated region
        $region33: #{tpu_custom_call.1} parent=11 // pred_check
          %p393 = pneg %p221
        $region34: #{tpu_custom_call.1} parent=11 // pred_check_branch
          %395 = sbr.rel (%p393) target = $region36
        $region35: #{tpu_custom_call.1} parent=11 // pred_region
          _
        $region36: #{tpu_custom_call.1} parent=11 // pred_fallthru
          _
        // Predicated region
        $region37: #{tpu_custom_call.1} parent=11 // pred_check
          %p396 = pneg %p242
        $region38: #{tpu_custom_call.1} parent=11 // pred_check_branch
          %398 = sbr.rel (%p396) target = $region40
        $region39: #{tpu_custom_call.1} parent=11 // pred_region
          %s400 = ssub.s32 4096, 4096
          %401 = vsyncadd [#allocation14], %s400
          %s402 = sshll.u32 [#allocation13], 4
          %s403 = int_to_ptr.vmem [resolvable:$true] %s402
          %408 = dma.hbm_to_vmem [thread:$0]  %s8, 4096, %s403, [#allocation14], 64, 64, 4
        $region40: #{tpu_custom_call.1} parent=11 // pred_fallthru
          _
        // Predicated region
        $region41: #{tpu_custom_call.1} parent=11 // pred_check
          %p409 = pneg %p263
        $region42: #{tpu_custom_call.1} parent=11 // pred_check_branch
          %411 = sbr.rel (%p409) target = $region44
        $region43: #{tpu_custom_call.1} parent=11 // pred_region
          _
        $region44: #{tpu_custom_call.1} parent=11 // pred_fallthru
          _
        // Predicated region
        $region45: #{tpu_custom_call.1} parent=11 // pred_check
          %p412 = pneg %p284
        $region46: #{tpu_custom_call.1} parent=11 // pred_check_branch
          %414 = sbr.rel (%p412) target = $region48
        $region47: #{tpu_custom_call.1} parent=11 // pred_region
          _
        $region48: #{tpu_custom_call.1} parent=11 // pred_fallthru
          _
        // Predicated region
        $region49: #{tpu_custom_call.1} parent=11 // pred_check
          %p415 = pneg %p305
        $region50: #{tpu_custom_call.1} parent=11 // pred_check_branch
          %417 = sbr.rel (%p415) target = $region52
        $region51: #{tpu_custom_call.1} parent=11 // pred_region
          _
        $region52: #{tpu_custom_call.1} parent=11 // pred_fallthru
          _
      $region12: #{tpu_custom_call.1} parent=5 // pred_fallthru
        _
      %p418 = scmp.lt.s32.totalorder %s29, 4
      // Predicated region
      $region53: #{tpu_custom_call.1} parent=5 // pred_check
        %p419 = pneg %p418
      $region54: #{tpu_custom_call.1} parent=5 // pred_check_branch
        %421 = sbr.rel (%p419) target = $region56
      $region55: #{tpu_custom_call.1} parent=5 // pred_region
        // Predicated region
        $region57: #{tpu_custom_call.1} parent=55 // pred_check
          %p422 = pneg %p63
        $region58: #{tpu_custom_call.1} parent=55 // pred_check_branch
          %424 = sbr.rel (%p422) target = $region60
        $region59: #{tpu_custom_call.1} parent=55 // pred_region
          %s425 = sand.u32 %s53, 1
          %s426 = scalar_lea.sflag [#allocation5], %s425
          %s427 = sand.u32 %s53, 1
          %s428 = smul.addr %s427, 8
          %s429 = scalar_lea.vmem [#allocation4], %s428
          %s431 = ssub.s32 128, 128
          %432 = vsyncadd %s426, %s431
          %s433 = smul.addr %s36, 2
          %s434 = sadd.s32 %s37, %s433
          %s435 = smul.addr %s434, 128
          %s436 = scalar_lea.hbm %s0, %s435
          %s438 = sshll.u32 %s429, 4
          %s439 = int_to_ptr.vmem [resolvable:$true] %s438
          %441 = dma.hbm_to_vmem [thread:$0]  %s436, 128, %s439, %s426
        $region60: #{tpu_custom_call.1} parent=55 // pred_fallthru
          _
        // Predicated region
        $region61: #{tpu_custom_call.1} parent=55 // pred_check
          %p442 = pneg %p89
        $region62: #{tpu_custom_call.1} parent=55 // pred_check_branch
          %444 = sbr.rel (%p442) target = $region64
        $region63: #{tpu_custom_call.1} parent=55 // pred_region
          %s445 = sand.u32 %s29, 1
          %s446 = scalar_lea.sflag [#allocation8], %s445
          %s447 = sand.u32 %s79, 1
          %s448 = smul.addr %s447, 8
          %s449 = scalar_lea.vmem [#allocation7], %s448
          %s451 = ssub.s32 128, 128
          %452 = vsyncadd %s446, %s451
          %s453 = smul.addr %s36, 2
          %s454 = smul.addr %s453, 64
          %s455 = scalar_lea.hbm %s1, %s454
          %s456 = sshll.u32 %s449, 4
          %s457 = int_to_ptr.vmem [resolvable:$true] %s456
          %462 = dma.hbm_to_vmem [thread:$0]  %s455, 128, %s457, %s446, 64, 64, 4
        $region64: #{tpu_custom_call.1} parent=55 // pred_fallthru
          _
      $region56: #{tpu_custom_call.1} parent=5 // pred_fallthru
        _
      %p463 = scmp.le.s32.totalorder 1, %s29
      %p464 = scmp.lt.s32.totalorder %s29, 5
      %p465 = pnand %p463, %p464
      %p466 = pneg %p465
      // Predicated region
      $region65: #{tpu_custom_call.1} parent=5 // pred_check
        _
      $region66: #{tpu_custom_call.1} parent=5 // pred_check_branch
        %468 = sbr.rel (%p465) target = $region68
      $region67: #{tpu_custom_call.1} parent=5 // pred_region
        %s469 = ssub.s32 %s29, 1
        %s470 = sand.u32 %s56, 1
        %s471 = scalar_lea.sflag [#allocation5], %s470
        %s472 = sand.u32 %s56, 1
        %s473 = smul.addr %s472, 8
        %s474 = scalar_lea.vmem [#allocation4], %s473
        // Predicated region
        $region69: #{tpu_custom_call.1} parent=67 // pred_check
          %p475 = pneg %p69
        $region70: #{tpu_custom_call.1} parent=67 // pred_check_branch
          %477 = sbr.rel (%p475) target = $region72
        $region71: #{tpu_custom_call.1} parent=67 // pred_region
          %478 = dma.done %s471, 128
        $region72: #{tpu_custom_call.1} parent=67 // pred_fallthru
          _
        %s479 = sand.u32 %s34, 1
        %s480 = scalar_lea.sflag [#allocation8], %s479
        %s481 = sand.u32 %s82, 1
        %s482 = smul.addr %s481, 8
        %s483 = scalar_lea.vmem [#allocation7], %s482
        // Predicated region
        $region73: #{tpu_custom_call.1} parent=67 // pred_check
          %p484 = pneg %p95
        $region74: #{tpu_custom_call.1} parent=67 // pred_check_branch
          %486 = sbr.rel (%p484) target = $region76
        $region75: #{tpu_custom_call.1} parent=67 // pred_region
          %487 = dma.done %s480, 128
        $region76: #{tpu_custom_call.1} parent=67 // pred_fallthru
          _
        // Predicated region
        $region77: #{tpu_custom_call.1} parent=67 // pred_check
          %p488 = pneg %p116
        $region78: #{tpu_custom_call.1} parent=67 // pred_check_branch
          %490 = sbr.rel (%p488) target = $region80
        $region79: #{tpu_custom_call.1} parent=67 // pred_region
          %491 = dma.done [#allocation8], 1024
        $region80: #{tpu_custom_call.1} parent=67 // pred_fallthru
          _
        // Predicated region
        $region81: #{tpu_custom_call.1} parent=67 // pred_check
          %p492 = pneg %p137
        $region82: #{tpu_custom_call.1} parent=67 // pred_check_branch
          %494 = sbr.rel (%p492) target = $region84
        $region83: #{tpu_custom_call.1} parent=67 // pred_region
          %495 = dma.done [#allocation11], 2048
        $region84: #{tpu_custom_call.1} parent=67 // pred_fallthru
          _
        // Predicated region
        $region85: #{tpu_custom_call.1} parent=67 // pred_check
          %p496 = pneg %p200
        $region86: #{tpu_custom_call.1} parent=67 // pred_check_branch
          %498 = sbr.rel (%p496) target = $region88
        $region87: #{tpu_custom_call.1} parent=67 // pred_region
          %499 = dma.done [#allocation11], 4096
        $region88: #{tpu_custom_call.1} parent=67 // pred_fallthru
          _
        // Predicated region
        $region89: #{tpu_custom_call.1} parent=67 // pred_check
          %p500 = pneg %p242
        $region90: #{tpu_custom_call.1} parent=67 // pred_check_branch
          %502 = sbr.rel (%p500) target = $region92
        $region91: #{tpu_custom_call.1} parent=67 // pred_region
          %503 = dma.done [#allocation14], 4096
        $region92: #{tpu_custom_call.1} parent=67 // pred_fallthru
          _
        %s504 = sand.u32 %s56, 1
        %s505 = scalar_lea.sflag [#allocation5], %s504
        %s506 = sand.u32 %s56, 1
        %s507 = smul.addr %s506, 8
        %s508 = scalar_lea.vmem [#allocation4], %s507
        %p509 = pneg %p69
        %p510 = pneg %p66
        %s511 = sand.u32 %s34, 1
        %s512 = scalar_lea.sflag [#allocation8], %s511
        %s513 = sand.u32 %s82, 1
        %s514 = smul.addr %s513, 8
        %s515 = scalar_lea.vmem [#allocation7], %s514
        %p516 = pneg %p95
        %p517 = pneg %p92
        %p518 = pneg %p116
        %p519 = pneg %p113
        %p520 = pneg %p137
        %p521 = pneg %p134
        %p522 = pneg %p158
        %p523 = pneg %p155
        %p524 = pneg %p179
        %p525 = pneg %p176
        %p526 = pneg %p200
        %p527 = pneg %p197
        %p528 = pneg %p221
        %p529 = pneg %p218
        %p530 = pneg %p242
        %p531 = pneg %p239
        %p532 = pneg %p263
        %p533 = pneg %p260
        %p534 = pneg %p284
        %p535 = pneg %p281
        %p536 = pneg %p305
        %p537 = pneg %p302
        %p538 = pneg %p333
        %p539 = pneg %p330
        %s540 = sand.u32 %s320, 1
        %s541 = scalar_lea.sflag [#allocation6], %s540
        %s542 = sand.u32 %s320, 1
        %s543 = smul.addr %s542, 8
        %s544 = scalar_lea.vmem [#allocation15], %s543
        %v546 = vld [vmem:[%s474] sm:$0xff]
        %p547 = scmp.eq.s32.totalorder %s39, 0
        // Predicated region
        $region93: #{tpu_custom_call.1} parent=67 // pred_check
          %p548 = pneg %p547
        $region94: #{tpu_custom_call.1} parent=67 // pred_check_branch
          %550 = sbr.rel (%p548) target = $region96
        $region95: #{tpu_custom_call.1} parent=67 // pred_region
          %v551 = vld [vmem:[%s483] sm:$0xf]
          %v552 = vld [vmem:[%s483 + $0x4] sm:$0xf]
          %v553 = vld [vmem:[#allocation10] sm:$0xff]
          %v554 = vld [vmem:[#allocation10 + $0x8] sm:$0xff]
          %v555 = vld [vmem:[#allocation10 + $0x10] sm:$0xff]
          %v556 = vld [vmem:[#allocation10 + $0x18] sm:$0xff]
          %v557 = vld [vmem:[#allocation10 + $0x20] sm:$0xff]
          %v558 = vld [vmem:[#allocation10 + $0x28] sm:$0xff]
          %v559 = vld [vmem:[#allocation10 + $0x30] sm:$0xff]
          %v560 = vld [vmem:[#allocation10 + $0x38] sm:$0xff]
          %v561 = vld [vmem:[#allocation10 + $0x40] sm:$0xff]
          %v562 = vld [vmem:[#allocation10 + $0x48] sm:$0xff]
          %v563 = vld [vmem:[#allocation10 + $0x50] sm:$0xff]
          %v564 = vld [vmem:[#allocation10 + $0x58] sm:$0xff]
          %v565 = vld [vmem:[#allocation10 + $0x60] sm:$0xff]
          %v566 = vld [vmem:[#allocation10 + $0x68] sm:$0xff]
          %v567 = vld [vmem:[#allocation10 + $0x70] sm:$0xff]
          %v568 = vld [vmem:[#allocation10 + $0x78] sm:$0xff]
          %v571 = vunpack.c.l.b16 %v551
          %v572 = vunpack.c.l.b16 %v552
          %v573 = vpack.c.b16 %v572, %v571
          %v591 = vunpack.c.l.b16 %v553
          %v592 = vunpack.c.h.b16 %v553
          %v593 = vunpack.c.l.b16 %v554
          %v594 = vunpack.c.h.b16 %v554
          %v595 = vunpack.c.l.b16 %v555
          %v596 = vunpack.c.h.b16 %v555
          %v597 = vunpack.c.l.b16 %v556
          %v598 = vunpack.c.h.b16 %v556
          %v599 = vunpack.c.l.b16 %v557
          %v600 = vunpack.c.h.b16 %v557
          %v601 = vunpack.c.l.b16 %v558
          %v602 = vunpack.c.h.b16 %v558
          %v603 = vunpack.c.l.b16 %v559
          %v604 = vunpack.c.h.b16 %v559
          %v605 = vunpack.c.l.b16 %v560
          %v606 = vunpack.c.h.b16 %v560
          %v607 = vunpack.c.l.b16 %v561
          %v608 = vunpack.c.h.b16 %v561
          %v609 = vunpack.c.l.b16 %v562
          %v610 = vunpack.c.h.b16 %v562
          %v611 = vunpack.c.l.b16 %v563
          %v612 = vunpack.c.h.b16 %v563
          %v613 = vunpack.c.l.b16 %v564
          %v614 = vunpack.c.h.b16 %v564
          %v615 = vunpack.c.l.b16 %v565
          %v616 = vunpack.c.h.b16 %v565
          %v617 = vunpack.c.l.b16 %v566
          %v618 = vunpack.c.h.b16 %v566
          %v619 = vunpack.c.l.b16 %v567
          %v620 = vunpack.c.h.b16 %v567
          %v621 = vunpack.c.l.b16 %v568
          %v622 = vunpack.c.h.b16 %v568
          %v623 = vpack.c.b16 %v593, %v591
          %v624 = vpack.c.b16 %v594, %v592
          %v625 = vpack.c.b16 %v597, %v595
          %v626 = vpack.c.b16 %v598, %v596
          %v627 = vpack.c.b16 %v601, %v599
          %v628 = vpack.c.b16 %v602, %v600
          %v629 = vpack.c.b16 %v605, %v603
          %v630 = vpack.c.b16 %v606, %v604
          %v631 = vpack.c.b16 %v609, %v607
          %v632 = vpack.c.b16 %v610, %v608
          %v633 = vpack.c.b16 %v613, %v611
          %v634 = vpack.c.b16 %v614, %v612
          %v635 = vpack.c.b16 %v617, %v615
          %v636 = vpack.c.b16 %v618, %v616
          %v637 = vpack.c.b16 %v621, %v619
          %v638 = vpack.c.b16 %v622, %v620
          %655 = vmatprep.subr.bf16.mxu0 %v638
          %656 = vmatpush1.bf16.msra.mxu0 %v637
          %657 = vmatprep.subr.bf16.mxu0 %v636
          %658 = vmatpush1.bf16.msra.mxu0 %v635
          %659 = vmatprep.subr.bf16.mxu0 %v634
          %660 = vmatpush1.bf16.msra.mxu0 %v633
          %661 = vmatprep.subr.bf16.mxu0 %v632
          %662 = vmatpush1.bf16.msra.mxu0 %v631
          %663 = vmatprep.subr.bf16.mxu0 %v630
          %664 = vmatpush1.bf16.msra.mxu0 %v629
          %665 = vmatprep.subr.bf16.mxu0 %v628
          %666 = vmatpush1.bf16.msra.mxu0 %v627
          %667 = vmatprep.subr.bf16.mxu0 %v626
          %668 = vmatpush1.bf16.msra.mxu0 %v625
          %669 = vmatprep.subr.bf16.mxu0 %v624
          %670 = vmatpush1.bf16.msra.mxu0 %v623
          %671 = vmatprep.subr.bf16.mxu0 0
          %672 = vmatpush2.bf16.msra.mxu0 0
          %673 = vmatprep.subr.bf16.mxu0 0
          %674 = vmatpush2.bf16.msra.mxu0 0
          %675 = vmatprep.subr.bf16.mxu0 0
          %676 = vmatpush2.bf16.msra.mxu0 0
          %677 = vmatprep.subr.bf16.mxu0 0
          %678 = vmatpush2.bf16.msra.mxu0 0
          %679 = vmatprep.subr.bf16.mxu0 0
          %680 = vmatpush2.bf16.msra.mxu0 0
          %681 = vmatprep.subr.bf16.mxu0 0
          %682 = vmatpush2.bf16.msra.mxu0 0
          %683 = vmatprep.subr.bf16.mxu0 0
          %684 = vmatpush2.bf16.msra.mxu0 0
          %685 = vmatprep.subr.bf16.mxu0 0
          %686 = vmatpush2.bf16.msra.mxu0 0
          %687 = vmatprep.mubr.bf16.mxu0 0
          %688 = vmatmul.mubr.bf16.gmra.mxu0 %v573
          %v689 = vpop.f32.mrf.mxu0
          %v690 = vadd.f32 0.0, %v689
          %v691 = vpop.f32.mrf.mxu0
          %v692 = vadd.f32 0.0, %v691
          %v693 = vpop.f32.mrf.mxu0
          %v694 = vadd.f32 0.0, %v693
          %v695 = vpop.f32.mrf.mxu0
          %v696 = vadd.f32 0.0, %v695
          %697 = vdwg.mxu0
          %v698 = vpack.c.bf16 %v694, %v690
          %v700 = vunpack.c.l.b16 %v698
          %v701 = vunpack.c.h.b16 %v698
          %v702 = vpack.c.b16 %v700, %v700
          %v703 = vpack.c.b16 %v701, %v701
          %vm706 = vcmask 257024
          %707 = vst.msk [vmem:[#allocation2] sm:$0xf] %vm706, %v702
          %708 = vst.msk [vmem:[#allocation2 + $0x4] sm:$0xf] %vm706, %v703
          %v709 = vpack.c.bf16 %v696, %v692
          %v711 = vunpack.c.l.b16 %v709
          %v712 = vunpack.c.h.b16 %v709
          %v713 = vpack.c.b16 %v711, %v711
          %v714 = vpack.c.b16 %v712, %v712
          %717 = vst.msk [vmem:[#allocation3] sm:$0xf] %vm706, %v713
          %718 = vst.msk [vmem:[#allocation3 + $0x4] sm:$0xf] %vm706, %v714
          %719 = vrot.lane.b32.xlu0 %v702, 96
          %v720 = vpop.permute.xlu0 %719
          %721 = vrot.lane.b32.xlu0 %v703, 96
          %v722 = vpop.permute.xlu0 %721
          %s725 = scalar_lea.vmem [#allocation2], 8
          %726 = vst.msk [vmem:[%s725] sm:$0xf] %vm706, %v720
          %727 = vst.msk [vmem:[%s725 + $0x4] sm:$0xf] %vm706, %v722
          %728 = vrot.lane.b32.xlu0 %v713, 96
          %v729 = vpop.permute.xlu0 %728
          %730 = vrot.lane.b32.xlu0 %v714, 96
          %v731 = vpop.permute.xlu0 %730
          %s734 = scalar_lea.vmem [#allocation3], 8
          %735 = vst.msk [vmem:[%s734] sm:$0xf] %vm706, %v729
          %736 = vst.msk [vmem:[%s734 + $0x4] sm:$0xf] %vm706, %v731
          %737 = vrot.lane.b32.xlu0 %v702, 64
          %v738 = vpop.permute.xlu0 %737
          %739 = vrot.lane.b32.xlu0 %v703, 64
          %v740 = vpop.permute.xlu0 %739
          %s743 = scalar_lea.vmem [#allocation2], 16
          %744 = vst.msk [vmem:[%s743] sm:$0xf] %vm706, %v738
          %745 = vst.msk [vmem:[%s743 + $0x4] sm:$0xf] %vm706, %v740
          %746 = vrot.lane.b32.xlu0 %v713, 64
          %v747 = vpop.permute.xlu0 %746
          %748 = vrot.lane.b32.xlu0 %v714, 64
          %v749 = vpop.permute.xlu0 %748
          %s752 = scalar_lea.vmem [#allocation3], 16
          %753 = vst.msk [vmem:[%s752] sm:$0xf] %vm706, %v747
          %754 = vst.msk [vmem:[%s752 + $0x4] sm:$0xf] %vm706, %v749
          %755 = vrot.lane.b32.xlu0 %v702, 32
          %v756 = vpop.permute.xlu0 %755
          %757 = vrot.lane.b32.xlu0 %v703, 32
          %v758 = vpop.permute.xlu0 %757
          %s761 = scalar_lea.vmem [#allocation2], 24
          %762 = vst.msk [vmem:[%s761] sm:$0xf] %vm706, %v756
          %763 = vst.msk [vmem:[%s761 + $0x4] sm:$0xf] %vm706, %v758
          %764 = vrot.lane.b32.xlu0 %v713, 32
          %v765 = vpop.permute.xlu0 %764
          %766 = vrot.lane.b32.xlu0 %v714, 32
          %v767 = vpop.permute.xlu0 %766
          %s770 = scalar_lea.vmem [#allocation3], 24
          %771 = vst.msk [vmem:[%s770] sm:$0xf] %vm706, %v765
          %772 = vst.msk [vmem:[%s770 + $0x4] sm:$0xf] %vm706, %v767
        $region96: #{tpu_custom_call.1} parent=67 // pred_fallthru
          _
        %v773 = vpack.c.bf16 %v546, %v546
        %v774 = vld [vmem:[#allocation9] sm:$0xf]
        %v775 = vld [vmem:[#allocation9 + $0x4] sm:$0xf]
        %v776 = vld [vmem:[#allocation9 + $0x8] sm:$0xf]
        %v777 = vld [vmem:[#allocation9 + $0xc] sm:$0xf]
        %v778 = vld [vmem:[#allocation9 + $0x10] sm:$0xf]
        %v779 = vld [vmem:[#allocation9 + $0x14] sm:$0xf]
        %v780 = vld [vmem:[#allocation9 + $0x18] sm:$0xf]
        %v781 = vld [vmem:[#allocation9 + $0x1c] sm:$0xf]
        %v782 = vld [vmem:[#allocation9 + $0x20] sm:$0xf]
        %v783 = vld [vmem:[#allocation9 + $0x24] sm:$0xf]
        %v784 = vld [vmem:[#allocation9 + $0x28] sm:$0xf]
        %v785 = vld [vmem:[#allocation9 + $0x2c] sm:$0xf]
        %v786 = vld [vmem:[#allocation9 + $0x30] sm:$0xf]
        %v787 = vld [vmem:[#allocation9 + $0x34] sm:$0xf]
        %v788 = vld [vmem:[#allocation9 + $0x38] sm:$0xf]
        %v789 = vld [vmem:[#allocation9 + $0x3c] sm:$0xf]
        %v806 = vunpack.c.l.b16 %v774
        %v807 = vunpack.c.l.b16 %v775
        %v808 = vunpack.c.l.b16 %v776
        %v809 = vunpack.c.l.b16 %v777
        %v810 = vunpack.c.l.b16 %v778
        %v811 = vunpack.c.l.b16 %v779
        %v812 = vunpack.c.l.b16 %v780
        %v813 = vunpack.c.l.b16 %v781
        %v814 = vunpack.c.l.b16 %v782
        %v815 = vunpack.c.l.b16 %v783
        %v816 = vunpack.c.l.b16 %v784
        %v817 = vunpack.c.l.b16 %v785
        %v818 = vunpack.c.l.b16 %v786
        %v819 = vunpack.c.l.b16 %v787
        %v820 = vunpack.c.l.b16 %v788
        %v821 = vunpack.c.l.b16 %v789
        %v822 = vpack.c.b16 %v807, %v806
        %v823 = vpack.c.b16 %v809, %v808
        %v824 = vpack.c.b16 %v811, %v810
        %v825 = vpack.c.b16 %v813, %v812
        %v826 = vpack.c.b16 %v815, %v814
        %v827 = vpack.c.b16 %v817, %v816
        %v828 = vpack.c.b16 %v819, %v818
        %v829 = vpack.c.b16 %v821, %v820
        %838 = vmatprep.subr.bf16.mxu0 0
        %839 = vmatpush1.bf16.msra.mxu0 %v829
        %840 = vmatprep.subr.bf16.mxu0 0
        %841 = vmatpush1.bf16.msra.mxu0 %v828
        %842 = vmatprep.subr.bf16.mxu0 0
        %843 = vmatpush1.bf16.msra.mxu0 %v827
        %844 = vmatprep.subr.bf16.mxu0 0
        %845 = vmatpush1.bf16.msra.mxu0 %v826
        %846 = vmatprep.subr.bf16.mxu0 0
        %847 = vmatpush1.bf16.msra.mxu0 %v825
        %848 = vmatprep.subr.bf16.mxu0 0
        %849 = vmatpush1.bf16.msra.mxu0 %v824
        %850 = vmatprep.subr.bf16.mxu0 0
        %851 = vmatpush1.bf16.msra.mxu0 %v823
        %852 = vmatprep.subr.bf16.mxu0 0
        %853 = vmatpush1.bf16.msra.mxu0 %v822
        %854 = vmatprep.subr.bf16.mxu0 0
        %855 = vmatpush2.bf16.msra.mxu0 0
        %856 = vmatprep.subr.bf16.mxu0 0
        %857 = vmatpush2.bf16.msra.mxu0 0
        %858 = vmatprep.subr.bf16.mxu0 0
        %859 = vmatpush2.bf16.msra.mxu0 0
        %860 = vmatprep.subr.bf16.mxu0 0
        %861 = vmatpush2.bf16.msra.mxu0 0
        %862 = vmatprep.subr.bf16.mxu0 0
        %863 = vmatpush2.bf16.msra.mxu0 0
        %864 = vmatprep.subr.bf16.mxu0 0
        %865 = vmatpush2.bf16.msra.mxu0 0
        %866 = vmatprep.subr.bf16.mxu0 0
        %867 = vmatpush2.bf16.msra.mxu0 0
        %868 = vmatprep.subr.bf16.mxu0 0
        %869 = vmatpush2.bf16.msra.mxu0 0
        %870 = vmatprep.mubr.bf16.mxu0 0
        %871 = vmatmul.mubr.bf16.gmra.mxu0 %v773
        %v872 = vpop.f32.mrf.mxu0
        %v873 = vadd.f32 0.0, %v872
        %v874 = vpop.f32.mrf.mxu0
        %v875 = vpop.f32.mrf.mxu0
        %v876 = vpop.f32.mrf.mxu0
        %877 = vdwg.mxu0
        %879 = vrot.lane.b32.xlu0 %v873, 96
        %v880 = vpop.permute.xlu0 %879
        %882 = vrot.lane.b32.xlu0 %v873, 64
        %v883 = vpop.permute.xlu0 %882
        %885 = vrot.lane.b32.xlu0 %v873, 32
        %v886 = vpop.permute.xlu0 %885
        %v888 = vpack.c.bf16 %v873, %v873
        %v889 = vpack.c.bf16 %v880, %v880
        %v890 = vpack.c.bf16 %v883, %v883
        %v891 = vpack.c.bf16 %v886, %v886
        %v892 = vld [vmem:[#allocation2] sm:$0xf]
        %v893 = vld [vmem:[#allocation2 + $0x4] sm:$0xf]
        %v894 = vld [vmem:[#allocation2 + $0x8] sm:$0xf]
        %v895 = vld [vmem:[#allocation2 + $0xc] sm:$0xf]
        %v896 = vld [vmem:[#allocation2 + $0x10] sm:$0xf]
        %v897 = vld [vmem:[#allocation2 + $0x14] sm:$0xf]
        %v898 = vld [vmem:[#allocation2 + $0x18] sm:$0xf]
        %v899 = vld [vmem:[#allocation2 + $0x1c] sm:$0xf]
        %v902 = vunpack.c.l.b16 %v892
        %v903 = vunpack.c.l.b16 %v893
        %v904 = vpack.c.b16 %v903, %v902
        %vm905 = vcmask 261120
        %v907 = vsel %vm905, %v888, 0
        %v910 = vsel %vm905, %v904, 0
        %912 = vmatprep.subr.bf16.mxu0 0
        %913 = vmatpush1.bf16.xpose.msra.mxu0 0
        %914 = vmatprep.subr.bf16.mxu0 0
        %915 = vmatpush1.bf16.xpose.msra.mxu0 0
        %916 = vmatprep.subr.bf16.mxu0 0
        %917 = vmatpush1.bf16.xpose.msra.mxu0 0
        %918 = vmatprep.subr.bf16.mxu0 0
        %919 = vmatpush1.bf16.xpose.msra.mxu0 0
        %920 = vmatprep.subr.bf16.mxu0 0
        %921 = vmatpush1.bf16.xpose.msra.mxu0 0
        %922 = vmatprep.subr.bf16.mxu0 0
        %923 = vmatpush1.bf16.xpose.msra.mxu0 0
        %924 = vmatprep.subr.bf16.mxu0 0
        %925 = vmatpush1.bf16.xpose.msra.mxu0 0
        %926 = vmatprep.subr.bf16.mxu0 0
        %927 = vmatpush1.bf16.xpose.msra.mxu0 %v910
        %928 = vmatprep.subr.bf16.mxu0 0
        %929 = vmatpush2.bf16.xpose.msra.mxu0 0
        %930 = vmatprep.subr.bf16.mxu0 0
        %931 = vmatpush2.bf16.xpose.msra.mxu0 0
        %932 = vmatprep.subr.bf16.mxu0 0
        %933 = vmatpush2.bf16.xpose.msra.mxu0 0
        %934 = vmatprep.subr.bf16.mxu0 0
        %935 = vmatpush2.bf16.xpose.msra.mxu0 0
        %936 = vmatprep.subr.bf16.mxu0 0
        %937 = vmatpush2.bf16.xpose.msra.mxu0 0
        %938 = vmatprep.subr.bf16.mxu0 0
        %939 = vmatpush2.bf16.xpose.msra.mxu0 0
        %940 = vmatprep.subr.bf16.mxu0 0
        %941 = vmatpush2.bf16.xpose.msra.mxu0 0
        %942 = vmatprep.subr.bf16.mxu0 0
        %943 = vmatpush2.bf16.xpose.msra.mxu0 0
        %944 = vmatprep.mubr.bf16.mxu0 0
        %945 = vmatmul.mubr.bf16.gmra.mxu0 %v907
        %v946 = vpop.f32.mrf.mxu0
        %v947 = vadd.f32 0.0, %v946
        %v948 = vpop.f32.mrf.mxu0
        %v949 = vpop.f32.mrf.mxu0
        %v950 = vpop.f32.mrf.mxu0
        %951 = vdwg.mxu0
        %v954 = vunpack.c.l.b16 %v894
        %v955 = vunpack.c.l.b16 %v895
        %v956 = vpack.c.b16 %v955, %v954
        %v958 = vsel %vm905, %v889, 0
        %v961 = vsel %vm905, %v956, 0
        %963 = vmatprep.subr.bf16.mxu0 0
        %964 = vmatpush1.bf16.xpose.msra.mxu0 0
        %965 = vmatprep.subr.bf16.mxu0 0
        %966 = vmatpush1.bf16.xpose.msra.mxu0 0
        %967 = vmatprep.subr.bf16.mxu0 0
        %968 = vmatpush1.bf16.xpose.msra.mxu0 0
        %969 = vmatprep.subr.bf16.mxu0 0
        %970 = vmatpush1.bf16.xpose.msra.mxu0 0
        %971 = vmatprep.subr.bf16.mxu0 0
        %972 = vmatpush1.bf16.xpose.msra.mxu0 0
        %973 = vmatprep.subr.bf16.mxu0 0
        %974 = vmatpush1.bf16.xpose.msra.mxu0 0
        %975 = vmatprep.subr.bf16.mxu0 0
        %976 = vmatpush1.bf16.xpose.msra.mxu0 0
        %977 = vmatprep.subr.bf16.mxu0 0
        %978 = vmatpush1.bf16.xpose.msra.mxu0 %v961
        %979 = vmatprep.subr.bf16.mxu0 0
        %980 = vmatpush2.bf16.xpose.msra.mxu0 0
        %981 = vmatprep.subr.bf16.mxu0 0
        %982 = vmatpush2.bf16.xpose.msra.mxu0 0
        %983 = vmatprep.subr.bf16.mxu0 0
        %984 = vmatpush2.bf16.xpose.msra.mxu0 0
        %985 = vmatprep.subr.bf16.mxu0 0
        %986 = vmatpush2.bf16.xpose.msra.mxu0 0
        %987 = vmatprep.subr.bf16.mxu0 0
        %988 = vmatpush2.bf16.xpose.msra.mxu0 0
        %989 = vmatprep.subr.bf16.mxu0 0
        %990 = vmatpush2.bf16.xpose.msra.mxu0 0
        %991 = vmatprep.subr.bf16.mxu0 0
        %992 = vmatpush2.bf16.xpose.msra.mxu0 0
        %993 = vmatprep.subr.bf16.mxu0 0
        %994 = vmatpush2.bf16.xpose.msra.mxu0 0
        %995 = vmatprep.mubr.bf16.mxu0 0
        %996 = vmatmul.mubr.bf16.gmra.mxu0 %v958
        %v997 = vpop.f32.mrf.mxu0
        %v998 = vadd.f32 0.0, %v997
        %v999 = vpop.f32.mrf.mxu0
        %v1000 = vpop.f32.mrf.mxu0
        %v1001 = vpop.f32.mrf.mxu0
        %1002 = vdwg.mxu0
        %v1005 = vunpack.c.l.b16 %v896
        %v1006 = vunpack.c.l.b16 %v897
        %v1007 = vpack.c.b16 %v1006, %v1005
        %v1009 = vsel %vm905, %v890, 0
        %v1012 = vsel %vm905, %v1007, 0
        %1014 = vmatprep.subr.bf16.mxu0 0
        %1015 = vmatpush1.bf16.xpose.msra.mxu0 0
        %1016 = vmatprep.subr.bf16.mxu0 0
        %1017 = vmatpush1.bf16.xpose.msra.mxu0 0
        %1018 = vmatprep.subr.bf16.mxu0 0
        %1019 = vmatpush1.bf16.xpose.msra.mxu0 0
        %1020 = vmatprep.subr.bf16.mxu0 0
        %1021 = vmatpush1.bf16.xpose.msra.mxu0 0
        %1022 = vmatprep.subr.bf16.mxu0 0
        %1023 = vmatpush1.bf16.xpose.msra.mxu0 0
        %1024 = vmatprep.subr.bf16.mxu0 0
        %1025 = vmatpush1.bf16.xpose.msra.mxu0 0
        %1026 = vmatprep.subr.bf16.mxu0 0
        %1027 = vmatpush1.bf16.xpose.msra.mxu0 0
        %1028 = vmatprep.subr.bf16.mxu0 0
        %1029 = vmatpush1.bf16.xpose.msra.mxu0 %v1012
        %1030 = vmatprep.subr.bf16.mxu0 0
        %1031 = vmatpush2.bf16.xpose.msra.mxu0 0
        %1032 = vmatprep.subr.bf16.mxu0 0
        %1033 = vmatpush2.bf16.xpose.msra.mxu0 0
        %1034 = vmatprep.subr.bf16.mxu0 0
        %1035 = vmatpush2.bf16.xpose.msra.mxu0 0
        %1036 = vmatprep.subr.bf16.mxu0 0
        %1037 = vmatpush2.bf16.xpose.msra.mxu0 0
        %1038 = vmatprep.subr.bf16.mxu0 0
        %1039 = vmatpush2.bf16.xpose.msra.mxu0 0
        %1040 = vmatprep.subr.bf16.mxu0 0
        %1041 = vmatpush2.bf16.xpose.msra.mxu0 0
        %1042 = vmatprep.subr.bf16.mxu0 0
        %1043 = vmatpush2.bf16.xpose.msra.mxu0 0
        %1044 = vmatprep.subr.bf16.mxu0 0
        %1045 = vmatpush2.bf16.xpose.msra.mxu0 0
        %1046 = vmatprep.mubr.bf16.mxu0 0
        %1047 = vmatmul.mubr.bf16.gmra.mxu0 %v1009
        %v1048 = vpop.f32.mrf.mxu0
        %v1049 = vadd.f32 0.0, %v1048
        %v1050 = vpop.f32.mrf.mxu0
        %v1051 = vpop.f32.mrf.mxu0
        %v1052 = vpop.f32.mrf.mxu0
        %1053 = vdwg.mxu0
        %v1056 = vunpack.c.l.b16 %v898
        %v1057 = vunpack.c.l.b16 %v899
        %v1058 = vpack.c.b16 %v1057, %v1056
        %v1060 = vsel %vm905, %v891, 0
        %v1063 = vsel %vm905, %v1058, 0
        %1065 = vmatprep.subr.bf16.mxu0 0
        %1066 = vmatpush1.bf16.xpose.msra.mxu0 0
        %1067 = vmatprep.subr.bf16.mxu0 0
        %1068 = vmatpush1.bf16.xpose.msra.mxu0 0
        %1069 = vmatprep.subr.bf16.mxu0 0
        %1070 = vmatpush1.bf16.xpose.msra.mxu0 0
        %1071 = vmatprep.subr.bf16.mxu0 0
        %1072 = vmatpush1.bf16.xpose.msra.mxu0 0
        %1073 = vmatprep.subr.bf16.mxu0 0
        %1074 = vmatpush1.bf16.xpose.msra.mxu0 0
        %1075 = vmatprep.subr.bf16.mxu0 0
        %1076 = vmatpush1.bf16.xpose.msra.mxu0 0
        %1077 = vmatprep.subr.bf16.mxu0 0
        %1078 = vmatpush1.bf16.xpose.msra.mxu0 0
        %1079 = vmatprep.subr.bf16.mxu0 0
        %1080 = vmatpush1.bf16.xpose.msra.mxu0 %v1063
        %1081 = vmatprep.subr.bf16.mxu0 0
        %1082 = vmatpush2.bf16.xpose.msra.mxu0 0
        %1083 = vmatprep.subr.bf16.mxu0 0
        %1084 = vmatpush2.bf16.xpose.msra.mxu0 0
        %1085 = vmatprep.subr.bf16.mxu0 0
        %1086 = vmatpush2.bf16.xpose.msra.mxu0 0
        %1087 = vmatprep.subr.bf16.mxu0 0
        %1088 = vmatpush2.bf16.xpose.msra.mxu0 0
        %1089 = vmatprep.subr.bf16.mxu0 0
        %1090 = vmatpush2.bf16.xpose.msra.mxu0 0
        %1091 = vmatprep.subr.bf16.mxu0 0
        %1092 = vmatpush2.bf16.xpose.msra.mxu0 0
        %1093 = vmatprep.subr.bf16.mxu0 0
        %1094 = vmatpush2.bf16.xpose.msra.mxu0 0
        %1095 = vmatprep.subr.bf16.mxu0 0
        %1096 = vmatpush2.bf16.xpose.msra.mxu0 0
        %1097 = vmatprep.mubr.bf16.mxu0 0
        %1098 = vmatmul.mubr.bf16.gmra.mxu0 %v1060
        %v1099 = vpop.f32.mrf.mxu0
        %v1100 = vadd.f32 0.0, %v1099
        %v1101 = vpop.f32.mrf.mxu0
        %v1102 = vpop.f32.mrf.mxu0
        %v1103 = vpop.f32.mrf.mxu0
        %1104 = vdwg.mxu0
        %vm1105 = vcmask 130048
        %v1106 = vsel %vm1105, %v947, -inf
        %1107 = vmax.xlane.f32.xlu0 %v1106
        %v1108 = vpop.xlane.xlu0 %1107
        %v1109 = vsel %vm1105, %v998, -inf
        %1110 = vmax.xlane.f32.xlu0 %v1109
        %v1111 = vpop.xlane.xlu0 %1110
        %v1112 = vsel %vm1105, %v1049, -inf
        %1113 = vmax.xlane.f32.xlu0 %v1112
        %v1114 = vpop.xlane.xlu0 %1113
        %v1115 = vsel %vm1105, %v1100, -inf
        %1116 = vmax.xlane.f32.xlu0 %v1115
        %v1117 = vpop.xlane.xlu0 %1116
        %v1118 = vsub.f32 %v947, %v1108
        %v1119 = vsub.f32 %v998, %v1111
        %v1120 = vsub.f32 %v1049, %v1114
        %v1121 = vsub.f32 %v1100, %v1117
        %v1122 = vmul.f32 %v1118, 1.442695
        %v1123 = vpow.pop %v1122
        %v1124 = vmul.f32 %v1119, 1.442695
        %v1125 = vpow.pop %v1124
        %v1126 = vmul.f32 %v1120, 1.442695
        %v1127 = vpow.pop %v1126
        %v1128 = vmul.f32 %v1121, 1.442695
        %v1129 = vpow.pop %v1128
        %v1130 = vsel %vm1105, %v1123, 0.0
        %1131 = vadd.xlane.f32.xlu0 %v1130
        %v1132 = vpop.xlane.xlu0 %1131
        %v1133 = vsel %vm1105, %v1125, 0.0
        %1134 = vadd.xlane.f32.xlu0 %v1133
        %v1135 = vpop.xlane.xlu0 %1134
        %v1136 = vsel %vm1105, %v1127, 0.0
        %1137 = vadd.xlane.f32.xlu0 %v1136
        %v1138 = vpop.xlane.xlu0 %1137
        %v1139 = vsel %vm1105, %v1129, 0.0
        %1140 = vadd.xlane.f32.xlu0 %v1139
        %v1141 = vpop.xlane.xlu0 %1140
        %v1142 = vrcp.pop %v1132
        %v1143 = vmul.f32 %v1123, %v1142
        %v1144 = vrcp.pop %v1135
        %v1145 = vmul.f32 %v1125, %v1144
        %v1146 = vrcp.pop %v1138
        %v1147 = vmul.f32 %v1127, %v1146
        %v1148 = vrcp.pop %v1141
        %v1149 = vmul.f32 %v1129, %v1148
        %v1150 = vpack.c.bf16 %v1143, %v1143
        %v1151 = vpack.c.bf16 %v1145, %v1145
        %v1152 = vpack.c.bf16 %v1147, %v1147
        %v1153 = vpack.c.bf16 %v1149, %v1149
        %v1154 = vld [vmem:[#allocation3] sm:$0xf]
        %v1155 = vld [vmem:[#allocation3 + $0x4] sm:$0xf]
        %v1156 = vld [vmem:[#allocation3 + $0x8] sm:$0xf]
        %v1157 = vld [vmem:[#allocation3 + $0xc] sm:$0xf]
        %v1158 = vld [vmem:[#allocation3 + $0x10] sm:$0xf]
        %v1159 = vld [vmem:[#allocation3 + $0x14] sm:$0xf]
        %v1160 = vld [vmem:[#allocation3 + $0x18] sm:$0xf]
        %v1161 = vld [vmem:[#allocation3 + $0x1c] sm:$0xf]
        %v1164 = vunpack.c.l.b16 %v1154
        %v1165 = vunpack.c.l.b16 %v1155
        %v1166 = vpack.c.b16 %v1165, %v1164
        %v1169 = vsel %vm1105, %v1150, 0
        %1171 = vmatprep.subr.bf16.mxu0 0
        %1172 = vmatpush1.bf16.msra.mxu0 0
        %1173 = vmatprep.subr.bf16.mxu0 0
        %1174 = vmatpush1.bf16.msra.mxu0 0
        %1175 = vmatprep.subr.bf16.mxu0 0
        %1176 = vmatpush1.bf16.msra.mxu0 0
        %1177 = vmatprep.subr.bf16.mxu0 0
        %1178 = vmatpush1.bf16.msra.mxu0 0
        %1179 = vmatprep.subr.bf16.mxu0 0
        %1180 = vmatpush1.bf16.msra.mxu0 0
        %1181 = vmatprep.subr.bf16.mxu0 0
        %1182 = vmatpush1.bf16.msra.mxu0 0
        %1183 = vmatprep.subr.bf16.mxu0 0
        %1184 = vmatpush1.bf16.msra.mxu0 0
        %1185 = vmatprep.subr.bf16.mxu0 0
        %1186 = vmatpush1.bf16.msra.mxu0 %v1166
        %1187 = vmatprep.subr.bf16.mxu0 0
        %1188 = vmatpush2.bf16.msra.mxu0 0
        %1189 = vmatprep.subr.bf16.mxu0 0
        %1190 = vmatpush2.bf16.msra.mxu0 0
        %1191 = vmatprep.subr.bf16.mxu0 0
        %1192 = vmatpush2.bf16.msra.mxu0 0
        %1193 = vmatprep.subr.bf16.mxu0 0
        %1194 = vmatpush2.bf16.msra.mxu0 0
        %1195 = vmatprep.subr.bf16.mxu0 0
        %1196 = vmatpush2.bf16.msra.mxu0 0
        %1197 = vmatprep.subr.bf16.mxu0 0
        %1198 = vmatpush2.bf16.msra.mxu0 0
        %1199 = vmatprep.subr.bf16.mxu0 0
        %1200 = vmatpush2.bf16.msra.mxu0 0
        %1201 = vmatprep.subr.bf16.mxu0 0
        %1202 = vmatpush2.bf16.msra.mxu0 0
        %1203 = vmatprep.mubr.bf16.mxu0 0
        %1204 = vmatmul.mubr.bf16.gmra.mxu0 %v1169
        %v1205 = vpop.f32.mrf.mxu0
        %v1206 = vadd.f32 0.0, %v1205
        %v1207 = vpop.f32.mrf.mxu0
        %v1208 = vpop.f32.mrf.mxu0
        %v1209 = vpop.f32.mrf.mxu0
        %1210 = vdwg.mxu0
        %v1213 = vunpack.c.l.b16 %v1156
        %v1214 = vunpack.c.l.b16 %v1157
        %v1215 = vpack.c.b16 %v1214, %v1213
        %v1218 = vsel %vm1105, %v1151, 0
        %1220 = vmatprep.subr.bf16.mxu0 0
        %1221 = vmatpush1.bf16.msra.mxu0 0
        %1222 = vmatprep.subr.bf16.mxu0 0
        %1223 = vmatpush1.bf16.msra.mxu0 0
        %1224 = vmatprep.subr.bf16.mxu0 0
        %1225 = vmatpush1.bf16.msra.mxu0 0
        %1226 = vmatprep.subr.bf16.mxu0 0
        %1227 = vmatpush1.bf16.msra.mxu0 0
        %1228 = vmatprep.subr.bf16.mxu0 0
        %1229 = vmatpush1.bf16.msra.mxu0 0
        %1230 = vmatprep.subr.bf16.mxu0 0
        %1231 = vmatpush1.bf16.msra.mxu0 0
        %1232 = vmatprep.subr.bf16.mxu0 0
        %1233 = vmatpush1.bf16.msra.mxu0 0
        %1234 = vmatprep.subr.bf16.mxu0 0
        %1235 = vmatpush1.bf16.msra.mxu0 %v1215
        %1236 = vmatprep.subr.bf16.mxu0 0
        %1237 = vmatpush2.bf16.msra.mxu0 0
        %1238 = vmatprep.subr.bf16.mxu0 0
        %1239 = vmatpush2.bf16.msra.mxu0 0
        %1240 = vmatprep.subr.bf16.mxu0 0
        %1241 = vmatpush2.bf16.msra.mxu0 0
        %1242 = vmatprep.subr.bf16.mxu0 0
        %1243 = vmatpush2.bf16.msra.mxu0 0
        %1244 = vmatprep.subr.bf16.mxu0 0
        %1245 = vmatpush2.bf16.msra.mxu0 0
        %1246 = vmatprep.subr.bf16.mxu0 0
        %1247 = vmatpush2.bf16.msra.mxu0 0
        %1248 = vmatprep.subr.bf16.mxu0 0
        %1249 = vmatpush2.bf16.msra.mxu0 0
        %1250 = vmatprep.subr.bf16.mxu0 0
        %1251 = vmatpush2.bf16.msra.mxu0 0
        %1252 = vmatprep.mubr.bf16.mxu0 0
        %1253 = vmatmul.mubr.bf16.gmra.mxu0 %v1218
        %v1254 = vpop.f32.mrf.mxu0
        %v1255 = vadd.f32 0.0, %v1254
        %v1256 = vpop.f32.mrf.mxu0
        %v1257 = vpop.f32.mrf.mxu0
        %v1258 = vpop.f32.mrf.mxu0
        %1259 = vdwg.mxu0
        %v1262 = vunpack.c.l.b16 %v1158
        %v1263 = vunpack.c.l.b16 %v1159
        %v1264 = vpack.c.b16 %v1263, %v1262
        %v1267 = vsel %vm1105, %v1152, 0
        %1269 = vmatprep.subr.bf16.mxu0 0
        %1270 = vmatpush1.bf16.msra.mxu0 0
        %1271 = vmatprep.subr.bf16.mxu0 0
        %1272 = vmatpush1.bf16.msra.mxu0 0
        %1273 = vmatprep.subr.bf16.mxu0 0
        %1274 = vmatpush1.bf16.msra.mxu0 0
        %1275 = vmatprep.subr.bf16.mxu0 0
        %1276 = vmatpush1.bf16.msra.mxu0 0
        %1277 = vmatprep.subr.bf16.mxu0 0
        %1278 = vmatpush1.bf16.msra.mxu0 0
        %1279 = vmatprep.subr.bf16.mxu0 0
        %1280 = vmatpush1.bf16.msra.mxu0 0
        %1281 = vmatprep.subr.bf16.mxu0 0
        %1282 = vmatpush1.bf16.msra.mxu0 0
        %1283 = vmatprep.subr.bf16.mxu0 0
        %1284 = vmatpush1.bf16.msra.mxu0 %v1264
        %1285 = vmatprep.subr.bf16.mxu0 0
        %1286 = vmatpush2.bf16.msra.mxu0 0
        %1287 = vmatprep.subr.bf16.mxu0 0
        %1288 = vmatpush2.bf16.msra.mxu0 0
        %1289 = vmatprep.subr.bf16.mxu0 0
        %1290 = vmatpush2.bf16.msra.mxu0 0
        %1291 = vmatprep.subr.bf16.mxu0 0
        %1292 = vmatpush2.bf16.msra.mxu0 0
        %1293 = vmatprep.subr.bf16.mxu0 0
        %1294 = vmatpush2.bf16.msra.mxu0 0
        %1295 = vmatprep.subr.bf16.mxu0 0
        %1296 = vmatpush2.bf16.msra.mxu0 0
        %1297 = vmatprep.subr.bf16.mxu0 0
        %1298 = vmatpush2.bf16.msra.mxu0 0
        %1299 = vmatprep.subr.bf16.mxu0 0
        %1300 = vmatpush2.bf16.msra.mxu0 0
        %1301 = vmatprep.mubr.bf16.mxu0 0
        %1302 = vmatmul.mubr.bf16.gmra.mxu0 %v1267
        %v1303 = vpop.f32.mrf.mxu0
        %v1304 = vadd.f32 0.0, %v1303
        %v1305 = vpop.f32.mrf.mxu0
        %v1306 = vpop.f32.mrf.mxu0
        %v1307 = vpop.f32.mrf.mxu0
        %1308 = vdwg.mxu0
        %v1311 = vunpack.c.l.b16 %v1160
        %v1312 = vunpack.c.l.b16 %v1161
        %v1313 = vpack.c.b16 %v1312, %v1311
        %v1316 = vsel %vm1105, %v1153, 0
        %1318 = vmatprep.subr.bf16.mxu0 0
        %1319 = vmatpush1.bf16.msra.mxu0 0
        %1320 = vmatprep.subr.bf16.mxu0 0
        %1321 = vmatpush1.bf16.msra.mxu0 0
        %1322 = vmatprep.subr.bf16.mxu0 0
        %1323 = vmatpush1.bf16.msra.mxu0 0
        %1324 = vmatprep.subr.bf16.mxu0 0
        %1325 = vmatpush1.bf16.msra.mxu0 0
        %1326 = vmatprep.subr.bf16.mxu0 0
        %1327 = vmatpush1.bf16.msra.mxu0 0
        %1328 = vmatprep.subr.bf16.mxu0 0
        %1329 = vmatpush1.bf16.msra.mxu0 0
        %1330 = vmatprep.subr.bf16.mxu0 0
        %1331 = vmatpush1.bf16.msra.mxu0 0
        %1332 = vmatprep.subr.bf16.mxu0 0
        %1333 = vmatpush1.bf16.msra.mxu0 %v1313
        %1334 = vmatprep.subr.bf16.mxu0 0
        %1335 = vmatpush2.bf16.msra.mxu0 0
        %1336 = vmatprep.subr.bf16.mxu0 0
        %1337 = vmatpush2.bf16.msra.mxu0 0
        %1338 = vmatprep.subr.bf16.mxu0 0
        %1339 = vmatpush2.bf16.msra.mxu0 0
        %1340 = vmatprep.subr.bf16.mxu0 0
        %1341 = vmatpush2.bf16.msra.mxu0 0
        %1342 = vmatprep.subr.bf16.mxu0 0
        %1343 = vmatpush2.bf16.msra.mxu0 0
        %1344 = vmatprep.subr.bf16.mxu0 0
        %1345 = vmatpush2.bf16.msra.mxu0 0
        %1346 = vmatprep.subr.bf16.mxu0 0
        %1347 = vmatpush2.bf16.msra.mxu0 0
        %1348 = vmatprep.subr.bf16.mxu0 0
        %1349 = vmatpush2.bf16.msra.mxu0 0
        %1350 = vmatprep.mubr.bf16.mxu0 0
        %1351 = vmatmul.mubr.bf16.gmra.mxu0 %v1316
        %v1352 = vpop.f32.mrf.mxu0
        %v1353 = vadd.f32 0.0, %v1352
        %v1354 = vpop.f32.mrf.mxu0
        %v1355 = vpop.f32.mrf.mxu0
        %v1356 = vpop.f32.mrf.mxu0
        %1357 = vdwg.mxu0
        %1359 = vrot.lane.b32.xlu0 %v1255, 32
        %v1360 = vpop.permute.xlu0 %1359
        %1363 = vrot.lane.b32.xlu0 %v1304, 64
        %v1364 = vpop.permute.xlu0 %1363
        %1367 = vrot.lane.b32.xlu0 %v1353, 96
        %v1368 = vpop.permute.xlu0 %1367
        %v1370 = vsel %vm905, %v1206, %v1360
        %vm1371 = vcmask 523264
        %v1372 = vsel %vm1371, %v1370, %v1364
        %vm1373 = vcmask 785408
        %v1374 = vsel %vm1373, %v1372, %v1368
        %v1375 = vadd.f32 %v546, %v1374
        %1376 = vadd.xlane.f32.xlu0 %v1375
        %v1377 = vpop.xlane.xlu0 %1376
        %v1378 = vrcp.pop 128.0
        %v1379 = vmul.f32 %v1377, %v1378
        %v1380 = vsub.f32 %v1375, %v1379
        %v1381 = vmul.f32 %v1380, %v1380
        %1382 = vadd.xlane.f32.xlu0 %v1381
        %v1383 = vpop.xlane.xlu0 %1382
        %v1384 = vmul.f32 %v1383, %v1378
        %v1385 = vadd.f32 %v1384, 1e-05
        %v1386 = vrsqrt.pop %v1385
        %v1387 = vmul.f32 %v1380, %v1386
        %v1388 = vld [vmem:[%s4] sm:$0x1]
        %v1390 = vlaneseq
        %v1391 = vshrl.u32 %v1390, 7
        %v1392 = vsub.s32 0, %v1391
        %v1393 = vrot.slane %v1388, %v1392
        %v1395 = vmul.f32 %v1387, %v1393
        %v1396 = vld [vmem:[%s5] sm:$0x1]
        %v1398 = vlaneseq
        %v1399 = vshrl.u32 %v1398, 7
        %v1400 = vsub.s32 0, %v1399
        %v1401 = vrot.slane %v1396, %v1400
        %v1403 = vadd.f32 %v1395, %v1401
        %v1404 = vpack.c.bf16 %v1403, %v1403
        %v1405 = vld [vmem:[#allocation12] sm:$0xff]
        %v1406 = vld [vmem:[#allocation12 + $0x8] sm:$0xff]
        %v1407 = vld [vmem:[#allocation12 + $0x10] sm:$0xff]
        %v1408 = vld [vmem:[#allocation12 + $0x18] sm:$0xff]
        %v1409 = vld [vmem:[#allocation12 + $0x20] sm:$0xff]
        %v1410 = vld [vmem:[#allocation12 + $0x28] sm:$0xff]
        %v1411 = vld [vmem:[#allocation12 + $0x30] sm:$0xff]
        %v1412 = vld [vmem:[#allocation12 + $0x38] sm:$0xff]
        %v1413 = vld [vmem:[#allocation12 + $0x40] sm:$0xff]
        %v1414 = vld [vmem:[#allocation12 + $0x48] sm:$0xff]
        %v1415 = vld [vmem:[#allocation12 + $0x50] sm:$0xff]
        %v1416 = vld [vmem:[#allocation12 + $0x58] sm:$0xff]
        %v1417 = vld [vmem:[#allocation12 + $0x60] sm:$0xff]
        %v1418 = vld [vmem:[#allocation12 + $0x68] sm:$0xff]
        %v1419 = vld [vmem:[#allocation12 + $0x70] sm:$0xff]
        %v1420 = vld [vmem:[#allocation12 + $0x78] sm:$0xff]
        %v1421 = vld [vmem:[#allocation12 + $0x80] sm:$0xff]
        %v1422 = vld [vmem:[#allocation12 + $0x88] sm:$0xff]
        %v1423 = vld [vmem:[#allocation12 + $0x90] sm:$0xff]
        %v1424 = vld [vmem:[#allocation12 + $0x98] sm:$0xff]
        %v1425 = vld [vmem:[#allocation12 + $0xa0] sm:$0xff]
        %v1426 = vld [vmem:[#allocation12 + $0xa8] sm:$0xff]
        %v1427 = vld [vmem:[#allocation12 + $0xb0] sm:$0xff]
        %v1428 = vld [vmem:[#allocation12 + $0xb8] sm:$0xff]
        %v1429 = vld [vmem:[#allocation12 + $0xc0] sm:$0xff]
        %v1430 = vld [vmem:[#allocation12 + $0xc8] sm:$0xff]
        %v1431 = vld [vmem:[#allocation12 + $0xd0] sm:$0xff]
        %v1432 = vld [vmem:[#allocation12 + $0xd8] sm:$0xff]
        %v1433 = vld [vmem:[#allocation12 + $0xe0] sm:$0xff]
        %v1434 = vld [vmem:[#allocation12 + $0xe8] sm:$0xff]
        %v1435 = vld [vmem:[#allocation12 + $0xf0] sm:$0xff]
        %v1436 = vld [vmem:[#allocation12 + $0xf8] sm:$0xff]
        %v1437 = vld [vmem:[%s7] sm:$0xf]
        %v1439 = vlaneseq
        %v1440 = vshrl.u32 %v1439, 7
        %v1441 = vsub.s32 0, %v1440
        %v1442 = vrot.slane %v1437, %v1441
        %v1443 = vlaneseq
        %v1444 = vshrl.u32 %v1443, 7
        %v1445 = vsub.s32 1, %v1444
        %v1446 = vrot.slane %v1437, %v1445
        %v1447 = vlaneseq
        %v1448 = vshrl.u32 %v1447, 7
        %v1449 = vsub.s32 2, %v1448
        %v1450 = vrot.slane %v1437, %v1449
        %v1451 = vlaneseq
        %v1452 = vshrl.u32 %v1451, 7
        %v1453 = vsub.s32 3, %v1452
        %v1454 = vrot.slane %v1437, %v1453
        %v1491 = vunpack.c.l.b16 %v1405
        %v1492 = vunpack.c.h.b16 %v1405
        %v1493 = vunpack.c.l.b16 %v1406
        %v1494 = vunpack.c.h.b16 %v1406
        %v1495 = vunpack.c.l.b16 %v1407
        %v1496 = vunpack.c.h.b16 %v1407
        %v1497 = vunpack.c.l.b16 %v1408
        %v1498 = vunpack.c.h.b16 %v1408
        %v1499 = vunpack.c.l.b16 %v1409
        %v1500 = vunpack.c.h.b16 %v1409
        %v1501 = vunpack.c.l.b16 %v1410
        %v1502 = vunpack.c.h.b16 %v1410
        %v1503 = vunpack.c.l.b16 %v1411
        %v1504 = vunpack.c.h.b16 %v1411
        %v1505 = vunpack.c.l.b16 %v1412
        %v1506 = vunpack.c.h.b16 %v1412
        %v1507 = vunpack.c.l.b16 %v1413
        %v1508 = vunpack.c.h.b16 %v1413
        %v1509 = vunpack.c.l.b16 %v1414
        %v1510 = vunpack.c.h.b16 %v1414
        %v1511 = vunpack.c.l.b16 %v1415
        %v1512 = vunpack.c.h.b16 %v1415
        %v1513 = vunpack.c.l.b16 %v1416
        %v1514 = vunpack.c.h.b16 %v1416
        %v1515 = vunpack.c.l.b16 %v1417
        %v1516 = vunpack.c.h.b16 %v1417
        %v1517 = vunpack.c.l.b16 %v1418
        %v1518 = vunpack.c.h.b16 %v1418
        %v1519 = vunpack.c.l.b16 %v1419
        %v1520 = vunpack.c.h.b16 %v1419
        %v1521 = vunpack.c.l.b16 %v1420
        %v1522 = vunpack.c.h.b16 %v1420
        %v1523 = vunpack.c.l.b16 %v1421
        %v1524 = vunpack.c.h.b16 %v1421
        %v1525 = vunpack.c.l.b16 %v1422
        %v1526 = vunpack.c.h.b16 %v1422
        %v1527 = vunpack.c.l.b16 %v1423
        %v1528 = vunpack.c.h.b16 %v1423
        %v1529 = vunpack.c.l.b16 %v1424
        %v1530 = vunpack.c.h.b16 %v1424
        %v1531 = vunpack.c.l.b16 %v1425
        %v1532 = vunpack.c.h.b16 %v1425
        %v1533 = vunpack.c.l.b16 %v1426
        %v1534 = vunpack.c.h.b16 %v1426
        %v1535 = vunpack.c.l.b16 %v1427
        %v1536 = vunpack.c.h.b16 %v1427
        %v1537 = vunpack.c.l.b16 %v1428
        %v1538 = vunpack.c.h.b16 %v1428
        %v1539 = vunpack.c.l.b16 %v1429
        %v1540 = vunpack.c.h.b16 %v1429
        %v1541 = vunpack.c.l.b16 %v1430
        %v1542 = vunpack.c.h.b16 %v1430
        %v1543 = vunpack.c.l.b16 %v1431
        %v1544 = vunpack.c.h.b16 %v1431
        %v1545 = vunpack.c.l.b16 %v1432
        %v1546 = vunpack.c.h.b16 %v1432
        %v1547 = vunpack.c.l.b16 %v1433
        %v1548 = vunpack.c.h.b16 %v1433
        %v1549 = vunpack.c.l.b16 %v1434
        %v1550 = vunpack.c.h.b16 %v1434
        %v1551 = vunpack.c.l.b16 %v1435
        %v1552 = vunpack.c.h.b16 %v1435
        %v1553 = vunpack.c.l.b16 %v1436
        %v1554 = vunpack.c.h.b16 %v1436
        %v1555 = vpack.c.b16 %v1495, %v1491
        %v1556 = vpack.c.b16 %v1496, %v1492
        %v1557 = vpack.c.b16 %v1497, %v1493
        %v1558 = vpack.c.b16 %v1498, %v1494
        %v1559 = vpack.c.b16 %v1503, %v1499
        %v1560 = vpack.c.b16 %v1504, %v1500
        %v1561 = vpack.c.b16 %v1505, %v1501
        %v1562 = vpack.c.b16 %v1506, %v1502
        %v1563 = vpack.c.b16 %v1511, %v1507
        %v1564 = vpack.c.b16 %v1512, %v1508
        %v1565 = vpack.c.b16 %v1513, %v1509
        %v1566 = vpack.c.b16 %v1514, %v1510
        %v1567 = vpack.c.b16 %v1519, %v1515
        %v1568 = vpack.c.b16 %v1520, %v1516
        %v1569 = vpack.c.b16 %v1521, %v1517
        %v1570 = vpack.c.b16 %v1522, %v1518
        %v1571 = vpack.c.b16 %v1527, %v1523
        %v1572 = vpack.c.b16 %v1528, %v1524
        %v1573 = vpack.c.b16 %v1529, %v1525
        %v1574 = vpack.c.b16 %v1530, %v1526
        %v1575 = vpack.c.b16 %v1535, %v1531
        %v1576 = vpack.c.b16 %v1536, %v1532
        %v1577 = vpack.c.b16 %v1537, %v1533
        %v1578 = vpack.c.b16 %v1538, %v1534
        %v1579 = vpack.c.b16 %v1543, %v1539
        %v1580 = vpack.c.b16 %v1544, %v1540
        %v1581 = vpack.c.b16 %v1545, %v1541
        %v1582 = vpack.c.b16 %v1546, %v1542
        %v1583 = vpack.c.b16 %v1551, %v1547
        %v1584 = vpack.c.b16 %v1552, %v1548
        %v1585 = vpack.c.b16 %v1553, %v1549
        %v1586 = vpack.c.b16 %v1554, %v1550
        %1619 = vmatprep.subr.bf16.mxu0 %v1584
        %1620 = vmatpush1.bf16.msra.mxu0 %v1583
        %1621 = vmatprep.subr.bf16.mxu0 %v1580
        %1622 = vmatpush1.bf16.msra.mxu0 %v1579
        %1623 = vmatprep.subr.bf16.mxu0 %v1576
        %1624 = vmatpush1.bf16.msra.mxu0 %v1575
        %1625 = vmatprep.subr.bf16.mxu0 %v1572
        %1626 = vmatpush1.bf16.msra.mxu0 %v1571
        %1627 = vmatprep.subr.bf16.mxu0 %v1568
        %1628 = vmatpush1.bf16.msra.mxu0 %v1567
        %1629 = vmatprep.subr.bf16.mxu0 %v1564
        %1630 = vmatpush1.bf16.msra.mxu0 %v1563
        %1631 = vmatprep.subr.bf16.mxu0 %v1560
        %1632 = vmatpush1.bf16.msra.mxu0 %v1559
        %1633 = vmatprep.subr.bf16.mxu0 %v1556
        %1634 = vmatpush1.bf16.msra.mxu0 %v1555
        %1635 = vmatprep.subr.bf16.mxu0 0
        %1636 = vmatpush2.bf16.msra.mxu0 0
        %1637 = vmatprep.subr.bf16.mxu0 0
        %1638 = vmatpush2.bf16.msra.mxu0 0
        %1639 = vmatprep.subr.bf16.mxu0 0
        %1640 = vmatpush2.bf16.msra.mxu0 0
        %1641 = vmatprep.subr.bf16.mxu0 0
        %1642 = vmatpush2.bf16.msra.mxu0 0
        %1643 = vmatprep.subr.bf16.mxu0 0
        %1644 = vmatpush2.bf16.msra.mxu0 0
        %1645 = vmatprep.subr.bf16.mxu0 0
        %1646 = vmatpush2.bf16.msra.mxu0 0
        %1647 = vmatprep.subr.bf16.mxu0 0
        %1648 = vmatpush2.bf16.msra.mxu0 0
        %1649 = vmatprep.subr.bf16.mxu0 0
        %1650 = vmatpush2.bf16.msra.mxu0 0
        %1651 = vmatprep.mubr.bf16.mxu0 0
        %1652 = vmatmul.mubr.bf16.gmra.mxu0 %v1404
        %v1653 = vpop.f32.mrf.mxu0
        %v1654 = vadd.f32 %v1442, %v1653
        %v1655 = vpop.f32.mrf.mxu0
        %v1656 = vadd.f32 %v1446, %v1655
        %v1657 = vpop.f32.mrf.mxu0
        %v1658 = vpop.f32.mrf.mxu0
        %1659 = vdwg.mxu0
        %1660 = vmatprep.subr.bf16.mxu0 %v1586
        %1661 = vmatpush1.bf16.msra.mxu0 %v1585
        %1662 = vmatprep.subr.bf16.mxu0 %v1582
        %1663 = vmatpush1.bf16.msra.mxu0 %v1581
        %1664 = vmatprep.subr.bf16.mxu0 %v1578
        %1665 = vmatpush1.bf16.msra.mxu0 %v1577
        %1666 = vmatprep.subr.bf16.mxu0 %v1574
        %1667 = vmatpush1.bf16.msra.mxu0 %v1573
        %1668 = vmatprep.subr.bf16.mxu0 %v1570
        %1669 = vmatpush1.bf16.msra.mxu0 %v1569
        %1670 = vmatprep.subr.bf16.mxu0 %v1566
        %1671 = vmatpush1.bf16.msra.mxu0 %v1565
        %1672 = vmatprep.subr.bf16.mxu0 %v1562
        %1673 = vmatpush1.bf16.msra.mxu0 %v1561
        %1674 = vmatprep.subr.bf16.mxu0 %v1558
        %1675 = vmatpush1.bf16.msra.mxu0 %v1557
        %1676 = vmatprep.subr.bf16.mxu0 0
        %1677 = vmatpush2.bf16.msra.mxu0 0
        %1678 = vmatprep.subr.bf16.mxu0 0
        %1679 = vmatpush2.bf16.msra.mxu0 0
        %1680 = vmatprep.subr.bf16.mxu0 0
        %1681 = vmatpush2.bf16.msra.mxu0 0
        %1682 = vmatprep.subr.bf16.mxu0 0
        %1683 = vmatpush2.bf16.msra.mxu0 0
        %1684 = vmatprep.subr.bf16.mxu0 0
        %1685 = vmatpush2.bf16.msra.mxu0 0
        %1686 = vmatprep.subr.bf16.mxu0 0
        %1687 = vmatpush2.bf16.msra.mxu0 0
        %1688 = vmatprep.subr.bf16.mxu0 0
        %1689 = vmatpush2.bf16.msra.mxu0 0
        %1690 = vmatprep.subr.bf16.mxu0 0
        %1691 = vmatpush2.bf16.msra.mxu0 0
        %1692 = vmatprep.mubr.bf16.mxu0 0
        %1693 = vmatmul.mubr.bf16.gmra.mxu0 %v1404
        %v1694 = vpop.f32.mrf.mxu0
        %v1695 = vadd.f32 %v1450, %v1694
        %v1696 = vpop.f32.mrf.mxu0
        %v1697 = vadd.f32 %v1454, %v1696
        %v1698 = vpop.f32.mrf.mxu0
        %v1699 = vpop.f32.mrf.mxu0
        %1700 = vdwg.mxu0
        %v1701 = vmax.f32 %v1654, 0.0
        %v1702 = vmax.f32 %v1656, 0.0
        %v1703 = vmax.f32 %v1695, 0.0
        %v1704 = vmax.f32 %v1697, 0.0
        %v1705 = vpack.c.bf16 %v1701, %v1701
        %v1706 = vpack.c.bf16 %v1702, %v1702
        %v1707 = vpack.c.bf16 %v1703, %v1703
        %v1708 = vpack.c.bf16 %v1704, %v1704
        %v1709 = vld [vmem:[#allocation13] sm:$0xf]
        %v1710 = vld [vmem:[#allocation13 + $0x4] sm:$0xf]
        %v1711 = vld [vmem:[#allocation13 + $0x8] sm:$0xf]
        %v1712 = vld [vmem:[#allocation13 + $0xc] sm:$0xf]
        %v1713 = vld [vmem:[#allocation13 + $0x10] sm:$0xf]
        %v1714 = vld [vmem:[#allocation13 + $0x14] sm:$0xf]
        %v1715 = vld [vmem:[#allocation13 + $0x18] sm:$0xf]
        %v1716 = vld [vmem:[#allocation13 + $0x1c] sm:$0xf]
        %v1717 = vld [vmem:[#allocation13 + $0x20] sm:$0xf]
        %v1718 = vld [vmem:[#allocation13 + $0x24] sm:$0xf]
        %v1719 = vld [vmem:[#allocation13 + $0x28] sm:$0xf]
        %v1720 = vld [vmem:[#allocation13 + $0x2c] sm:$0xf]
        %v1721 = vld [vmem:[#allocation13 + $0x30] sm:$0xf]
        %v1722 = vld [vmem:[#allocation13 + $0x34] sm:$0xf]
        %v1723 = vld [vmem:[#allocation13 + $0x38] sm:$0xf]
        %v1724 = vld [vmem:[#allocation13 + $0x3c] sm:$0xf]
        %v1725 = vld [vmem:[#allocation13 + $0x40] sm:$0xf]
        %v1726 = vld [vmem:[#allocation13 + $0x44] sm:$0xf]
        %v1727 = vld [vmem:[#allocation13 + $0x48] sm:$0xf]
        %v1728 = vld [vmem:[#allocation13 + $0x4c] sm:$0xf]
        %v1729 = vld [vmem:[#allocation13 + $0x50] sm:$0xf]
        %v1730 = vld [vmem:[#allocation13 + $0x54] sm:$0xf]
        %v1731 = vld [vmem:[#allocation13 + $0x58] sm:$0xf]
        %v1732 = vld [vmem:[#allocation13 + $0x5c] sm:$0xf]
        %v1733 = vld [vmem:[#allocation13 + $0x60] sm:$0xf]
        %v1734 = vld [vmem:[#allocation13 + $0x64] sm:$0xf]
        %v1735 = vld [vmem:[#allocation13 + $0x68] sm:$0xf]
        %v1736 = vld [vmem:[#allocation13 + $0x6c] sm:$0xf]
        %v1737 = vld [vmem:[#allocation13 + $0x70] sm:$0xf]
        %v1738 = vld [vmem:[#allocation13 + $0x74] sm:$0xf]
        %v1739 = vld [vmem:[#allocation13 + $0x78] sm:$0xf]
        %v1740 = vld [vmem:[#allocation13 + $0x7c] sm:$0xf]
        %v1741 = vld [vmem:[#allocation13 + $0x80] sm:$0xf]
        %v1742 = vld [vmem:[#allocation13 + $0x84] sm:$0xf]
        %v1743 = vld [vmem:[#allocation13 + $0x88] sm:$0xf]
        %v1744 = vld [vmem:[#allocation13 + $0x8c] sm:$0xf]
        %v1745 = vld [vmem:[#allocation13 + $0x90] sm:$0xf]
        %v1746 = vld [vmem:[#allocation13 + $0x94] sm:$0xf]
        %v1747 = vld [vmem:[#allocation13 + $0x98] sm:$0xf]
        %v1748 = vld [vmem:[#allocation13 + $0x9c] sm:$0xf]
        %v1749 = vld [vmem:[#allocation13 + $0xa0] sm:$0xf]
        %v1750 = vld [vmem:[#allocation13 + $0xa4] sm:$0xf]
        %v1751 = vld [vmem:[#allocation13 + $0xa8] sm:$0xf]
        %v1752 = vld [vmem:[#allocation13 + $0xac] sm:$0xf]
        %v1753 = vld [vmem:[#allocation13 + $0xb0] sm:$0xf]
        %v1754 = vld [vmem:[#allocation13 + $0xb4] sm:$0xf]
        %v1755 = vld [vmem:[#allocation13 + $0xb8] sm:$0xf]
        %v1756 = vld [vmem:[#allocation13 + $0xbc] sm:$0xf]
        %v1757 = vld [vmem:[#allocation13 + $0xc0] sm:$0xf]
        %v1758 = vld [vmem:[#allocation13 + $0xc4] sm:$0xf]
        %v1759 = vld [vmem:[#allocation13 + $0xc8] sm:$0xf]
        %v1760 = vld [vmem:[#allocation13 + $0xcc] sm:$0xf]
        %v1761 = vld [vmem:[#allocation13 + $0xd0] sm:$0xf]
        %v1762 = vld [vmem:[#allocation13 + $0xd4] sm:$0xf]
        %v1763 = vld [vmem:[#allocation13 + $0xd8] sm:$0xf]
        %v1764 = vld [vmem:[#allocation13 + $0xdc] sm:$0xf]
        %v1765 = vld [vmem:[#allocation13 + $0xe0] sm:$0xf]
        %v1766 = vld [vmem:[#allocation13 + $0xe4] sm:$0xf]
        %v1767 = vld [vmem:[#allocation13 + $0xe8] sm:$0xf]
        %v1768 = vld [vmem:[#allocation13 + $0xec] sm:$0xf]
        %v1769 = vld [vmem:[#allocation13 + $0xf0] sm:$0xf]
        %v1770 = vld [vmem:[#allocation13 + $0xf4] sm:$0xf]
        %v1771 = vld [vmem:[#allocation13 + $0xf8] sm:$0xf]
        %v1772 = vld [vmem:[#allocation13 + $0xfc] sm:$0xf]
        %v1773 = vld [vmem:[%s9] sm:$0x1]
        %v1775 = vlaneseq
        %v1776 = vshrl.u32 %v1775, 7
        %v1777 = vsub.s32 0, %v1776
        %v1778 = vrot.slane %v1773, %v1777
        %v1844 = vunpack.c.l.b16 %v1709
        %v1845 = vunpack.c.l.b16 %v1710
        %v1846 = vunpack.c.l.b16 %v1711
        %v1847 = vunpack.c.l.b16 %v1712
        %v1848 = vunpack.c.l.b16 %v1713
        %v1849 = vunpack.c.l.b16 %v1714
        %v1850 = vunpack.c.l.b16 %v1715
        %v1851 = vunpack.c.l.b16 %v1716
        %v1852 = vunpack.c.l.b16 %v1717
        %v1853 = vunpack.c.l.b16 %v1718
        %v1854 = vunpack.c.l.b16 %v1719
        %v1855 = vunpack.c.l.b16 %v1720
        %v1856 = vunpack.c.l.b16 %v1721
        %v1857 = vunpack.c.l.b16 %v1722
        %v1858 = vunpack.c.l.b16 %v1723
        %v1859 = vunpack.c.l.b16 %v1724
        %v1860 = vunpack.c.l.b16 %v1725
        %v1861 = vunpack.c.l.b16 %v1726
        %v1862 = vunpack.c.l.b16 %v1727
        %v1863 = vunpack.c.l.b16 %v1728
        %v1864 = vunpack.c.l.b16 %v1729
        %v1865 = vunpack.c.l.b16 %v1730
        %v1866 = vunpack.c.l.b16 %v1731
        %v1867 = vunpack.c.l.b16 %v1732
        %v1868 = vunpack.c.l.b16 %v1733
        %v1869 = vunpack.c.l.b16 %v1734
        %v1870 = vunpack.c.l.b16 %v1735
        %v1871 = vunpack.c.l.b16 %v1736
        %v1872 = vunpack.c.l.b16 %v1737
        %v1873 = vunpack.c.l.b16 %v1738
        %v1874 = vunpack.c.l.b16 %v1739
        %v1875 = vunpack.c.l.b16 %v1740
        %v1876 = vunpack.c.l.b16 %v1741
        %v1877 = vunpack.c.l.b16 %v1742
        %v1878 = vunpack.c.l.b16 %v1743
        %v1879 = vunpack.c.l.b16 %v1744
        %v1880 = vunpack.c.l.b16 %v1745
        %v1881 = vunpack.c.l.b16 %v1746
        %v1882 = vunpack.c.l.b16 %v1747
        %v1883 = vunpack.c.l.b16 %v1748
        %v1884 = vunpack.c.l.b16 %v1749
        %v1885 = vunpack.c.l.b16 %v1750
        %v1886 = vunpack.c.l.b16 %v1751
        %v1887 = vunpack.c.l.b16 %v1752
        %v1888 = vunpack.c.l.b16 %v1753
        %v1889 = vunpack.c.l.b16 %v1754
        %v1890 = vunpack.c.l.b16 %v1755
        %v1891 = vunpack.c.l.b16 %v1756
        %v1892 = vunpack.c.l.b16 %v1757
        %v1893 = vunpack.c.l.b16 %v1758
        %v1894 = vunpack.c.l.b16 %v1759
        %v1895 = vunpack.c.l.b16 %v1760
        %v1896 = vunpack.c.l.b16 %v1761
        %v1897 = vunpack.c.l.b16 %v1762
        %v1898 = vunpack.c.l.b16 %v1763
        %v1899 = vunpack.c.l.b16 %v1764
        %v1900 = vunpack.c.l.b16 %v1765
        %v1901 = vunpack.c.l.b16 %v1766
        %v1902 = vunpack.c.l.b16 %v1767
        %v1903 = vunpack.c.l.b16 %v1768
        %v1904 = vunpack.c.l.b16 %v1769
        %v1905 = vunpack.c.l.b16 %v1770
        %v1906 = vunpack.c.l.b16 %v1771
        %v1907 = vunpack.c.l.b16 %v1772
        %v1908 = vpack.c.b16 %v1845, %v1844
        %v1909 = vpack.c.b16 %v1847, %v1846
        %v1910 = vpack.c.b16 %v1849, %v1848
        %v1911 = vpack.c.b16 %v1851, %v1850
        %v1912 = vpack.c.b16 %v1853, %v1852
        %v1913 = vpack.c.b16 %v1855, %v1854
        %v1914 = vpack.c.b16 %v1857, %v1856
        %v1915 = vpack.c.b16 %v1859, %v1858
        %v1916 = vpack.c.b16 %v1861, %v1860
        %v1917 = vpack.c.b16 %v1863, %v1862
        %v1918 = vpack.c.b16 %v1865, %v1864
        %v1919 = vpack.c.b16 %v1867, %v1866
        %v1920 = vpack.c.b16 %v1869, %v1868
        %v1921 = vpack.c.b16 %v1871, %v1870
        %v1922 = vpack.c.b16 %v1873, %v1872
        %v1923 = vpack.c.b16 %v1875, %v1874
        %v1924 = vpack.c.b16 %v1877, %v1876
        %v1925 = vpack.c.b16 %v1879, %v1878
        %v1926 = vpack.c.b16 %v1881, %v1880
        %v1927 = vpack.c.b16 %v1883, %v1882
        %v1928 = vpack.c.b16 %v1885, %v1884
        %v1929 = vpack.c.b16 %v1887, %v1886
        %v1930 = vpack.c.b16 %v1889, %v1888
        %v1931 = vpack.c.b16 %v1891, %v1890
        %v1932 = vpack.c.b16 %v1893, %v1892
        %v1933 = vpack.c.b16 %v1895, %v1894
        %v1934 = vpack.c.b16 %v1897, %v1896
        %v1935 = vpack.c.b16 %v1899, %v1898
        %v1936 = vpack.c.b16 %v1901, %v1900
        %v1937 = vpack.c.b16 %v1903, %v1902
        %v1938 = vpack.c.b16 %v1905, %v1904
        %v1939 = vpack.c.b16 %v1907, %v1906
        %1972 = vmatprep.subr.bf16.mxu0 0
        %1973 = vmatpush1.bf16.msra.mxu0 %v1915
        %1974 = vmatprep.subr.bf16.mxu0 0
        %1975 = vmatpush1.bf16.msra.mxu0 %v1914
        %1976 = vmatprep.subr.bf16.mxu0 0
        %1977 = vmatpush1.bf16.msra.mxu0 %v1913
        %1978 = vmatprep.subr.bf16.mxu0 0
        %1979 = vmatpush1.bf16.msra.mxu0 %v1912
        %1980 = vmatprep.subr.bf16.mxu0 0
        %1981 = vmatpush1.bf16.msra.mxu0 %v1911
        %1982 = vmatprep.subr.bf16.mxu0 0
        %1983 = vmatpush1.bf16.msra.mxu0 %v1910
        %1984 = vmatprep.subr.bf16.mxu0 0
        %1985 = vmatpush1.bf16.msra.mxu0 %v1909
        %1986 = vmatprep.subr.bf16.mxu0 0
        %1987 = vmatpush1.bf16.msra.mxu0 %v1908
        %1988 = vmatprep.subr.bf16.mxu0 0
        %1989 = vmatpush2.bf16.msra.mxu0 %v1923
        %1990 = vmatprep.subr.bf16.mxu0 0
        %1991 = vmatpush2.bf16.msra.mxu0 %v1922
        %1992 = vmatprep.subr.bf16.mxu0 0
        %1993 = vmatpush2.bf16.msra.mxu0 %v1921
        %1994 = vmatprep.subr.bf16.mxu0 0
        %1995 = vmatpush2.bf16.msra.mxu0 %v1920
        %1996 = vmatprep.subr.bf16.mxu0 0
        %1997 = vmatpush2.bf16.msra.mxu0 %v1919
        %1998 = vmatprep.subr.bf16.mxu0 0
        %1999 = vmatpush2.bf16.msra.mxu0 %v1918
        %2000 = vmatprep.subr.bf16.mxu0 0
        %2001 = vmatpush2.bf16.msra.mxu0 %v1917
        %2002 = vmatprep.subr.bf16.mxu0 0
        %2003 = vmatpush2.bf16.msra.mxu0 %v1916
        %2004 = vmatprep.mubr.bf16.mxu0 %v1706
        %2005 = vmatmul.mubr.bf16.gmra.mxu0 %v1705
        %v2006 = vpop.f32.mrf.mxu0
        %v2007 = vadd.f32 %v1778, %v2006
        %v2008 = vpop.f32.mrf.mxu0
        %v2009 = vpop.f32.mrf.mxu0
        %v2010 = vpop.f32.mrf.mxu0
        %2011 = vdwg.mxu0
        %2012 = vmatprep.subr.bf16.mxu0 0
        %2013 = vmatpush1.bf16.msra.mxu0 %v1931
        %2014 = vmatprep.subr.bf16.mxu0 0
        %2015 = vmatpush1.bf16.msra.mxu0 %v1930
        %2016 = vmatprep.subr.bf16.mxu0 0
        %2017 = vmatpush1.bf16.msra.mxu0 %v1929
        %2018 = vmatprep.subr.bf16.mxu0 0
        %2019 = vmatpush1.bf16.msra.mxu0 %v1928
        %2020 = vmatprep.subr.bf16.mxu0 0
        %2021 = vmatpush1.bf16.msra.mxu0 %v1927
        %2022 = vmatprep.subr.bf16.mxu0 0
        %2023 = vmatpush1.bf16.msra.mxu0 %v1926
        %2024 = vmatprep.subr.bf16.mxu0 0
        %2025 = vmatpush1.bf16.msra.mxu0 %v1925
        %2026 = vmatprep.subr.bf16.mxu0 0
        %2027 = vmatpush1.bf16.msra.mxu0 %v1924
        %2028 = vmatprep.subr.bf16.mxu0 0
        %2029 = vmatpush2.bf16.msra.mxu0 %v1939
        %2030 = vmatprep.subr.bf16.mxu0 0
        %2031 = vmatpush2.bf16.msra.mxu0 %v1938
        %2032 = vmatprep.subr.bf16.mxu0 0
        %2033 = vmatpush2.bf16.msra.mxu0 %v1937
        %2034 = vmatprep.subr.bf16.mxu0 0
        %2035 = vmatpush2.bf16.msra.mxu0 %v1936
        %2036 = vmatprep.subr.bf16.mxu0 0
        %2037 = vmatpush2.bf16.msra.mxu0 %v1935
        %2038 = vmatprep.subr.bf16.mxu0 0
        %2039 = vmatpush2.bf16.msra.mxu0 %v1934
        %2040 = vmatprep.subr.bf16.mxu0 0
        %2041 = vmatpush2.bf16.msra.mxu0 %v1933
        %2042 = vmatprep.subr.bf16.mxu0 0
        %2043 = vmatpush2.bf16.msra.mxu0 %v1932
        %2044 = vmatprep.mubr.bf16.mxu0 %v1708
        %2045 = vmatmul.mubr.bf16.gmra.mxu0 %v1707
        %v2046 = vpop.f32.mrf.mxu0
        %v2047 = vadd.f32 %v2007, %v2046
        %v2048 = vpop.f32.mrf.mxu0
        %v2049 = vpop.f32.mrf.mxu0
        %v2050 = vpop.f32.mrf.mxu0
        %2051 = vdwg.mxu0
        %v2052 = vadd.f32 %v1403, %v2047
        %2053 = vadd.xlane.f32.xlu0 %v2052
        %v2054 = vpop.xlane.xlu0 %2053
        %v2055 = vmul.f32 %v2054, %v1378
        %v2056 = vsub.f32 %v2052, %v2055
        %v2057 = vmul.f32 %v2056, %v2056
        %2058 = vadd.xlane.f32.xlu0 %v2057
        %v2059 = vpop.xlane.xlu0 %2058
        %v2060 = vmul.f32 %v2059, %v1378
        %v2061 = vadd.f32 %v2060, 1e-05
        %v2062 = vrsqrt.pop %v2061
        %v2063 = vmul.f32 %v2056, %v2062
        %v2064 = vld [vmem:[%s10] sm:$0x1]
        %v2066 = vlaneseq
        %v2067 = vshrl.u32 %v2066, 7
        %v2068 = vsub.s32 0, %v2067
        %v2069 = vrot.slane %v2064, %v2068
        %v2071 = vmul.f32 %v2063, %v2069
        %v2072 = vld [vmem:[%s11] sm:$0x1]
        %v2074 = vlaneseq
        %v2075 = vshrl.u32 %v2074, 7
        %v2076 = vsub.s32 0, %v2075
        %v2077 = vrot.slane %v2072, %v2076
        %v2079 = vadd.f32 %v2071, %v2077
        %2080 = vst [vmem:[%s544] sm:$0xff] %v2079
        %s2081 = sand.u32 %s320, 1
        %s2082 = scalar_lea.sflag [#allocation6], %s2081
        %s2083 = sand.u32 %s320, 1
        %s2084 = smul.addr %s2083, 8
        %s2085 = scalar_lea.vmem [#allocation15], %s2084
        // Predicated region
        $region97: #{tpu_custom_call.1} parent=67 // pred_check
          %p2086 = pneg %p330
        $region98: #{tpu_custom_call.1} parent=67 // pred_check_branch
          %2088 = sbr.rel (%p2086) target = $region100
        $region99: #{tpu_custom_call.1} parent=67 // pred_region
          %s2090 = ssub.s32 128, 128
          %2091 = vsyncadd %s2082, %s2090
          %s2092 = smul.addr %s38, 2
          %s2093 = sadd.s32 %s39, %s2092
          %s2094 = smul.addr %s2093, 128
          %s2095 = scalar_lea.hbm %s12, %s2094
          %s2097 = sshll.u32 %s2085, 4
          %s2098 = int_to_ptr.vmem [resolvable:$true] %s2097
          %2100 = dma.vmem_to_hbm [thread:$0]  %s2098, 128, %s2095, %s2082
        $region100: #{tpu_custom_call.1} parent=67 // pred_fallthru
          _
      $region68: #{tpu_custom_call.1} parent=5 // pred_fallthru
        _
      %p2101 = scmp.le.s32.totalorder 2, %s29
      // Predicated region
      $region101: #{tpu_custom_call.1} parent=5 // pred_check
        %p2102 = pneg %p2101
      $region102: #{tpu_custom_call.1} parent=5 // pred_check_branch
        %2104 = sbr.rel (%p2102) target = $region104
      $region103: #{tpu_custom_call.1} parent=5 // pred_region
        %s2105 = ssub.s32 %s29, 2
        // Predicated region
        $region105: #{tpu_custom_call.1} parent=103 // pred_check
          %p2106 = pneg %p336
        $region106: #{tpu_custom_call.1} parent=103 // pred_check_branch
          %2108 = sbr.rel (%p2106) target = $region108
        $region107: #{tpu_custom_call.1} parent=103 // pred_region
          %s2109 = sand.u32 %s321, 1
          %s2110 = scalar_lea.sflag [#allocation6], %s2109
          %s2111 = sand.u32 %s321, 1
          %s2112 = smul.addr %s2111, 8
          %s2113 = scalar_lea.vmem [#allocation15], %s2112
          %2114 = dma.done %s2110, 128
        $region108: #{tpu_custom_call.1} parent=103 // pred_fallthru
          _
      $region104: #{tpu_custom_call.1} parent=5 // pred_fallthru
        _
    $region6: #{tpu_custom_call.1} parent=1 // loop_footer
      %s33 = sadd.s32 1, %s29
    $region7: #{tpu_custom_call.1} parent=1 // loop_footer_branch
      %28 = sbr.rel target = $region3
    $region8: #{tpu_custom_call.1} parent=1 // loop_exit
      _
    %2115 = vsyncpa [#allocation5], 1
    %s2116 = scalar_lea.sflag [#allocation5], 1
    %2117 = vsyncpa %s2116, 1
    %2118 = vsyncpa [#allocation8], 1
    %s2119 = scalar_lea.sflag [#allocation8], 1
    %2120 = vsyncpa %s2119, 1
    %2121 = vsyncpa [#allocation11], 1
    %2122 = vsyncpa [#allocation14], 1
    %2123 = vsyncpa [#allocation6], 1
    %s2124 = scalar_lea.sflag [#allocation6], 1
    %2125 = vsyncpa %s2124, 1

// kernel: tpu_custom_call.1
$region0: #{tpu_custom_call.1}
  #allocation0 [shape = 'u32[]', space=smem, size = 0x4, offset = 0x4, fixed_abs, tag = 'smem constant byte address 0x4 - core index']
  #allocation1 [shape = 'u32[144,128]{1,0:T(1,128)}', space=vmem, size = 0x12000, scoped, tag = 'internal scratch']
  #allocation2 [shape = 'bf16[4,16,32]{2,1,0:T(8,128)(2,1)}', space=vmem, size = 0x4000, scoped, tag = 'scratch operand']
  #allocation3 [shape = 'bf16[4,16,32]{2,1,0:T(8,128)(2,1)}', space=vmem, size = 0x4000, scoped, tag = 'scratch operand']
  %s0 = inlined_call_operand.hbm [shape: f32[2,16,128], index: 0, kind: input, shape index: {}]
  %s1 = inlined_call_operand.hbm [shape: bf16[2,16,128], index: 1, kind: input, shape index: {}]
  %s2 = inlined_call_operand.hbm [shape: bf16[128,128], index: 2, kind: input, shape index: {}]
  %s3 = inlined_call_operand.hbm [shape: bf16[128,256], index: 3, kind: input, shape index: {}]
  %s4 = inlined_call_operand.vmem [shape: f32[1,128], index: 4, kind: input, shape index: {}]
  %s5 = inlined_call_operand.vmem [shape: f32[1,128], index: 5, kind: input, shape index: {}]
  %s6 = inlined_call_operand.hbm [shape: bf16[128,512], index: 6, kind: input, shape index: {}]
  %s7 = inlined_call_operand.vmem [shape: f32[1,512], index: 7, kind: input, shape index: {}]
  %s8 = inlined_call_operand.hbm [shape: bf16[512,128], index: 8, kind: input, shape index: {}]
  %s9 = inlined_call_operand.vmem [shape: f32[1,128], index: 9, kind: input, shape index: {}]
  %s10 = inlined_call_operand.vmem [shape: f32[1,128], index: 10, kind: input, shape index: {}]
  %s11 = inlined_call_operand.vmem [shape: f32[1,128], index: 11, kind: input, shape index: {}]
  %s12 = inlined_call_operand.hbm [shape: f32[2,16,128], index: 12, kind: output, shape index: {}]
  %s13 = sld [smem:[#allocation0]]
  $region109: #{tpu_custom_call.1} parent=0
    _
  %s15 = ssub.s32 1, %s13
  %s16 = scalar_select 0, %s15, %s13
  $region1: #{tpu_custom_call.1} parent=0
    #allocation4 [shape = 'u8[8192]{0}', space=vmem, size = 0x2000, scoped, tag = 'input window, operand 0']
    #allocation5 [shape = 's32[2]{0}', space=sflag, size = 0x8, scoped, tag = 'scoped memory for tpu_custom_call.1']
    #allocation6 [shape = 's32[2]{0}', space=sflag, size = 0x8, scoped, tag = 'scoped memory for tpu_custom_call.1']
    #allocation7 [shape = 'u8[8192]{0}', space=vmem, size = 0x2000, scoped, tag = 'input window, operand 1']
    #allocation8 [shape = 's32[2]{0}', space=sflag, size = 0x8, scoped, tag = 'scoped memory for tpu_custom_call.1']
    #allocation9 [shape = 'u8[32768]{0}', space=vmem, size = 0x8000, scoped, tag = 'input window, operand 2, single buffered']
    #allocation10 [shape = 'u8[65536]{0}', space=vmem, size = 0x10000, scoped, tag = 'input window, operand 3, single buffered']
    #allocation11 [shape = 's32[1]{0}', space=sflag, size = 0x4, scoped, tag = 'scoped memory for tpu_custom_call.1']
    #allocation12 [shape = 'u8[131072]{0}', space=vmem, size = 0x20000, scoped, tag = 'input window, operand 6, single buffered']
    #allocation13 [shape = 'u8[131072]{0}', space=vmem, size = 0x20000, scoped, tag = 'input window, operand 8, single buffered']
    #allocation14 [shape = 's32[1]{0}', space=sflag, size = 0x4, scoped, tag = 'scoped memory for tpu_custom_call.1']
    #allocation15 [shape = 'u8[8192]{0}', space=vmem, size = 0x2000, scoped, tag = 'output window, operand 0']
    %17 = vsyncpa [#allocation5], 0
    %s18 = scalar_lea.sflag [#allocation5], 1
    %19 = vsyncpa %s18, 0
    %20 = vsyncpa [#allocation8], 0
    %s21 = scalar_lea.sflag [#allocation8], 1
    %22 = vsyncpa %s21, 0
    %23 = vsyncpa [#allocation11], 0
    %24 = vsyncpa [#allocation14], 0
    %25 = vsyncpa [#allocation6], 0
    %s26 = scalar_lea.sflag [#allocation6], 1
    %27 = vsyncpa %s26, 0
    loop: start=0, step=1, limit=6
    $region2: #{tpu_custom_call.1} parent=1 // loop_pre_header
      _
    $region3: #{tpu_custom_call.1} parent=1 // loop_header
      %s29 = sphi 0, %s33
      %p30 = scmp.ge.s32.totalorder %s29, 6
      %s36 = sphi 0, %s48
      %s37 = sphi 0, %s44
      %s38 = sphi 0, %s36
      %s39 = sphi 0, %s37
      %s40 = sphi 0, %s38
      %s41 = sphi 0, %s39
      %s53 = sphi 0, %s55
      %s56 = sphi 0, %s53
      %s57 = sphi 0, %s56
      %s73 = sphi 0, %s57
      %s79 = sphi 0, %s81
      %s82 = sphi 0, %s79
      %s83 = sphi 0, %s82
      %s99 = sphi 0, %s83
      %s103 = sphi 0, %s103
      %s105 = sphi 0, %s103
      %s106 = sphi 0, %s105
      %s120 = sphi 0, %s106
      %s124 = sphi 0, %s124
      %s126 = sphi 0, %s124
      %s127 = sphi 0, %s126
      %s141 = sphi 0, %s127
      %s145 = sphi 0, %s145
      %s147 = sphi 0, %s145
      %s148 = sphi 0, %s147
      %s162 = sphi 0, %s148
      %s166 = sphi 0, %s166
      %s168 = sphi 0, %s166
      %s169 = sphi 0, %s168
      %s183 = sphi 0, %s169
      %s187 = sphi 0, %s187
      %s189 = sphi 0, %s187
      %s190 = sphi 0, %s189
      %s204 = sphi 0, %s190
      %s208 = sphi 0, %s208
      %s210 = sphi 0, %s208
      %s211 = sphi 0, %s210
      %s225 = sphi 0, %s211
      %s229 = sphi 0, %s229
      %s231 = sphi 0, %s229
      %s232 = sphi 0, %s231
      %s246 = sphi 0, %s232
      %s250 = sphi 0, %s250
      %s252 = sphi 0, %s250
      %s253 = sphi 0, %s252
      %s267 = sphi 0, %s253
      %s271 = sphi 0, %s271
      %s273 = sphi 0, %s271
      %s274 = sphi 0, %s273
      %s288 = sphi 0, %s274
      %s292 = sphi 0, %s292
      %s294 = sphi 0, %s292
      %s295 = sphi 0, %s294
      %s309 = sphi 0, %s295
      %s317 = sphi 0, %s319
      %s320 = sphi 0, %s317
      %s321 = sphi 0, %s320
      %s337 = sphi 0, %s321
    $region4: #{tpu_custom_call.1} parent=1 // loop_header_branch
      %32 = sbr.rel (%p30) target = $region8
    $region5: #{tpu_custom_call.1} parent=1 // loop_body
      %s34 = ssub.s32 %s29, 1
      %s35 = ssub.s32 %s29, 2
      %s42 = sadd.s32 1, %s37
      %p43 = scmp.ge.s32.totalorder %s42, 2
      %s44 = scalar_select %p43, 0, %s42
      %s45 = sadd.s32 1, %s36
      %s46 = scalar_select %p43, %s45, %s36
      %p47 = scmp.ge.s32.totalorder %s46, 2
      %s48 = scalar_select %p47, 0, %s46
      %s49 = ssub.s32 %s36, %s48
      %s50 = ssub.s32 %s37, %s44
      %s51 = sor.u32 %s49, %s50
      %p52 = scmp.eq.s32.totalorder %s51, 0
      %s54 = sadd.s32 %s53, 1
      %s55 = scalar_select %p52, %s53, %s54
      %p58 = pneg %p52
      %p59 = scmp.eq.s32.totalorder %s29, 3
      %p60 = por %p58, %p59
      %p61 = scmp.ne.s32.totalorder %s53, %s56
      %p62 = scmp.eq.s32.totalorder %s29, 0
      %p63 = por %p61, %p62
      %p64 = scmp.ne.s32.totalorder %s53, %s56
      %p65 = scmp.eq.s32.totalorder %s34, 3
      %p66 = por %p64, %p65
      %p67 = scmp.ne.s32.totalorder %s56, %s57
      %p68 = scmp.eq.s32.totalorder %s34, 0
      %p69 = por %p67, %p68
      %p70 = scmp.ne.s32.totalorder %s56, %s57
      %p71 = scmp.eq.s32.totalorder %s35, 3
      %p72 = por %p70, %p71
      %p74 = scmp.ne.s32.totalorder %s57, %s73
      %p75 = scmp.eq.s32.totalorder %s35, 0
      %p76 = por %p74, %p75
      %s77 = ssub.s32 %s36, %s48
      %p78 = scmp.eq.s32.totalorder %s77, 0
      %s80 = sadd.s32 %s79, 1
      %s81 = scalar_select %p78, %s79, %s80
      %p84 = pneg %p78
      %p85 = scmp.eq.s32.totalorder %s29, 3
      %p86 = por %p84, %p85
      %p87 = scmp.ne.s32.totalorder %s79, %s82
      %p88 = scmp.eq.s32.totalorder %s29, 0
      %p89 = por %p87, %p88
      %p90 = scmp.ne.s32.totalorder %s79, %s82
      %p91 = scmp.eq.s32.totalorder %s34, 3
      %p92 = por %p90, %p91
      %p93 = scmp.ne.s32.totalorder %s82, %s83
      %p94 = scmp.eq.s32.totalorder %s34, 0
      %p95 = por %p93, %p94
      %p96 = scmp.ne.s32.totalorder %s82, %s83
      %p97 = scmp.eq.s32.totalorder %s35, 3
      %p98 = por %p96, %p97
      %p100 = scmp.ne.s32.totalorder %s83, %s99
      %p101 = scmp.eq.s32.totalorder %s35, 0
      %p102 = por %p100, %p101
      %s104 = sadd.s32 %s103, 1
      %p107 = scmp.eq.s32.totalorder %s29, 3
      %p108 = scmp.ne.s32.totalorder %s103, %s105
      %p109 = scmp.eq.s32.totalorder %s29, 0
      %p110 = por %p108, %p109
      %p111 = scmp.ne.s32.totalorder %s103, %s105
      %p112 = scmp.eq.s32.totalorder %s34, 3
      %p113 = por %p111, %p112
      %p114 = scmp.ne.s32.totalorder %s105, %s106
      %p115 = scmp.eq.s32.totalorder %s34, 0
      %p116 = por %p114, %p115
      %p117 = scmp.ne.s32.totalorder %s105, %s106
      %p118 = scmp.eq.s32.totalorder %s35, 3
      %p119 = por %p117, %p118
      %p121 = scmp.ne.s32.totalorder %s106, %s120
      %p122 = scmp.eq.s32.totalorder %s35, 0
      %p123 = por %p121, %p122
      %s125 = sadd.s32 %s124, 1
      %p128 = scmp.eq.s32.totalorder %s29, 3
      %p129 = scmp.ne.s32.totalorder %s124, %s126
      %p130 = scmp.eq.s32.totalorder %s29, 0
      %p131 = por %p129, %p130
      %p132 = scmp.ne.s32.totalorder %s124, %s126
      %p133 = scmp.eq.s32.totalorder %s34, 3
      %p134 = por %p132, %p133
      %p135 = scmp.ne.s32.totalorder %s126, %s127
      %p136 = scmp.eq.s32.totalorder %s34, 0
      %p137 = por %p135, %p136
      %p138 = scmp.ne.s32.totalorder %s126, %s127
      %p139 = scmp.eq.s32.totalorder %s35, 3
      %p140 = por %p138, %p139
      %p142 = scmp.ne.s32.totalorder %s127, %s141
      %p143 = scmp.eq.s32.totalorder %s35, 0
      %p144 = por %p142, %p143
      %s146 = sadd.s32 %s145, 1
      %p149 = scmp.eq.s32.totalorder %s29, 3
      %p150 = scmp.ne.s32.totalorder %s145, %s147
      %p151 = scmp.eq.s32.totalorder %s29, 0
      %p152 = por %p150, %p151
      %p153 = scmp.ne.s32.totalorder %s145, %s147
      %p154 = scmp.eq.s32.totalorder %s34, 3
      %p155 = por %p153, %p154
      %p156 = scmp.ne.s32.totalorder %s147, %s148
      %p157 = scmp.eq.s32.totalorder %s34, 0
      %p158 = por %p156, %p157
      %p159 = scmp.ne.s32.totalorder %s147, %s148
      %p160 = scmp.eq.s32.totalorder %s35, 3
      %p161 = por %p159, %p160
      %p163 = scmp.ne.s32.totalorder %s148, %s162
      %p164 = scmp.eq.s32.totalorder %s35, 0
      %p165 = por %p163, %p164
      %s167 = sadd.s32 %s166, 1
      %p170 = scmp.eq.s32.totalorder %s29, 3
      %p171 = scmp.ne.s32.totalorder %s166, %s168
      %p172 = scmp.eq.s32.totalorder %s29, 0
      %p173 = por %p171, %p172
      %p174 = scmp.ne.s32.totalorder %s166, %s168
      %p175 = scmp.eq.s32.totalorder %s34, 3
      %p176 = por %p174, %p175
      %p177 = scmp.ne.s32.totalorder %s168, %s169
      %p178 = scmp.eq.s32.totalorder %s34, 0
      %p179 = por %p177, %p178
      %p180 = scmp.ne.s32.totalorder %s168, %s169
      %p181 = scmp.eq.s32.totalorder %s35, 3
      %p182 = por %p180, %p181
      %p184 = scmp.ne.s32.totalorder %s169, %s183
      %p185 = scmp.eq.s32.totalorder %s35, 0
      %p186 = por %p184, %p185
      %s188 = sadd.s32 %s187, 1
      %p191 = scmp.eq.s32.totalorder %s29, 3
      %p192 = scmp.ne.s32.totalorder %s187, %s189
      %p193 = scmp.eq.s32.totalorder %s29, 0
      %p194 = por %p192, %p193
      %p195 = scmp.ne.s32.totalorder %s187, %s189
      %p196 = scmp.eq.s32.totalorder %s34, 3
      %p197 = por %p195, %p196
      %p198 = scmp.ne.s32.totalorder %s189, %s190
      %p199 = scmp.eq.s32.totalorder %s34, 0
      %p200 = por %p198, %p199
      %p201 = scmp.ne.s32.totalorder %s189, %s190
      %p202 = scmp.eq.s32.totalorder %s35, 3
      %p203 = por %p201, %p202
      %p205 = scmp.ne.s32.totalorder %s190, %s204
      %p206 = scmp.eq.s32.totalorder %s35, 0
      %p207 = por %p205, %p206
      %s209 = sadd.s32 %s208, 1
      %p212 = scmp.eq.s32.totalorder %s29, 3
      %p213 = scmp.ne.s32.totalorder %s208, %s210
      %p214 = scmp.eq.s32.totalorder %s29, 0
      %p215 = por %p213, %p214
      %p216 = scmp.ne.s32.totalorder %s208, %s210
      %p217 = scmp.eq.s32.totalorder %s34, 3
      %p218 = por %p216, %p217
      %p219 = scmp.ne.s32.totalorder %s210, %s211
      %p220 = scmp.eq.s32.totalorder %s34, 0
      %p221 = por %p219, %p220
      %p222 = scmp.ne.s32.totalorder %s210, %s211
      %p223 = scmp.eq.s32.totalorder %s35, 3
      %p224 = por %p222, %p223
      %p226 = scmp.ne.s32.totalorder %s211, %s225
      %p227 = scmp.eq.s32.totalorder %s35, 0
      %p228 = por %p226, %p227
      %s230 = sadd.s32 %s229, 1
      %p233 = scmp.eq.s32.totalorder %s29, 3
      %p234 = scmp.ne.s32.totalorder %s229, %s231
      %p235 = scmp.eq.s32.totalorder %s29, 0
      %p236 = por %p234, %p235
      %p237 = scmp.ne.s32.totalorder %s229, %s231
      %p238 = scmp.eq.s32.totalorder %s34, 3
      %p239 = por %p237, %p238
      %p240 = scmp.ne.s32.totalorder %s231, %s232
      %p241 = scmp.eq.s32.totalorder %s34, 0
      %p242 = por %p240, %p241
      %p243 = scmp.ne.s32.totalorder %s231, %s232
      %p244 = scmp.eq.s32.totalorder %s35, 3
      %p245 = por %p243, %p244
      %p247 = scmp.ne.s32.totalorder %s232, %s246
      %p248 = scmp.eq.s32.totalorder %s35, 0
      %p249 = por %p247, %p248
      %s251 = sadd.s32 %s250, 1
      %p254 = scmp.eq.s32.totalorder %s29, 3
      %p255 = scmp.ne.s32.totalorder %s250, %s252
      %p256 = scmp.eq.s32.totalorder %s29, 0
      %p257 = por %p255, %p256
      %p258 = scmp.ne.s32.totalorder %s250, %s252
      %p259 = scmp.eq.s32.totalorder %s34, 3
      %p260 = por %p258, %p259
      %p261 = scmp.ne.s32.totalorder %s252, %s253
      %p262 = scmp.eq.s32.totalorder %s34, 0
      %p263 = por %p261, %p262
      %p264 = scmp.ne.s32.totalorder %s252, %s253
      %p265 = scmp.eq.s32.totalorder %s35, 3
      %p266 = por %p264, %p265
      %p268 = scmp.ne.s32.totalorder %s253, %s267
      %p269 = scmp.eq.s32.totalorder %s35, 0
      %p270 = por %p268, %p269
      %s272 = sadd.s32 %s271, 1
      %p275 = scmp.eq.s32.totalorder %s29, 3
      %p276 = scmp.ne.s32.totalorder %s271, %s273
      %p277 = scmp.eq.s32.totalorder %s29, 0
      %p278 = por %p276, %p277
      %p279 = scmp.ne.s32.totalorder %s271, %s273
      %p280 = scmp.eq.s32.totalorder %s34, 3
      %p281 = por %p279, %p280
      %p282 = scmp.ne.s32.totalorder %s273, %s274
      %p283 = scmp.eq.s32.totalorder %s34, 0
      %p284 = por %p282, %p283
      %p285 = scmp.ne.s32.totalorder %s273, %s274
      %p286 = scmp.eq.s32.totalorder %s35, 3
      %p287 = por %p285, %p286
      %p289 = scmp.ne.s32.totalorder %s274, %s288
      %p290 = scmp.eq.s32.totalorder %s35, 0
      %p291 = por %p289, %p290
      %s293 = sadd.s32 %s292, 1
      %p296 = scmp.eq.s32.totalorder %s29, 3
      %p297 = scmp.ne.s32.totalorder %s292, %s294
      %p298 = scmp.eq.s32.totalorder %s29, 0
      %p299 = por %p297, %p298
      %p300 = scmp.ne.s32.totalorder %s292, %s294
      %p301 = scmp.eq.s32.totalorder %s34, 3
      %p302 = por %p300, %p301
      %p303 = scmp.ne.s32.totalorder %s294, %s295
      %p304 = scmp.eq.s32.totalorder %s34, 0
      %p305 = por %p303, %p304
      %p306 = scmp.ne.s32.totalorder %s294, %s295
      %p307 = scmp.eq.s32.totalorder %s35, 3
      %p308 = por %p306, %p307
      %p310 = scmp.ne.s32.totalorder %s295, %s309
      %p311 = scmp.eq.s32.totalorder %s35, 0
      %p312 = por %p310, %p311
      %s313 = ssub.s32 %s36, %s48
      %s314 = ssub.s32 %s37, %s44
      %s315 = sor.u32 %s313, %s314
      %p316 = scmp.eq.s32.totalorder %s315, 0
      %s318 = sadd.s32 %s317, 1
      %s319 = scalar_select %p316, %s317, %s318
      %p322 = pneg %p316
      %p323 = scmp.eq.s32.totalorder %s29, 3
      %p324 = por %p322, %p323
      %p325 = scmp.ne.s32.totalorder %s317, %s320
      %p326 = scmp.eq.s32.totalorder %s29, 0
      %p327 = por %p325, %p326
      %p328 = scmp.ne.s32.totalorder %s317, %s320
      %p329 = scmp.eq.s32.totalorder %s34, 3
      %p330 = por %p328, %p329
      %p331 = scmp.ne.s32.totalorder %s320, %s321
      %p332 = scmp.eq.s32.totalorder %s34, 0
      %p333 = por %p331, %p332
      %p334 = scmp.ne.s32.totalorder %s320, %s321
      %p335 = scmp.eq.s32.totalorder %s35, 3
      %p336 = por %p334, %p335
      %p338 = scmp.ne.s32.totalorder %s321, %s337
      %p339 = scmp.eq.s32.totalorder %s35, 0
      %p340 = por %p338, %p339
      %p341 = scmp.le.s32.totalorder 1, %s29
      %p342 = scmp.lt.s32.totalorder %s29, 5
      %p343 = pnand %p341, %p342
      %p344 = pneg %p343
      // Predicated region
      $region9: #{tpu_custom_call.1} parent=5 // pred_check
        _
      $region10: #{tpu_custom_call.1} parent=5 // pred_check_branch
        %346 = sbr.rel (%p343) target = $region12
      $region11: #{tpu_custom_call.1} parent=5 // pred_region
        %s347 = ssub.s32 %s29, 1
        // Predicated region
        $region13: #{tpu_custom_call.1} parent=11 // pred_check
          %p348 = pneg %p116
        $region14: #{tpu_custom_call.1} parent=11 // pred_check_branch
          %350 = sbr.rel (%p348) target = $region16
        $region15: #{tpu_custom_call.1} parent=11 // pred_region
          %s352 = ssub.s32 1024, 1024
          %353 = vsyncadd [#allocation8], %s352
          %s354 = sshll.u32 [#allocation9], 4
          %s355 = int_to_ptr.vmem [resolvable:$true] %s354
          %360 = dma.hbm_to_vmem [thread:$0]  %s2, 1024, %s355, [#allocation8], 64, 64, 4
        $region16: #{tpu_custom_call.1} parent=11 // pred_fallthru
          _
        // Predicated region
        $region17: #{tpu_custom_call.1} parent=11 // pred_check
          %p361 = pneg %p137
        $region18: #{tpu_custom_call.1} parent=11 // pred_check_branch
          %363 = sbr.rel (%p361) target = $region20
        $region19: #{tpu_custom_call.1} parent=11 // pred_region
          %s365 = ssub.s32 2048, 2048
          %366 = vsyncadd [#allocation11], %s365
          %s367 = sshll.u32 [#allocation10], 4
          %s368 = int_to_ptr.vmem [resolvable:$true] %s367
          %373 = dma.hbm_to_vmem [thread:$0]  %s3, 2048, %s368, [#allocation11], 128, 128, 8
        $region20: #{tpu_custom_call.1} parent=11 // pred_fallthru
          _
        // Predicated region
        $region21: #{tpu_custom_call.1} parent=11 // pred_check
          %p374 = pneg %p158
        $region22: #{tpu_custom_call.1} parent=11 // pred_check_branch
          %376 = sbr.rel (%p374) target = $region24
        $region23: #{tpu_custom_call.1} parent=11 // pred_region
          _
        $region24: #{tpu_custom_call.1} parent=11 // pred_fallthru
          _
        // Predicated region
        $region25: #{tpu_custom_call.1} parent=11 // pred_check
          %p377 = pneg %p179
        $region26: #{tpu_custom_call.1} parent=11 // pred_check_branch
          %379 = sbr.rel (%p377) target = $region28
        $region27: #{tpu_custom_call.1} parent=11 // pred_region
          _
        $region28: #{tpu_custom_call.1} parent=11 // pred_fallthru
          _
        // Predicated region
        $region29: #{tpu_custom_call.1} parent=11 // pred_check
          %p380 = pneg %p200
        $region30: #{tpu_custom_call.1} parent=11 // pred_check_branch
          %382 = sbr.rel (%p380) target = $region32
        $region31: #{tpu_custom_call.1} parent=11 // pred_region
          %s384 = ssub.s32 4096, 4096
          %385 = vsyncadd [#allocation11], %s384
          %s386 = sshll.u32 [#allocation12], 4
          %s387 = int_to_ptr.vmem [resolvable:$true] %s386
          %392 = dma.hbm_to_vmem [thread:$0]  %s6, 4096, %s387, [#allocation11], 256, 256, 16
        $region32: #{tpu_custom_call.1} parent=11 // pred_fallthru
          _
        // Predicated region
        $region33: #{tpu_custom_call.1} parent=11 // pred_check
          %p393 = pneg %p221
        $region34: #{tpu_custom_call.1} parent=11 // pred_check_branch
          %395 = sbr.rel (%p393) target = $region36
        $region35: #{tpu_custom_call.1} parent=11 // pred_region
          _
        $region36: #{tpu_custom_call.1} parent=11 // pred_fallthru
          _
        // Predicated region
        $region37: #{tpu_custom_call.1} parent=11 // pred_check
          %p396 = pneg %p242
        $region38: #{tpu_custom_call.1} parent=11 // pred_check_branch
          %398 = sbr.rel (%p396) target = $region40
        $region39: #{tpu_custom_call.1} parent=11 // pred_region
          %s400 = ssub.s32 4096, 4096
          %401 = vsyncadd [#allocation14], %s400
          %s402 = sshll.u32 [#allocation13], 4
          %s403 = int_to_ptr.vmem [resolvable:$true] %s402
          %408 = dma.hbm_to_vmem [thread:$0]  %s8, 4096, %s403, [#allocation14], 64, 64, 4
        $region40: #{tpu_custom_call.1} parent=11 // pred_fallthru
          _
        // Predicated region
        $region41: #{tpu_custom_call.1} parent=11 // pred_check
          %p409 = pneg %p263
        $region42: #{tpu_custom_call.1} parent=11 // pred_check_branch
          %411 = sbr.rel (%p409) target = $region44
        $region43: #{tpu_custom_call.1} parent=11 // pred_region
          _
        $region44: #{tpu_custom_call.1} parent=11 // pred_fallthru
          _
        // Predicated region
        $region45: #{tpu_custom_call.1} parent=11 // pred_check
          %p412 = pneg %p284
        $region46: #{tpu_custom_call.1} parent=11 // pred_check_branch
          %414 = sbr.rel (%p412) target = $region48
        $region47: #{tpu_custom_call.1} parent=11 // pred_region
          _
        $region48: #{tpu_custom_call.1} parent=11 // pred_fallthru
          _
        // Predicated region
        $region49: #{tpu_custom_call.1} parent=11 // pred_check
          %p415 = pneg %p305
        $region50: #{tpu_custom_call.1} parent=11 // pred_check_branch
          %417 = sbr.rel (%p415) target = $region52
        $region51: #{tpu_custom_call.1} parent=11 // pred_region
          _
        $region52: #{tpu_custom_call.1} parent=11 // pred_fallthru
          _
      $region12: #{tpu_custom_call.1} parent=5 // pred_fallthru
        _
      %p418 = scmp.lt.s32.totalorder %s29, 4
      // Predicated region
      $region53: #{tpu_custom_call.1} parent=5 // pred_check
        %p419 = pneg %p418
      $region54: #{tpu_custom_call.1} parent=5 // pred_check_branch
        %421 = sbr.rel (%p419) target = $region56
      $region55: #{tpu_custom_call.1} parent=5 // pred_region
        // Predicated region
        $region57: #{tpu_custom_call.1} parent=55 // pred_check
          %p422 = pneg %p63
        $region58: #{tpu_custom_call.1} parent=55 // pred_check_branch
          %424 = sbr.rel (%p422) target = $region60
        $region59: #{tpu_custom_call.1} parent=55 // pred_region
          %s425 = sand.u32 %s53, 1
          %s426 = scalar_lea.sflag [#allocation5], %s425
          %s427 = sand.u32 %s53, 1
          %s428 = smul.addr %s427, 8
          %s429 = scalar_lea.vmem [#allocation4], %s428
          %s431 = ssub.s32 128, 128
          %432 = vsyncadd %s426, %s431
          %s433 = smul.addr %s36, 2
          %s434 = sadd.s32 %s37, %s433
          %s435 = smul.addr %s434, 128
          %s436 = scalar_lea.hbm %s0, %s435
          %s438 = sshll.u32 %s429, 4
          %s439 = int_to_ptr.vmem [resolvable:$true] %s438
          %441 = dma.hbm_to_vmem [thread:$0]  %s436, 128, %s439, %s426
        $region60: #{tpu_custom_call.1} parent=55 // pred_fallthru
          _
        // Predicated region
        $region61: #{tpu_custom_call.1} parent=55 // pred_check
          %p442 = pneg %p89
        $region62: #{tpu_custom_call.1} parent=55 // pred_check_branch
          %444 = sbr.rel (%p442) target = $region64
        $region63: #{tpu_custom_call.1} parent=55 // pred_region
          %s445 = sand.u32 %s29, 1
          %s446 = scalar_lea.sflag [#allocation8], %s445
          %s447 = sand.u32 %s79, 1
          %s448 = smul.addr %s447, 8
          %s449 = scalar_lea.vmem [#allocation7], %s448
          %s451 = ssub.s32 128, 128
          %452 = vsyncadd %s446, %s451
          %s453 = smul.addr %s36, 2
          %s454 = smul.addr %s453, 64
          %s455 = scalar_lea.hbm %s1, %s454
          %s456 = sshll.u32 %s449, 4
          %s457 = int_to_ptr.vmem [resolvable:$true] %s456
          %462 = dma.hbm_to_vmem [thread:$0]  %s455, 128, %s457, %s446, 64, 64, 4
        $region64: #{tpu_custom_call.1} parent=55 // pred_fallthru
          _
      $region56: #{tpu_custom_call.1} parent=5 // pred_fallthru
        _
      %p463 = scmp.le.s32.totalorder 1, %s29
      %p464 = scmp.lt.s32.totalorder %s29, 5
      %p465 = pnand %p463, %p464
      %p466 = pneg %p465
      // Predicated region
      $region65: #{tpu_custom_call.1} parent=5 // pred_check
        _
      $region66: #{tpu_custom_call.1} parent=5 // pred_check_branch
        %468 = sbr.rel (%p465) target = $region68
      $region67: #{tpu_custom_call.1} parent=5 // pred_region
        %s469 = ssub.s32 %s29, 1
        %s470 = sand.u32 %s56, 1
        %s471 = scalar_lea.sflag [#allocation5], %s470
        %s472 = sand.u32 %s56, 1
        %s473 = smul.addr %s472, 8
        %s474 = scalar_lea.vmem [#allocation4], %s473
        // Predicated region
        $region69: #{tpu_custom_call.1} parent=67 // pred_check
          %p475 = pneg %p69
        $region70: #{tpu_custom_call.1} parent=67 // pred_check_branch
          %477 = sbr.rel (%p475) target = $region72
        $region71: #{tpu_custom_call.1} parent=67 // pred_region
          %478 = dma.done %s471, 128
        $region72: #{tpu_custom_call.1} parent=67 // pred_fallthru
          _
        %s479 = sand.u32 %s34, 1
        %s480 = scalar_lea.sflag [#allocation8], %s479
        %s481 = sand.u32 %s82, 1
        %s482 = smul.addr %s481, 8
        %s483 = scalar_lea.vmem [#allocation7], %s482
        // Predicated region
        $region73: #{tpu_custom_call.1} parent=67 // pred_check
          %p484 = pneg %p95
        $region74: #{tpu_custom_call.1} parent=67 // pred_check_branch
          %486 = sbr.rel (%p484) target = $region76
        $region75: #{tpu_custom_call.1} parent=67 // pred_region
          %487 = dma.done %s480, 128
        $region76: #{tpu_custom_call.1} parent=67 // pred_fallthru
          _
        // Predicated region
        $region77: #{tpu_custom_call.1} parent=67 // pred_check
          %p488 = pneg %p116
        $region78: #{tpu_custom_call.1} parent=67 // pred_check_branch
          %490 = sbr.rel (%p488) target = $region80
        $region79: #{tpu_custom_call.1} parent=67 // pred_region
          %491 = dma.done [#allocation8], 1024
        $region80: #{tpu_custom_call.1} parent=67 // pred_fallthru
          _
        // Predicated region
        $region81: #{tpu_custom_call.1} parent=67 // pred_check
          %p492 = pneg %p137
        $region82: #{tpu_custom_call.1} parent=67 // pred_check_branch
          %494 = sbr.rel (%p492) target = $region84
        $region83: #{tpu_custom_call.1} parent=67 // pred_region
          %495 = dma.done [#allocation11], 2048
        $region84: #{tpu_custom_call.1} parent=67 // pred_fallthru
          _
        // Predicated region
        $region85: #{tpu_custom_call.1} parent=67 // pred_check
          %p496 = pneg %p200
        $region86: #{tpu_custom_call.1} parent=67 // pred_check_branch
          %498 = sbr.rel (%p496) target = $region88
        $region87: #{tpu_custom_call.1} parent=67 // pred_region
          %499 = dma.done [#allocation11], 4096
        $region88: #{tpu_custom_call.1} parent=67 // pred_fallthru
          _
        // Predicated region
        $region89: #{tpu_custom_call.1} parent=67 // pred_check
          %p500 = pneg %p242
        $region90: #{tpu_custom_call.1} parent=67 // pred_check_branch
          %502 = sbr.rel (%p500) target = $region92
        $region91: #{tpu_custom_call.1} parent=67 // pred_region
          %503 = dma.done [#allocation14], 4096
        $region92: #{tpu_custom_call.1} parent=67 // pred_fallthru
          _
        %s504 = sand.u32 %s56, 1
        %s505 = scalar_lea.sflag [#allocation5], %s504
        %s506 = sand.u32 %s56, 1
        %s507 = smul.addr %s506, 8
        %s508 = scalar_lea.vmem [#allocation4], %s507
        %p509 = pneg %p69
        %p510 = pneg %p66
        %s511 = sand.u32 %s34, 1
        %s512 = scalar_lea.sflag [#allocation8], %s511
        %s513 = sand.u32 %s82, 1
        %s514 = smul.addr %s513, 8
        %s515 = scalar_lea.vmem [#allocation7], %s514
        %p516 = pneg %p95
        %p517 = pneg %p92
        %p518 = pneg %p116
        %p519 = pneg %p113
        %p520 = pneg %p137
        %p521 = pneg %p134
        %p522 = pneg %p158
        %p523 = pneg %p155
        %p524 = pneg %p179
        %p525 = pneg %p176
        %p526 = pneg %p200
        %p527 = pneg %p197
        %p528 = pneg %p221
        %p529 = pneg %p218
        %p530 = pneg %p242
        %p531 = pneg %p239
        %p532 = pneg %p263
        %p533 = pneg %p260
        %p534 = pneg %p284
        %p535 = pneg %p281
        %p536 = pneg %p305
        %p537 = pneg %p302
        %p538 = pneg %p333
        %p539 = pneg %p330
        %s540 = sand.u32 %s320, 1
        %s541 = scalar_lea.sflag [#allocation6], %s540
        %s542 = sand.u32 %s320, 1
        %s543 = smul.addr %s542, 8
        %s544 = scalar_lea.vmem [#allocation15], %s543
        %v546 = vld [vmem:[%s474] sm:$0xff]
        %p547 = scmp.eq.s32.totalorder %s39, 0
        // Predicated region
        $region93: #{tpu_custom_call.1} parent=67 // pred_check
          %p548 = pneg %p547
        $region94: #{tpu_custom_call.1} parent=67 // pred_check_branch
          %550 = sbr.rel (%p548) target = $region96
        $region95: #{tpu_custom_call.1} parent=67 // pred_region
          %v551 = vld [vmem:[%s483] sm:$0xf]
          %v552 = vld [vmem:[%s483 + $0x4] sm:$0xf]
          %v553 = vld [vmem:[#allocation10] sm:$0xff]
          %v554 = vld [vmem:[#allocation10 + $0x8] sm:$0xff]
          %v555 = vld [vmem:[#allocation10 + $0x10] sm:$0xff]
          %v556 = vld [vmem:[#allocation10 + $0x18] sm:$0xff]
          %v557 = vld [vmem:[#allocation10 + $0x20] sm:$0xff]
          %v558 = vld [vmem:[#allocation10 + $0x28] sm:$0xff]
          %v559 = vld [vmem:[#allocation10 + $0x30] sm:$0xff]
          %v560 = vld [vmem:[#allocation10 + $0x38] sm:$0xff]
          %v561 = vld [vmem:[#allocation10 + $0x40] sm:$0xff]
          %v562 = vld [vmem:[#allocation10 + $0x48] sm:$0xff]
          %v563 = vld [vmem:[#allocation10 + $0x50] sm:$0xff]
          %v564 = vld [vmem:[#allocation10 + $0x58] sm:$0xff]
          %v565 = vld [vmem:[#allocation10 + $0x60] sm:$0xff]
          %v566 = vld [vmem:[#allocation10 + $0x68] sm:$0xff]
          %v567 = vld [vmem:[#allocation10 + $0x70] sm:$0xff]
          %v568 = vld [vmem:[#allocation10 + $0x78] sm:$0xff]
          %v571 = vunpack.c.l.b16 %v551
          %v572 = vunpack.c.l.b16 %v552
          %v573 = vpack.c.b16 %v572, %v571
          %v591 = vunpack.c.l.b16 %v553
          %v592 = vunpack.c.h.b16 %v553
          %v593 = vunpack.c.l.b16 %v554
          %v594 = vunpack.c.h.b16 %v554
          %v595 = vunpack.c.l.b16 %v555
          %v596 = vunpack.c.h.b16 %v555
          %v597 = vunpack.c.l.b16 %v556
          %v598 = vunpack.c.h.b16 %v556
          %v599 = vunpack.c.l.b16 %v557
          %v600 = vunpack.c.h.b16 %v557
          %v601 = vunpack.c.l.b16 %v558
          %v602 = vunpack.c.h.b16 %v558
          %v603 = vunpack.c.l.b16 %v559
          %v604 = vunpack.c.h.b16 %v559
          %v605 = vunpack.c.l.b16 %v560
          %v606 = vunpack.c.h.b16 %v560
          %v607 = vunpack.c.l.b16 %v561
          %v608 = vunpack.c.h.b16 %v561
          %v609 = vunpack.c.l.b16 %v562
          %v610 = vunpack.c.h.b16 %v562
          %v611 = vunpack.c.l.b16 %v563
          %v612 = vunpack.c.h.b16 %v563
          %v613 = vunpack.c.l.b16 %v564
          %v614 = vunpack.c.h.b16 %v564
          %v615 = vunpack.c.l.b16 %v565
          %v616 = vunpack.c.h.b16 %v565
          %v617 = vunpack.c.l.b16 %v566
          %v618 = vunpack.c.h.b16 %v566
          %v619 = vunpack.c.l.b16 %v567
          %v620 = vunpack.c.h.b16 %v567
          %v621 = vunpack.c.l.b16 %v568
          %v622 = vunpack.c.h.b16 %v568
          %v623 = vpack.c.b16 %v593, %v591
          %v624 = vpack.c.b16 %v594, %v592
          %v625 = vpack.c.b16 %v597, %v595
          %v626 = vpack.c.b16 %v598, %v596
          %v627 = vpack.c.b16 %v601, %v599
          %v628 = vpack.c.b16 %v602, %v600
          %v629 = vpack.c.b16 %v605, %v603
          %v630 = vpack.c.b16 %v606, %v604
          %v631 = vpack.c.b16 %v609, %v607
          %v632 = vpack.c.b16 %v610, %v608
          %v633 = vpack.c.b16 %v613, %v611
          %v634 = vpack.c.b16 %v614, %v612
          %v635 = vpack.c.b16 %v617, %v615
          %v636 = vpack.c.b16 %v618, %v616
          %v637 = vpack.c.b16 %v621, %v619
          %v638 = vpack.c.b16 %v622, %v620
          %655 = vmatprep.subr.bf16.mxu0 %v638
          %656 = vmatpush1.bf16.msra.mxu0 %v637
          %657 = vmatprep.subr.bf16.mxu0 %v636
          %658 = vmatpush1.bf16.msra.mxu0 %v635
          %659 = vmatprep.subr.bf16.mxu0 %v634
          %660 = vmatpush1.bf16.msra.mxu0 %v633
          %661 = vmatprep.subr.bf16.mxu0 %v632
          %662 = vmatpush1.bf16.msra.mxu0 %v631
          %663 = vmatprep.subr.bf16.mxu0 %v630
          %664 = vmatpush1.bf16.msra.mxu0 %v629
          %665 = vmatprep.subr.bf16.mxu0 %v628
          %666 = vmatpush1.bf16.msra.mxu0 %v627
          %667 = vmatprep.subr.bf16.mxu0 %v626
          %668 = vmatpush1.bf16.msra.mxu0 %v625
          %669 = vmatprep.subr.bf16.mxu0 %v624
          %670 = vmatpush1.bf16.msra.mxu0 %v623
          %671 = vmatprep.subr.bf16.mxu0 0
          %672 = vmatpush2.bf16.msra.mxu0 0
          %673 = vmatprep.subr.bf16.mxu0 0
          %674 = vmatpush2.bf16.msra.mxu0 0
          %675 = vmatprep.subr.bf16.mxu0 0
          %676 = vmatpush2.bf16.msra.mxu0 0
          %677 = vmatprep.subr.bf16.mxu0 0
          %678 = vmatpush2.bf16.msra.mxu0 0
          %679 = vmatprep.subr.bf16.mxu0 0
          %680 = vmatpush2.bf16.msra.mxu0 0
          %681 = vmatprep.subr.bf16.mxu0 0
          %682 = vmatpush2.bf16.msra.mxu0 0
          %683 = vmatprep.subr.bf16.mxu0 0
          %684 = vmatpush2.bf16.msra.mxu0 0
          %685 = vmatprep.subr.bf16.mxu0 0
          %686 = vmatpush2.bf16.msra.mxu0 0
          %687 = vmatprep.mubr.bf16.mxu0 0
          %688 = vmatmul.mubr.bf16.gmra.mxu0 %v573
          %v689 = vpop.f32.mrf.mxu0
          %v690 = vadd.f32 0.0, %v689
          %v691 = vpop.f32.mrf.mxu0
          %v692 = vadd.f32 0.0, %v691
          %v693 = vpop.f32.mrf.mxu0
          %v694 = vadd.f32 0.0, %v693
          %v695 = vpop.f32.mrf.mxu0
          %v696 = vadd.f32 0.0, %v695
          %697 = vdwg.mxu0
          %v698 = vpack.c.bf16 %v694, %v690
          %v700 = vunpack.c.l.b16 %v698
          %v701 = vunpack.c.h.b16 %v698
          %v702 = vpack.c.b16 %v700, %v700
          %v703 = vpack.c.b16 %v701, %v701
          %vm706 = vcmask 257024
          %707 = vst.msk [vmem:[#allocation2] sm:$0xf] %vm706, %v702
          %708 = vst.msk [vmem:[#allocation2 + $0x4] sm:$0xf] %vm706, %v703
          %v709 = vpack.c.bf16 %v696, %v692
          %v711 = vunpack.c.l.b16 %v709
          %v712 = vunpack.c.h.b16 %v709
          %v713 = vpack.c.b16 %v711, %v711
          %v714 = vpack.c.b16 %v712, %v712
          %717 = vst.msk [vmem:[#allocation3] sm:$0xf] %vm706, %v713
          %718 = vst.msk [vmem:[#allocation3 + $0x4] sm:$0xf] %vm706, %v714
          %719 = vrot.lane.b32.xlu0 %v702, 96
          %v720 = vpop.permute.xlu0 %719
          %721 = vrot.lane.b32.xlu0 %v703, 96
          %v722 = vpop.permute.xlu0 %721
          %s725 = scalar_lea.vmem [#allocation2], 8
          %726 = vst.msk [vmem:[%s725] sm:$0xf] %vm706, %v720
          %727 = vst.msk [vmem:[%s725 + $0x4] sm:$0xf] %vm706, %v722
          %728 = vrot.lane.b32.xlu0 %v713, 96
          %v729 = vpop.permute.xlu0 %728
          %730 = vrot.lane.b32.xlu0 %v714, 96
          %v731 = vpop.permute.xlu0 %730
          %s734 = scalar_lea.vmem [#allocation3], 8
          %735 = vst.msk [vmem:[%s734] sm:$0xf] %vm706, %v729
          %736 = vst.msk [vmem:[%s734 + $0x4] sm:$0xf] %vm706, %v731
          %737 = vrot.lane.b32.xlu0 %v702, 64
          %v738 = vpop.permute.xlu0 %737
          %739 = vrot.lane.b32.xlu0 %v703, 64
          %v740 = vpop.permute.xlu0 %739
          %s743 = scalar_lea.vmem [#allocation2], 16
          %744 = vst.msk [vmem:[%s743] sm:$0xf] %vm706, %v738
          %745 = vst.msk [vmem:[%s743 + $0x4] sm:$0xf] %vm706, %v740
          %746 = vrot.lane.b32.xlu0 %v713, 64
          %v747 = vpop.permute.xlu0 %746
          %748 = vrot.lane.b32.xlu0 %v714, 64
          %v749 = vpop.permute.xlu0 %748
          %s752 = scalar_lea.vmem [#allocation3], 16
          %753 = vst.msk [vmem:[%s752] sm:$0xf] %vm706, %v747
          %754 = vst.msk [vmem:[%s752 + $0x4] sm:$0xf] %vm706, %v749
          %755 = vrot.lane.b32.xlu0 %v702, 32
          %v756 = vpop.permute.xlu0 %755
          %757 = vrot.lane.b32.xlu0 %v703, 32
          %v758 = vpop.permute.xlu0 %757
          %s761 = scalar_lea.vmem [#allocation2], 24
          %762 = vst.msk [vmem:[%s761] sm:$0xf] %vm706, %v756
          %763 = vst.msk [vmem:[%s761 + $0x4] sm:$0xf] %vm706, %v758
          %764 = vrot.lane.b32.xlu0 %v713, 32
          %v765 = vpop.permute.xlu0 %764
          %766 = vrot.lane.b32.xlu0 %v714, 32
          %v767 = vpop.permute.xlu0 %766
          %s770 = scalar_lea.vmem [#allocation3], 24
          %771 = vst.msk [vmem:[%s770] sm:$0xf] %vm706, %v765
          %772 = vst.msk [vmem:[%s770 + $0x4] sm:$0xf] %vm706, %v767
        $region96: #{tpu_custom_call.1} parent=67 // pred_fallthru
          _
        %v773 = vpack.c.bf16 %v546, %v546
        %v774 = vld [vmem:[#allocation9] sm:$0xf]
        %v775 = vld [vmem:[#allocation9 + $0x4] sm:$0xf]
        %v776 = vld [vmem:[#allocation9 + $0x8] sm:$0xf]
        %v777 = vld [vmem:[#allocation9 + $0xc] sm:$0xf]
        %v778 = vld [vmem:[#allocation9 + $0x10] sm:$0xf]
        %v779 = vld [vmem:[#allocation9 + $0x14] sm:$0xf]
        %v780 = vld [vmem:[#allocation9 + $0x18] sm:$0xf]
        %v781 = vld [vmem:[#allocation9 + $0x1c] sm:$0xf]
        %v782 = vld [vmem:[#allocation9 + $0x20] sm:$0xf]
        %v783 = vld [vmem:[#allocation9 + $0x24] sm:$0xf]
        %v784 = vld [vmem:[#allocation9 + $0x28] sm:$0xf]
        %v785 = vld [vmem:[#allocation9 + $0x2c] sm:$0xf]
        %v786 = vld [vmem:[#allocation9 + $0x30] sm:$0xf]
        %v787 = vld [vmem:[#allocation9 + $0x34] sm:$0xf]
        %v788 = vld [vmem:[#allocation9 + $0x38] sm:$0xf]
        %v789 = vld [vmem:[#allocation9 + $0x3c] sm:$0xf]
        %v806 = vunpack.c.l.b16 %v774
        %v807 = vunpack.c.l.b16 %v775
        %v808 = vunpack.c.l.b16 %v776
        %v809 = vunpack.c.l.b16 %v777
        %v810 = vunpack.c.l.b16 %v778
        %v811 = vunpack.c.l.b16 %v779
        %v812 = vunpack.c.l.b16 %v780
        %v813 = vunpack.c.l.b16 %v781
        %v814 = vunpack.c.l.b16 %v782
        %v815 = vunpack.c.l.b16 %v783
        %v816 = vunpack.c.l.b16 %v784
        %v817 = vunpack.c.l.b16 %v785
        %v818 = vunpack.c.l.b16 %v786
        %v819 = vunpack.c.l.b16 %v787
        %v820 = vunpack.c.l.b16 %v788
        %v821 = vunpack.c.l.b16 %v789
        %v822 = vpack.c.b16 %v807, %v806
        %v823 = vpack.c.b16 %v809, %v808
        %v824 = vpack.c.b16 %v811, %v810
        %v825 = vpack.c.b16 %v813, %v812
        %v826 = vpack.c.b16 %v815, %v814
        %v827 = vpack.c.b16 %v817, %v816
        %v828 = vpack.c.b16 %v819, %v818
        %v829 = vpack.c.b16 %v821, %v820
        %838 = vmatprep.subr.bf16.mxu0 0
        %839 = vmatpush1.bf16.msra.mxu0 %v829
        %840 = vmatprep.subr.bf16.mxu0 0
        %841 = vmatpush1.bf16.msra.mxu0 %v828
        %842 = vmatprep.subr.bf16.mxu0 0
        %843 = vmatpush1.bf16.msra.mxu0 %v827
        %844 = vmatprep.subr.bf16.mxu0 0
        %845 = vmatpush1.bf16.msra.mxu0 %v826
        %846 = vmatprep.subr.bf16.mxu0 0
        %847 = vmatpush1.bf16.msra.mxu0 %v825
        %848 = vmatprep.subr.bf16.mxu0 0
        %849 = vmatpush1.bf16.msra.mxu0 %v824
        %850 = vmatprep.subr.bf16.mxu0 0
        %851 = vmatpush1.bf16.msra.mxu0 %v823
        %852 = vmatprep.subr.bf16.mxu0 0
        %853 = vmatpush1.bf16.msra.mxu0 %v822
        %854 = vmatprep.subr.bf16.mxu0 0
        %855 = vmatpush2.bf16.msra.mxu0 0
        %856 = vmatprep.subr.bf16.mxu0 0
        %857 = vmatpush2.bf16.msra.mxu0 0
        %858 = vmatprep.subr.bf16.mxu0 0
        %859 = vmatpush2.bf16.msra.mxu0 0
        %860 = vmatprep.subr.bf16.mxu0 0
        %861 = vmatpush2.bf16.msra.mxu0 0
        %862 = vmatprep.subr.bf16.mxu0 0
        %863 = vmatpush2.bf16.msra.mxu0 0
        %864 = vmatprep.subr.bf16.mxu0 0
        %865 = vmatpush2.bf16.msra.mxu0 0
        %866 = vmatprep.subr.bf16.mxu0 0
        %867 = vmatpush2.bf16.msra.mxu0 0
        %868 = vmatprep.subr.bf16.mxu0 0
        %869 = vmatpush2.bf16.msra.mxu0 0
        %870 = vmatprep.mubr.bf16.mxu0 0
        %871 = vmatmul.mubr.bf16.gmra.mxu0 %v773
        %v872 = vpop.f32.mrf.mxu0
        %v873 = vadd.f32 0.0, %v872
        %v874 = vpop.f32.mrf.mxu0
        %v875 = vpop.f32.mrf.mxu0
        %v876 = vpop.f32.mrf.mxu0
        %877 = vdwg.mxu0
        %879 = vrot.lane.b32.xlu0 %v873, 96
        %v880 = vpop.permute.xlu0 %879
        %882 = vrot.lane.b32.xlu0 %v873, 64
        %v883 = vpop.permute.xlu0 %882
        %885 = vrot.lane.b32.xlu0 %v873, 32
        %v886 = vpop.permute.xlu0 %885
        %v888 = vpack.c.bf16 %v873, %v873
        %v889 = vpack.c.bf16 %v880, %v880
        %v890 = vpack.c.bf16 %v883, %v883
        %v891 = vpack.c.bf16 %v886, %v886
        %v892 = vld [vmem:[#allocation2] sm:$0xf]
        %v893 = vld [vmem:[#allocation2 + $0x4] sm:$0xf]
        %v894 = vld [vmem:[#allocation2 + $0x8] sm:$0xf]
        %v895 = vld [vmem:[#allocation2 + $0xc] sm:$0xf]
        %v896 = vld [vmem:[#allocation2 + $0x10] sm:$0xf]
        %v897 = vld [vmem:[#allocation2 + $0x14] sm:$0xf]
        %v898 = vld [vmem:[#allocation2 + $0x18] sm:$0xf]
        %v899 = vld [vmem:[#allocation2 + $0x1c] sm:$0xf]
        %v902 = vunpack.c.l.b16 %v892
        %v903 = vunpack.c.l.b16 %v893
        %v904 = vpack.c.b16 %v903, %v902
        %vm905 = vcmask 261120
        %v907 = vsel %vm905, %v888, 0
        %v910 = vsel %vm905, %v904, 0
        %912 = vmatprep.subr.bf16.mxu0 0
        %913 = vmatpush1.bf16.xpose.msra.mxu0 0
        %914 = vmatprep.subr.bf16.mxu0 0
        %915 = vmatpush1.bf16.xpose.msra.mxu0 0
        %916 = vmatprep.subr.bf16.mxu0 0
        %917 = vmatpush1.bf16.xpose.msra.mxu0 0
        %918 = vmatprep.subr.bf16.mxu0 0
        %919 = vmatpush1.bf16.xpose.msra.mxu0 0
        %920 = vmatprep.subr.bf16.mxu0 0
        %921 = vmatpush1.bf16.xpose.msra.mxu0 0
        %922 = vmatprep.subr.bf16.mxu0 0
        %923 = vmatpush1.bf16.xpose.msra.mxu0 0
        %924 = vmatprep.subr.bf16.mxu0 0
        %925 = vmatpush1.bf16.xpose.msra.mxu0 0
        %926 = vmatprep.subr.bf16.mxu0 0
        %927 = vmatpush1.bf16.xpose.msra.mxu0 %v910
        %928 = vmatprep.subr.bf16.mxu0 0
        %929 = vmatpush2.bf16.xpose.msra.mxu0 0
        %930 = vmatprep.subr.bf16.mxu0 0
        %931 = vmatpush2.bf16.xpose.msra.mxu0 0
        %932 = vmatprep.subr.bf16.mxu0 0
        %933 = vmatpush2.bf16.xpose.msra.mxu0 0
        %934 = vmatprep.subr.bf16.mxu0 0
        %935 = vmatpush2.bf16.xpose.msra.mxu0 0
        %936 = vmatprep.subr.bf16.mxu0 0
        %937 = vmatpush2.bf16.xpose.msra.mxu0 0
        %938 = vmatprep.subr.bf16.mxu0 0
        %939 = vmatpush2.bf16.xpose.msra.mxu0 0
        %940 = vmatprep.subr.bf16.mxu0 0
        %941 = vmatpush2.bf16.xpose.msra.mxu0 0
        %942 = vmatprep.subr.bf16.mxu0 0
        %943 = vmatpush2.bf16.xpose.msra.mxu0 0
        %944 = vmatprep.mubr.bf16.mxu0 0
        %945 = vmatmul.mubr.bf16.gmra.mxu0 %v907
        %v946 = vpop.f32.mrf.mxu0
        %v947 = vadd.f32 0.0, %v946
        %v948 = vpop.f32.mrf.mxu0
        %v949 = vpop.f32.mrf.mxu0
        %v950 = vpop.f32.mrf.mxu0
        %951 = vdwg.mxu0
        %v954 = vunpack.c.l.b16 %v894
        %v955 = vunpack.c.l.b16 %v895
        %v956 = vpack.c.b16 %v955, %v954
        %v958 = vsel %vm905, %v889, 0
        %v961 = vsel %vm905, %v956, 0
        %963 = vmatprep.subr.bf16.mxu0 0
        %964 = vmatpush1.bf16.xpose.msra.mxu0 0
        %965 = vmatprep.subr.bf16.mxu0 0
        %966 = vmatpush1.bf16.xpose.msra.mxu0 0
        %967 = vmatprep.subr.bf16.mxu0 0
        %968 = vmatpush1.bf16.xpose.msra.mxu0 0
        %969 = vmatprep.subr.bf16.mxu0 0
        %970 = vmatpush1.bf16.xpose.msra.mxu0 0
        %971 = vmatprep.subr.bf16.mxu0 0
        %972 = vmatpush1.bf16.xpose.msra.mxu0 0
        %973 = vmatprep.subr.bf16.mxu0 0
        %974 = vmatpush1.bf16.xpose.msra.mxu0 0
        %975 = vmatprep.subr.bf16.mxu0 0
        %976 = vmatpush1.bf16.xpose.msra.mxu0 0
        %977 = vmatprep.subr.bf16.mxu0 0
        %978 = vmatpush1.bf16.xpose.msra.mxu0 %v961
        %979 = vmatprep.subr.bf16.mxu0 0
        %980 = vmatpush2.bf16.xpose.msra.mxu0 0
        %981 = vmatprep.subr.bf16.mxu0 0
        %982 = vmatpush2.bf16.xpose.msra.mxu0 0
        %983 = vmatprep.subr.bf16.mxu0 0
        %984 = vmatpush2.bf16.xpose.msra.mxu0 0
        %985 = vmatprep.subr.bf16.mxu0 0
        %986 = vmatpush2.bf16.xpose.msra.mxu0 0
        %987 = vmatprep.subr.bf16.mxu0 0
        %988 = vmatpush2.bf16.xpose.msra.mxu0 0
        %989 = vmatprep.subr.bf16.mxu0 0
        %990 = vmatpush2.bf16.xpose.msra.mxu0 0
        %991 = vmatprep.subr.bf16.mxu0 0
        %992 = vmatpush2.bf16.xpose.msra.mxu0 0
        %993 = vmatprep.subr.bf16.mxu0 0
        %994 = vmatpush2.bf16.xpose.msra.mxu0 0
        %995 = vmatprep.mubr.bf16.mxu0 0
        %996 = vmatmul.mubr.bf16.gmra.mxu0 %v958
        %v997 = vpop.f32.mrf.mxu0
        %v998 = vadd.f32 0.0, %v997
        %v999 = vpop.f32.mrf.mxu0
        %v1000 = vpop.f32.mrf.mxu0
        %v1001 = vpop.f32.mrf.mxu0
        %1002 = vdwg.mxu0
        %v1005 = vunpack.c.l.b16 %v896
        %v1006 = vunpack.c.l.b16 %v897
        %v1007 = vpack.c.b16 %v1006, %v1005
        %v1009 = vsel %vm905, %v890, 0
        %v1012 = vsel %vm905, %v1007, 0
        %1014 = vmatprep.subr.bf16.mxu0 0
        %1015 = vmatpush1.bf16.xpose.msra.mxu0 0
        %1016 = vmatprep.subr.bf16.mxu0 0
        %1017 = vmatpush1.bf16.xpose.msra.mxu0 0
        %1018 = vmatprep.subr.bf16.mxu0 0
        %1019 = vmatpush1.bf16.xpose.msra.mxu0 0
        %1020 = vmatprep.subr.bf16.mxu0 0
        %1021 = vmatpush1.bf16.xpose.msra.mxu0 0
        %1022 = vmatprep.subr.bf16.mxu0 0
        %1023 = vmatpush1.bf16.xpose.msra.mxu0 0
        %1024 = vmatprep.subr.bf16.mxu0 0
        %1025 = vmatpush1.bf16.xpose.msra.mxu0 0
        %1026 = vmatprep.subr.bf16.mxu0 0
        %1027 = vmatpush1.bf16.xpose.msra.mxu0 0
        %1028 = vmatprep.subr.bf16.mxu0 0
        %1029 = vmatpush1.bf16.xpose.msra.mxu0 %v1012
        %1030 = vmatprep.subr.bf16.mxu0 0
        %1031 = vmatpush2.bf16.xpose.msra.mxu0 0
        %1032 = vmatprep.subr.bf16.mxu0 0
        %1033 = vmatpush2.bf16.xpose.msra.mxu0 0
        %1034 = vmatprep.subr.bf16.mxu0 0
        %1035 = vmatpush2.bf16.xpose.msra.mxu0 0
        %1036 = vmatprep.subr.bf16.mxu0 0
        %1037 = vmatpush2.bf16.xpose.msra.mxu0 0
        %1038 = vmatprep.subr.bf16.mxu0 0
        %1039 = vmatpush2.bf16.xpose.msra.mxu0 0
        %1040 = vmatprep.subr.bf16.mxu0 0
        %1041 = vmatpush2.bf16.xpose.msra.mxu0 0
        %1042 = vmatprep.subr.bf16.mxu0 0
        %1043 = vmatpush2.bf16.xpose.msra.mxu0 0
        %1044 = vmatprep.subr.bf16.mxu0 0
        %1045 = vmatpush2.bf16.xpose.msra.mxu0 0
        %1046 = vmatprep.mubr.bf16.mxu0 0
        %1047 = vmatmul.mubr.bf16.gmra.mxu0 %v1009
        %v1048 = vpop.f32.mrf.mxu0
        %v1049 = vadd.f32 0.0, %v1048
        %v1050 = vpop.f32.mrf.mxu0
        %v1051 = vpop.f32.mrf.mxu0
        %v1052 = vpop.f32.mrf.mxu0
        %1053 = vdwg.mxu0
        %v1056 = vunpack.c.l.b16 %v898
        %v1057 = vunpack.c.l.b16 %v899
        %v1058 = vpack.c.b16 %v1057, %v1056
        %v1060 = vsel %vm905, %v891, 0
        %v1063 = vsel %vm905, %v1058, 0
        %1065 = vmatprep.subr.bf16.mxu0 0
        %1066 = vmatpush1.bf16.xpose.msra.mxu0 0
        %1067 = vmatprep.subr.bf16.mxu0 0
        %1068 = vmatpush1.bf16.xpose.msra.mxu0 0
        %1069 = vmatprep.subr.bf16.mxu0 0
        %1070 = vmatpush1.bf16.xpose.msra.mxu0 0
        %1071 = vmatprep.subr.bf16.mxu0 0
        %1072 = vmatpush1.bf16.xpose.msra.mxu0 0
        %1073 = vmatprep.subr.bf16.mxu0 0
        %1074 = vmatpush1.bf16.xpose.msra.mxu0 0
        %1075 = vmatprep.subr.bf16.mxu0 0
        %1076 = vmatpush1.bf16.xpose.msra.mxu0 0
        %1077 = vmatprep.subr.bf16.mxu0 0
        %1078 = vmatpush1.bf16.xpose.msra.mxu0 0
        %1079 = vmatprep.subr.bf16.mxu0 0
        %1080 = vmatpush1.bf16.xpose.msra.mxu0 %v1063
        %1081 = vmatprep.subr.bf16.mxu0 0
        %1082 = vmatpush2.bf16.xpose.msra.mxu0 0
        %1083 = vmatprep.subr.bf16.mxu0 0
        %1084 = vmatpush2.bf16.xpose.msra.mxu0 0
        %1085 = vmatprep.subr.bf16.mxu0 0
        %1086 = vmatpush2.bf16.xpose.msra.mxu0 0
        %1087 = vmatprep.subr.bf16.mxu0 0
        %1088 = vmatpush2.bf16.xpose.msra.mxu0 0
        %1089 = vmatprep.subr.bf16.mxu0 0
        %1090 = vmatpush2.bf16.xpose.msra.mxu0 0
        %1091 = vmatprep.subr.bf16.mxu0 0
        %1092 = vmatpush2.bf16.xpose.msra.mxu0 0
        %1093 = vmatprep.subr.bf16.mxu0 0
        %1094 = vmatpush2.bf16.xpose.msra.mxu0 0
        %1095 = vmatprep.subr.bf16.mxu0 0
        %1096 = vmatpush2.bf16.xpose.msra.mxu0 0
        %1097 = vmatprep.mubr.bf16.mxu0 0
        %1098 = vmatmul.mubr.bf16.gmra.mxu0 %v1060
        %v1099 = vpop.f32.mrf.mxu0
        %v1100 = vadd.f32 0.0, %v1099
        %v1101 = vpop.f32.mrf.mxu0
        %v1102 = vpop.f32.mrf.mxu0
        %v1103 = vpop.f32.mrf.mxu0
        %1104 = vdwg.mxu0
        %vm1105 = vcmask 130048
        %v1106 = vsel %vm1105, %v947, -inf
        %1107 = vmax.xlane.f32.xlu0 %v1106
        %v1108 = vpop.xlane.xlu0 %1107
        %v1109 = vsel %vm1105, %v998, -inf
        %1110 = vmax.xlane.f32.xlu0 %v1109
        %v1111 = vpop.xlane.xlu0 %1110
        %v1112 = vsel %vm1105, %v1049, -inf
        %1113 = vmax.xlane.f32.xlu0 %v1112
        %v1114 = vpop.xlane.xlu0 %1113
        %v1115 = vsel %vm1105, %v1100, -inf
        %1116 = vmax.xlane.f32.xlu0 %v1115
        %v1117 = vpop.xlane.xlu0 %1116
        %v1118 = vsub.f32 %v947, %v1108
        %v1119 = vsub.f32 %v998, %v1111
        %v1120 = vsub.f32 %v1049, %v1114
        %v1121 = vsub.f32 %v1100, %v1117
        %v1122 = vmul.f32 %v1118, 1.442695
        %v1123 = vpow.pop %v1122
        %v1124 = vmul.f32 %v1119, 1.442695
        %v1125 = vpow.pop %v1124
        %v1126 = vmul.f32 %v1120, 1.442695
        %v1127 = vpow.pop %v1126
        %v1128 = vmul.f32 %v1121, 1.442695
        %v1129 = vpow.pop %v1128
        %v1130 = vsel %vm1105, %v1123, 0.0
        %1131 = vadd.xlane.f32.xlu0 %v1130
        %v1132 = vpop.xlane.xlu0 %1131
        %v1133 = vsel %vm1105, %v1125, 0.0
        %1134 = vadd.xlane.f32.xlu0 %v1133
        %v1135 = vpop.xlane.xlu0 %1134
        %v1136 = vsel %vm1105, %v1127, 0.0
        %1137 = vadd.xlane.f32.xlu0 %v1136
        %v1138 = vpop.xlane.xlu0 %1137
        %v1139 = vsel %vm1105, %v1129, 0.0
        %1140 = vadd.xlane.f32.xlu0 %v1139
        %v1141 = vpop.xlane.xlu0 %1140
        %v1142 = vrcp.pop %v1132
        %v1143 = vmul.f32 %v1123, %v1142
        %v1144 = vrcp.pop %v1135
        %v1145 = vmul.f32 %v1125, %v1144
        %v1146 = vrcp.pop %v1138
        %v1147 = vmul.f32 %v1127, %v1146
        %v1148 = vrcp.pop %v1141
        %v1149 = vmul.f32 %v1129, %v1148
        %v1150 = vpack.c.bf16 %v1143, %v1143
        %v1151 = vpack.c.bf16 %v1145, %v1145
        %v1152 = vpack.c.bf16 %v1147, %v1147
        %v1153 = vpack.c.bf16 %v1149, %v1149
        %v1154 = vld [vmem:[#allocation3] sm:$0xf]
        %v1155 = vld [vmem:[#allocation3 + $0x4] sm:$0xf]
        %v1156 = vld [vmem:[#allocation3 + $0x8] sm:$0xf]
        %v1157 = vld [vmem:[#allocation3 + $0xc] sm:$0xf]
        %v1158 = vld [vmem:[#allocation3 + $0x10] sm:$0xf]
        %v1159 = vld [vmem:[#allocation3 + $0x14] sm:$0xf]
        %v1160 = vld [vmem:[#allocation3 + $0x18] sm:$0xf]
        %v1161 = vld [vmem:[#allocation3 + $0x1c] sm:$0xf]
        %v1164 = vunpack.c.l.b16 %v1154
        %v1165 = vunpack.c.l.b16 %v1155
        %v1166 = vpack.c.b16 %v1165, %v1164
        %v1169 = vsel %vm1105, %v1150, 0
        %1171 = vmatprep.subr.bf16.mxu0 0
        %1172 = vmatpush1.bf16.msra.mxu0 0
        %1173 = vmatprep.subr.bf16.mxu0 0
        %1174 = vmatpush1.bf16.msra.mxu0 0
        %1175 = vmatprep.subr.bf16.mxu0 0
        %1176 = vmatpush1.bf16.msra.mxu0 0
        %1177 = vmatprep.subr.bf16.mxu0 0
        %1178 = vmatpush1.bf16.msra.mxu0 0
        %1179 = vmatprep.subr.bf16.mxu0 0
        %1180 = vmatpush1.bf16.msra.mxu0 0
        %1181 = vmatprep.subr.bf16.mxu0 0
        %1182 = vmatpush1.bf16.msra.mxu0 0
        %1183 = vmatprep.subr.bf16.mxu0 0
        %1184 = vmatpush1.bf16.msra.mxu0 0
        %1185 = vmatprep.subr.bf16.mxu0 0
        %1186 = vmatpush1.bf16.msra.mxu0 %v1166
        %1187 = vmatprep.subr.bf16.mxu0 0
        %1188 = vmatpush2.bf16.msra.mxu0 0
        %1189 = vmatprep.subr.bf16.mxu0 0
        %1190 = vmatpush2.bf16.msra.mxu0 0
        %1191 = vmatprep.subr.bf16.mxu0 0
        %1192 = vmatpush2.bf16.msra.mxu0 0
        %1193 = vmatprep.subr.bf16.mxu0 0
        %1194 = vmatpush2.bf16.msra.mxu0 0
        %1195 = vmatprep.subr.bf16.mxu0 0
        %1196 = vmatpush2.bf16.msra.mxu0 0
        %1197 = vmatprep.subr.bf16.mxu0 0
        %1198 = vmatpush2.bf16.msra.mxu0 0
        %1199 = vmatprep.subr.bf16.mxu0 0
        %1200 = vmatpush2.bf16.msra.mxu0 0
        %1201 = vmatprep.subr.bf16.mxu0 0
        %1202 = vmatpush2.bf16.msra.mxu0 0
        %1203 = vmatprep.mubr.bf16.mxu0 0
        %1204 = vmatmul.mubr.bf16.gmra.mxu0 %v1169
        %v1205 = vpop.f32.mrf.mxu0
        %v1206 = vadd.f32 0.0, %v1205
        %v1207 = vpop.f32.mrf.mxu0
        %v1208 = vpop.f32.mrf.mxu0
        %v1209 = vpop.f32.mrf.mxu0
        %1210 = vdwg.mxu0
        %v1213 = vunpack.c.l.b16 %v1156
        %v1214 = vunpack.c.l.b16 %v1157
        %v1215 = vpack.c.b16 %v1214, %v1213
        %v1218 = vsel %vm1105, %v1151, 0
        %1220 = vmatprep.subr.bf16.mxu0 0
        %1221 = vmatpush1.bf16.msra.mxu0 0
        %1222 = vmatprep.subr.bf16.mxu0 0
        %1223 = vmatpush1.bf16.msra.mxu0 0
        %1224 = vmatprep.subr.bf16.mxu0 0
        %1225 = vmatpush1.bf16.msra.mxu0 0
        %1226 = vmatprep.subr.bf16.mxu0 0
        %1227 = vmatpush1.bf16.msra.mxu0 0
        %1228 = vmatprep.subr.bf16.mxu0 0
        %1229 = vmatpush1.bf16.msra.mxu0 0
        %1230 = vmatprep.subr.bf16.mxu0 0
        %1231 = vmatpush1.bf16.msra.mxu0 0
        %1232 = vmatprep.subr.bf16.mxu0 0
        %1233 = vmatpush1.bf16.msra.mxu0 0
        %1234 = vmatprep.subr.bf16.mxu0 0
        %1235 = vmatpush1.bf16.msra.mxu0 %v1215
        %1236 = vmatprep.subr.bf16.mxu0 0
        %1237 = vmatpush2.bf16.msra.mxu0 0
        %1238 = vmatprep.subr.bf16.mxu0 0
        %1239 = vmatpush2.bf16.msra.mxu0 0
        %1240 = vmatprep.subr.bf16.mxu0 0
        %1241 = vmatpush2.bf16.msra.mxu0 0
        %1242 = vmatprep.subr.bf16.mxu0 0
        %1243 = vmatpush2.bf16.msra.mxu0 0
        %1244 = vmatprep.subr.bf16.mxu0 0
        %1245 = vmatpush2.bf16.msra.mxu0 0
        %1246 = vmatprep.subr.bf16.mxu0 0
        %1247 = vmatpush2.bf16.msra.mxu0 0
        %1248 = vmatprep.subr.bf16.mxu0 0
        %1249 = vmatpush2.bf16.msra.mxu0 0
        %1250 = vmatprep.subr.bf16.mxu0 0
        %1251 = vmatpush2.bf16.msra.mxu0 0
        %1252 = vmatprep.mubr.bf16.mxu0 0
        %1253 = vmatmul.mubr.bf16.gmra.mxu0 %v1218
        %v1254 = vpop.f32.mrf.mxu0
        %v1255 = vadd.f32 0.0, %v1254
        %v1256 = vpop.f32.mrf.mxu0
        %v1257 = vpop.f32.mrf.mxu0
        %v1258 = vpop.f32.mrf.mxu0
        %1259 = vdwg.mxu0
        %v1262 = vunpack.c.l.b16 %v1158
        %v1263 = vunpack.c.l.b16 %v1159
        %v1264 = vpack.c.b16 %v1263, %v1262
        %v1267 = vsel %vm1105, %v1152, 0
        %1269 = vmatprep.subr.bf16.mxu0 0
        %1270 = vmatpush1.bf16.msra.mxu0 0
        %1271 = vmatprep.subr.bf16.mxu0 0
        %1272 = vmatpush1.bf16.msra.mxu0 0
        %1273 = vmatprep.subr.bf16.mxu0 0
        %1274 = vmatpush1.bf16.msra.mxu0 0
        %1275 = vmatprep.subr.bf16.mxu0 0
        %1276 = vmatpush1.bf16.msra.mxu0 0
        %1277 = vmatprep.subr.bf16.mxu0 0
        %1278 = vmatpush1.bf16.msra.mxu0 0
        %1279 = vmatprep.subr.bf16.mxu0 0
        %1280 = vmatpush1.bf16.msra.mxu0 0
        %1281 = vmatprep.subr.bf16.mxu0 0
        %1282 = vmatpush1.bf16.msra.mxu0 0
        %1283 = vmatprep.subr.bf16.mxu0 0
        %1284 = vmatpush1.bf16.msra.mxu0 %v1264
        %1285 = vmatprep.subr.bf16.mxu0 0
        %1286 = vmatpush2.bf16.msra.mxu0 0
        %1287 = vmatprep.subr.bf16.mxu0 0
        %1288 = vmatpush2.bf16.msra.mxu0 0
        %1289 = vmatprep.subr.bf16.mxu0 0
        %1290 = vmatpush2.bf16.msra.mxu0 0
        %1291 = vmatprep.subr.bf16.mxu0 0
        %1292 = vmatpush2.bf16.msra.mxu0 0
        %1293 = vmatprep.subr.bf16.mxu0 0
        %1294 = vmatpush2.bf16.msra.mxu0 0
        %1295 = vmatprep.subr.bf16.mxu0 0
        %1296 = vmatpush2.bf16.msra.mxu0 0
        %1297 = vmatprep.subr.bf16.mxu0 0
        %1298 = vmatpush2.bf16.msra.mxu0 0
        %1299 = vmatprep.subr.bf16.mxu0 0
        %1300 = vmatpush2.bf16.msra.mxu0 0
        %1301 = vmatprep.mubr.bf16.mxu0 0
        %1302 = vmatmul.mubr.bf16.gmra.mxu0 %v1267
        %v1303 = vpop.f32.mrf.mxu0
        %v1304 = vadd.f32 0.0, %v1303
        %v1305 = vpop.f32.mrf.mxu0
        %v1306 = vpop.f32.mrf.mxu0
        %v1307 = vpop.f32.mrf.mxu0
        %1308 = vdwg.mxu0
        %v1311 = vunpack.c.l.b16 %v1160
        %v1312 = vunpack.c.l.b16 %v1161
        %v1313 = vpack.c.b16 %v1312, %v1311
        %v1316 = vsel %vm1105, %v1153, 0
        %1318 = vmatprep.subr.bf16.mxu0 0
        %1319 = vmatpush1.bf16.msra.mxu0 0
        %1320 = vmatprep.subr.bf16.mxu0 0
        %1321 = vmatpush1.bf16.msra.mxu0 0
        %1322 = vmatprep.subr.bf16.mxu0 0
        %1323 = vmatpush1.bf16.msra.mxu0 0
        %1324 = vmatprep.subr.bf16.mxu0 0
        %1325 = vmatpush1.bf16.msra.mxu0 0
        %1326 = vmatprep.subr.bf16.mxu0 0
        %1327 = vmatpush1.bf16.msra.mxu0 0
        %1328 = vmatprep.subr.bf16.mxu0 0
        %1329 = vmatpush1.bf16.msra.mxu0 0
        %1330 = vmatprep.subr.bf16.mxu0 0
        %1331 = vmatpush1.bf16.msra.mxu0 0
        %1332 = vmatprep.subr.bf16.mxu0 0
        %1333 = vmatpush1.bf16.msra.mxu0 %v1313
        %1334 = vmatprep.subr.bf16.mxu0 0
        %1335 = vmatpush2.bf16.msra.mxu0 0
        %1336 = vmatprep.subr.bf16.mxu0 0
        %1337 = vmatpush2.bf16.msra.mxu0 0
        %1338 = vmatprep.subr.bf16.mxu0 0
        %1339 = vmatpush2.bf16.msra.mxu0 0
        %1340 = vmatprep.subr.bf16.mxu0 0
        %1341 = vmatpush2.bf16.msra.mxu0 0
        %1342 = vmatprep.subr.bf16.mxu0 0
        %1343 = vmatpush2.bf16.msra.mxu0 0
        %1344 = vmatprep.subr.bf16.mxu0 0
        %1345 = vmatpush2.bf16.msra.mxu0 0
        %1346 = vmatprep.subr.bf16.mxu0 0
        %1347 = vmatpush2.bf16.msra.mxu0 0
        %1348 = vmatprep.subr.bf16.mxu0 0
        %1349 = vmatpush2.bf16.msra.mxu0 0
        %1350 = vmatprep.mubr.bf16.mxu0 0
        %1351 = vmatmul.mubr.bf16.gmra.mxu0 %v1316
        %v1352 = vpop.f32.mrf.mxu0
        %v1353 = vadd.f32 0.0, %v1352
        %v1354 = vpop.f32.mrf.mxu0
        %v1355 = vpop.f32.mrf.mxu0
        %v1356 = vpop.f32.mrf.mxu0
        %1357 = vdwg.mxu0
        %1359 = vrot.lane.b32.xlu0 %v1255, 32
        %v1360 = vpop.permute.xlu0 %1359
        %1363 = vrot.lane.b32.xlu0 %v1304, 64
        %v1364 = vpop.permute.xlu0 %1363
        %1367 = vrot.lane.b32.xlu0 %v1353, 96
        %v1368 = vpop.permute.xlu0 %1367
        %v1370 = vsel %vm905, %v1206, %v1360
        %vm1371 = vcmask 523264
        %v1372 = vsel %vm1371, %v1370, %v1364
        %vm1373 = vcmask 785408
        %v1374 = vsel %vm1373, %v1372, %v1368
        %v1375 = vadd.f32 %v546, %v1374
        %1376 = vadd.xlane.f32.xlu0 %v1375
        %v1377 = vpop.xlane.xlu0 %1376
        %v1378 = vrcp.pop 128.0
        %v1379 = vmul.f32 %v1377, %v1378
        %v1380 = vsub.f32 %v1375, %v1379
        %v1381 = vmul.f32 %v1380, %v1380
        %1382 = vadd.xlane.f32.xlu0 %v1381
        %v1383 = vpop.xlane.xlu0 %1382
        %v1384 = vmul.f32 %v1383, %v1378
        %v1385 = vadd.f32 %v1384, 1e-05
        %v1386 = vrsqrt.pop %v1385
        %v1387 = vmul.f32 %v1380, %v1386
        %v1388 = vld [vmem:[%s4] sm:$0x1]
        %v1390 = vlaneseq
        %v1391 = vshrl.u32 %v1390, 7
        %v1392 = vsub.s32 0, %v1391
        %v1393 = vrot.slane %v1388, %v1392
        %v1395 = vmul.f32 %v1387, %v1393
        %v1396 = vld [vmem:[%s5] sm:$0x1]
        %v1398 = vlaneseq
        %v1399 = vshrl.u32 %v1398, 7
        %v1400 = vsub.s32 0, %v1399
        %v1401 = vrot.slane %v1396, %v1400
        %v1403 = vadd.f32 %v1395, %v1401
        %v1404 = vpack.c.bf16 %v1403, %v1403
        %v1405 = vld [vmem:[#allocation12] sm:$0xff]
        %v1406 = vld [vmem:[#allocation12 + $0x8] sm:$0xff]
        %v1407 = vld [vmem:[#allocation12 + $0x10] sm:$0xff]
        %v1408 = vld [vmem:[#allocation12 + $0x18] sm:$0xff]
        %v1409 = vld [vmem:[#allocation12 + $0x20] sm:$0xff]
        %v1410 = vld [vmem:[#allocation12 + $0x28] sm:$0xff]
        %v1411 = vld [vmem:[#allocation12 + $0x30] sm:$0xff]
        %v1412 = vld [vmem:[#allocation12 + $0x38] sm:$0xff]
        %v1413 = vld [vmem:[#allocation12 + $0x40] sm:$0xff]
        %v1414 = vld [vmem:[#allocation12 + $0x48] sm:$0xff]
        %v1415 = vld [vmem:[#allocation12 + $0x50] sm:$0xff]
        %v1416 = vld [vmem:[#allocation12 + $0x58] sm:$0xff]
        %v1417 = vld [vmem:[#allocation12 + $0x60] sm:$0xff]
        %v1418 = vld [vmem:[#allocation12 + $0x68] sm:$0xff]
        %v1419 = vld [vmem:[#allocation12 + $0x70] sm:$0xff]
        %v1420 = vld [vmem:[#allocation12 + $0x78] sm:$0xff]
        %v1421 = vld [vmem:[#allocation12 + $0x80] sm:$0xff]
        %v1422 = vld [vmem:[#allocation12 + $0x88] sm:$0xff]
        %v1423 = vld [vmem:[#allocation12 + $0x90] sm:$0xff]
        %v1424 = vld [vmem:[#allocation12 + $0x98] sm:$0xff]
        %v1425 = vld [vmem:[#allocation12 + $0xa0] sm:$0xff]
        %v1426 = vld [vmem:[#allocation12 + $0xa8] sm:$0xff]
        %v1427 = vld [vmem:[#allocation12 + $0xb0] sm:$0xff]
        %v1428 = vld [vmem:[#allocation12 + $0xb8] sm:$0xff]
        %v1429 = vld [vmem:[#allocation12 + $0xc0] sm:$0xff]
        %v1430 = vld [vmem:[#allocation12 + $0xc8] sm:$0xff]
        %v1431 = vld [vmem:[#allocation12 + $0xd0] sm:$0xff]
        %v1432 = vld [vmem:[#allocation12 + $0xd8] sm:$0xff]
        %v1433 = vld [vmem:[#allocation12 + $0xe0] sm:$0xff]
        %v1434 = vld [vmem:[#allocation12 + $0xe8] sm:$0xff]
        %v1435 = vld [vmem:[#allocation12 + $0xf0] sm:$0xff]
        %v1436 = vld [vmem:[#allocation12 + $0xf8] sm:$0xff]
        %v1437 = vld [vmem:[%s7] sm:$0xf]
        %v1439 = vlaneseq
        %v1440 = vshrl.u32 %v1439, 7
        %v1441 = vsub.s32 0, %v1440
        %v1442 = vrot.slane %v1437, %v1441
        %v1443 = vlaneseq
        %v1444 = vshrl.u32 %v1443, 7
        %v1445 = vsub.s32 1, %v1444
        %v1446 = vrot.slane %v1437, %v1445
        %v1447 = vlaneseq
        %v1448 = vshrl.u32 %v1447, 7
        %v1449 = vsub.s32 2, %v1448
        %v1450 = vrot.slane %v1437, %v1449
        %v1451 = vlaneseq
        %v1452 = vshrl.u32 %v1451, 7
        %v1453 = vsub.s32 3, %v1452
        %v1454 = vrot.slane %v1437, %v1453
        %v1491 = vunpack.c.l.b16 %v1405
        %v1492 = vunpack.c.h.b16 %v1405
        %v1493 = vunpack.c.l.b16 %v1406
        %v1494 = vunpack.c.h.b16 %v1406
        %v1495 = vunpack.c.l.b16 %v1407
        %v1496 = vunpack.c.h.b16 %v1407
        %v1497 = vunpack.c.l.b16 %v1408
        %v1498 = vunpack.c.h.b16 %v1408
        %v1499 = vunpack.c.l.b16 %v1409
        %v1500 = vunpack.c.h.b16 %v1409
        %v1501 = vunpack.c.l.b16 %v1410
        %v1502 = vunpack.c.h.b16 %v1410
        %v1503 = vunpack.c.l.b16 %v1411
        %v1504 = vunpack.c.h.b16 %v1411
        %v1505 = vunpack.c.l.b16 %v1412
        %v1506 = vunpack.c.h.b16 %v1412
        %v1507 = vunpack.c.l.b16 %v1413
        %v1508 = vunpack.c.h.b16 %v1413
        %v1509 = vunpack.c.l.b16 %v1414
        %v1510 = vunpack.c.h.b16 %v1414
        %v1511 = vunpack.c.l.b16 %v1415
        %v1512 = vunpack.c.h.b16 %v1415
        %v1513 = vunpack.c.l.b16 %v1416
        %v1514 = vunpack.c.h.b16 %v1416
        %v1515 = vunpack.c.l.b16 %v1417
        %v1516 = vunpack.c.h.b16 %v1417
        %v1517 = vunpack.c.l.b16 %v1418
        %v1518 = vunpack.c.h.b16 %v1418
        %v1519 = vunpack.c.l.b16 %v1419
        %v1520 = vunpack.c.h.b16 %v1419
        %v1521 = vunpack.c.l.b16 %v1420
        %v1522 = vunpack.c.h.b16 %v1420
        %v1523 = vunpack.c.l.b16 %v1421
        %v1524 = vunpack.c.h.b16 %v1421
        %v1525 = vunpack.c.l.b16 %v1422
        %v1526 = vunpack.c.h.b16 %v1422
        %v1527 = vunpack.c.l.b16 %v1423
        %v1528 = vunpack.c.h.b16 %v1423
        %v1529 = vunpack.c.l.b16 %v1424
        %v1530 = vunpack.c.h.b16 %v1424
        %v1531 = vunpack.c.l.b16 %v1425
        %v1532 = vunpack.c.h.b16 %v1425
        %v1533 = vunpack.c.l.b16 %v1426
        %v1534 = vunpack.c.h.b16 %v1426
        %v1535 = vunpack.c.l.b16 %v1427
        %v1536 = vunpack.c.h.b16 %v1427
        %v1537 = vunpack.c.l.b16 %v1428
        %v1538 = vunpack.c.h.b16 %v1428
        %v1539 = vunpack.c.l.b16 %v1429
        %v1540 = vunpack.c.h.b16 %v1429
        %v1541 = vunpack.c.l.b16 %v1430
        %v1542 = vunpack.c.h.b16 %v1430
        %v1543 = vunpack.c.l.b16 %v1431
        %v1544 = vunpack.c.h.b16 %v1431
        %v1545 = vunpack.c.l.b16 %v1432
        %v1546 = vunpack.c.h.b16 %v1432
        %v1547 = vunpack.c.l.b16 %v1433
        %v1548 = vunpack.c.h.b16 %v1433
        %v1549 = vunpack.c.l.b16 %v1434
        %v1550 = vunpack.c.h.b16 %v1434
        %v1551 = vunpack.c.l.b16 %v1435
        %v1552 = vunpack.c.h.b16 %v1435
        %v1553 = vunpack.c.l.b16 %v1436
        %v1554 = vunpack.c.h.b16 %v1436
        %v1555 = vpack.c.b16 %v1495, %v1491
        %v1556 = vpack.c.b16 %v1496, %v1492
        %v1557 = vpack.c.b16 %v1497, %v1493
        %v1558 = vpack.c.b16 %v1498, %v1494
        %v1559 = vpack.c.b16 %v1503, %v1499
        %v1560 = vpack.c.b16 %v1504, %v1500
        %v1561 = vpack.c.b16 %v1505, %v1501
        %v1562 = vpack.c.b16 %v1506, %v1502
        %v1563 = vpack.c.b16 %v1511, %v1507
        %v1564 = vpack.c.b16 %v1512, %v1508
        %v1565 = vpack.c.b16 %v1513, %v1509
        %v1566 = vpack.c.b16 %v1514, %v1510
        %v1567 = vpack.c.b16 %v1519, %v1515
        %v1568 = vpack.c.b16 %v1520, %v1516
        %v1569 = vpack.c.b16 %v1521, %v1517
        %v1570 = vpack.c.b16 %v1522, %v1518
        %v1571 = vpack.c.b16 %v1527, %v1523
        %v1572 = vpack.c.b16 %v1528, %v1524
        %v1573 = vpack.c.b16 %v1529, %v1525
        %v1574 = vpack.c.b16 %v1530, %v1526
        %v1575 = vpack.c.b16 %v1535, %v1531
        %v1576 = vpack.c.b16 %v1536, %v1532
        %v1577 = vpack.c.b16 %v1537, %v1533
        %v1578 = vpack.c.b16 %v1538, %v1534
        %v1579 = vpack.c.b16 %v1543, %v1539
        %v1580 = vpack.c.b16 %v1544, %v1540
        %v1581 = vpack.c.b16 %v1545, %v1541
        %v1582 = vpack.c.b16 %v1546, %v1542
        %v1583 = vpack.c.b16 %v1551, %v1547
        %v1584 = vpack.c.b16 %v1552, %v1548
        %v1585 = vpack.c.b16 %v1553, %v1549
        %v1586 = vpack.c.b16 %v1554, %v1550
        %1619 = vmatprep.subr.bf16.mxu0 %v1584
        %1620 = vmatpush1.bf16.msra.mxu0 %v1583
        %1621 = vmatprep.subr.bf16.mxu0 %v1580
        %1622 = vmatpush1.bf16.msra.mxu0 %v1579
        %1623 = vmatprep.subr.bf16.mxu0 %v1576
        %1624 = vmatpush1.bf16.msra.mxu0 %v1575
        %1625 = vmatprep.subr.bf16.mxu0 %v1572
        %1626 = vmatpush1.bf16.msra.mxu0 %v1571
        %1627 = vmatprep.subr.bf16.mxu0 %v1568
        %1628 = vmatpush1.bf16.msra.mxu0 %v1567
        %1629 = vmatprep.subr.bf16.mxu0 %v1564
        %1630 = vmatpush1.bf16.msra.mxu0 %v1563
        %1631 = vmatprep.subr.bf16.mxu0 %v1560
        %1632 = vmatpush1.bf16.msra.mxu0 %v1559
        %1633 = vmatprep.subr.bf16.mxu0 %v1556
        %1634 = vmatpush1.bf16.msra.mxu0 %v1555
        %1635 = vmatprep.subr.bf16.mxu0 0
        %1636 = vmatpush2.bf16.msra.mxu0 0
        %1637 = vmatprep.subr.bf16.mxu0 0
        %1638 = vmatpush2.bf16.msra.mxu0 0
        %1639 = vmatprep.subr.bf16.mxu0 0
        %1640 = vmatpush2.bf16.msra.mxu0 0
        %1641 = vmatprep.subr.bf16.mxu0 0
        %1642 = vmatpush2.bf16.msra.mxu0 0
        %1643 = vmatprep.subr.bf16.mxu0 0
        %1644 = vmatpush2.bf16.msra.mxu0 0
        %1645 = vmatprep.subr.bf16.mxu0 0
        %1646 = vmatpush2.bf16.msra.mxu0 0
        %1647 = vmatprep.subr.bf16.mxu0 0
        %1648 = vmatpush2.bf16.msra.mxu0 0
        %1649 = vmatprep.subr.bf16.mxu0 0
        %1650 = vmatpush2.bf16.msra.mxu0 0
        %1651 = vmatprep.mubr.bf16.mxu0 0
        %1652 = vmatmul.mubr.bf16.gmra.mxu0 %v1404
        %v1653 = vpop.f32.mrf.mxu0
        %v1654 = vadd.f32 %v1442, %v1653
        %v1655 = vpop.f32.mrf.mxu0
        %v1656 = vadd.f32 %v1446, %v1655
        %v1657 = vpop.f32.mrf.mxu0
        %v1658 = vpop.f32.mrf.mxu0
        %1659 = vdwg.mxu0
        %1660 = vmatprep.subr.bf16.mxu0 %v1586
        %1661 = vmatpush1.bf16.msra.mxu0 %v1585
        %1662 = vmatprep.subr.bf16.mxu0 %v1582
        %1663 = vmatpush1.bf16.msra.mxu0 %v1581
        %1664 = vmatprep.subr.bf16.mxu0 %v1578
        %1665 = vmatpush1.bf16.msra.mxu0 %v1577
        %1666 = vmatprep.subr.bf16.mxu0 %v1574
        %1667 = vmatpush1.bf16.msra.mxu0 %v1573
        %1668 = vmatprep.subr.bf16.mxu0 %v1570
        %1669 = vmatpush1.bf16.msra.mxu0 %v1569
        %1670 = vmatprep.subr.bf16.mxu0 %v1566
        %1671 = vmatpush1.bf16.msra.mxu0 %v1565
        %1672 = vmatprep.subr.bf16.mxu0 %v1562
        %1673 = vmatpush1.bf16.msra.mxu0 %v1561
        %1674 = vmatprep.subr.bf16.mxu0 %v1558
        %1675 = vmatpush1.bf16.msra.mxu0 %v1557
        %1676 = vmatprep.subr.bf16.mxu0 0
        %1677 = vmatpush2.bf16.msra.mxu0 0
        %1678 = vmatprep.subr.bf16.mxu0 0
        %1679 = vmatpush2.bf16.msra.mxu0 0
        %1680 = vmatprep.subr.bf16.mxu0 0
        %1681 = vmatpush2.bf16.msra.mxu0 0
        %1682 = vmatprep.subr.bf16.mxu0 0
        %1683 = vmatpush2.bf16.msra.mxu0 0
        %1684 = vmatprep.subr.bf16.mxu0 0
        %1685 = vmatpush2.bf16.msra.mxu0 0
        %1686 = vmatprep.subr.bf16.mxu0 0
        %1687 = vmatpush2.bf16.msra.mxu0 0
        %1688 = vmatprep.subr.bf16.mxu0 0
        %1689 = vmatpush2.bf16.msra.mxu0 0
        %1690 = vmatprep.subr.bf16.mxu0 0
        %1691 = vmatpush2.bf16.msra.mxu0 0
        %1692 = vmatprep.mubr.bf16.mxu0 0
        %1693 = vmatmul.mubr.bf16.gmra.mxu0 %v1404
        %v1694 = vpop.f32.mrf.mxu0
        %v1695 = vadd.f32 %v1450, %v1694
        %v1696 = vpop.f32.mrf.mxu0
        %v1697 = vadd.f32 %v1454, %v1696
        %v1698 = vpop.f32.mrf.mxu0
        %v1699 = vpop.f32.mrf.mxu0
        %1700 = vdwg.mxu0
        %v1701 = vmax.f32 %v1654, 0.0
        %v1702 = vmax.f32 %v1656, 0.0
        %v1703 = vmax.f32 %v1695, 0.0
        %v1704 = vmax.f32 %v1697, 0.0
        %v1705 = vpack.c.bf16 %v1701, %v1701
        %v1706 = vpack.c.bf16 %v1702, %v1702
        %v1707 = vpack.c.bf16 %v1703, %v1703
        %v1708 = vpack.c.bf16 %v1704, %v1704
        %v1709 = vld [vmem:[#allocation13] sm:$0xf]
        %v1710 = vld [vmem:[#allocation13 + $0x4] sm:$0xf]
        %v1711 = vld [vmem:[#allocation13 + $0x8] sm:$0xf]
        %v1712 = vld [vmem:[#allocation13 + $0xc] sm:$0xf]
        %v1713 = vld [vmem:[#allocation13 + $0x10] sm:$0xf]
        %v1714 = vld [vmem:[#allocation13 + $0x14] sm:$0xf]
        %v1715 = vld [vmem:[#allocation13 + $0x18] sm:$0xf]
        %v1716 = vld [vmem:[#allocation13 + $0x1c] sm:$0xf]
        %v1717 = vld [vmem:[#allocation13 + $0x20] sm:$0xf]
        %v1718 = vld [vmem:[#allocation13 + $0x24] sm:$0xf]
        %v1719 = vld [vmem:[#allocation13 + $0x28] sm:$0xf]
        %v1720 = vld [vmem:[#allocation13 + $0x2c] sm:$0xf]
        %v1721 = vld [vmem:[#allocation13 + $0x30] sm:$0xf]
        %v1722 = vld [vmem:[#allocation13 + $0x34] sm:$0xf]
        %v1723 = vld [vmem:[#allocation13 + $0x38] sm:$0xf]
        %v1724 = vld [vmem:[#allocation13 + $0x3c] sm:$0xf]
        %v1725 = vld [vmem:[#allocation13 + $0x40] sm:$0xf]
        %v1726 = vld [vmem:[#allocation13 + $0x44] sm:$0xf]
        %v1727 = vld [vmem:[#allocation13 + $0x48] sm:$0xf]
        %v1728 = vld [vmem:[#allocation13 + $0x4c] sm:$0xf]
        %v1729 = vld [vmem:[#allocation13 + $0x50] sm:$0xf]
        %v1730 = vld [vmem:[#allocation13 + $0x54] sm:$0xf]
        %v1731 = vld [vmem:[#allocation13 + $0x58] sm:$0xf]
        %v1732 = vld [vmem:[#allocation13 + $0x5c] sm:$0xf]
        %v1733 = vld [vmem:[#allocation13 + $0x60] sm:$0xf]
        %v1734 = vld [vmem:[#allocation13 + $0x64] sm:$0xf]
        %v1735 = vld [vmem:[#allocation13 + $0x68] sm:$0xf]
        %v1736 = vld [vmem:[#allocation13 + $0x6c] sm:$0xf]
        %v1737 = vld [vmem:[#allocation13 + $0x70] sm:$0xf]
        %v1738 = vld [vmem:[#allocation13 + $0x74] sm:$0xf]
        %v1739 = vld [vmem:[#allocation13 + $0x78] sm:$0xf]
        %v1740 = vld [vmem:[#allocation13 + $0x7c] sm:$0xf]
        %v1741 = vld [vmem:[#allocation13 + $0x80] sm:$0xf]
        %v1742 = vld [vmem:[#allocation13 + $0x84] sm:$0xf]
        %v1743 = vld [vmem:[#allocation13 + $0x88] sm:$0xf]
        %v1744 = vld [vmem:[#allocation13 + $0x8c] sm:$0xf]
        %v1745 = vld [vmem:[#allocation13 + $0x90] sm:$0xf]
        %v1746 = vld [vmem:[#allocation13 + $0x94] sm:$0xf]
        %v1747 = vld [vmem:[#allocation13 + $0x98] sm:$0xf]
        %v1748 = vld [vmem:[#allocation13 + $0x9c] sm:$0xf]
        %v1749 = vld [vmem:[#allocation13 + $0xa0] sm:$0xf]
        %v1750 = vld [vmem:[#allocation13 + $0xa4] sm:$0xf]
        %v1751 = vld [vmem:[#allocation13 + $0xa8] sm:$0xf]
        %v1752 = vld [vmem:[#allocation13 + $0xac] sm:$0xf]
        %v1753 = vld [vmem:[#allocation13 + $0xb0] sm:$0xf]
        %v1754 = vld [vmem:[#allocation13 + $0xb4] sm:$0xf]
        %v1755 = vld [vmem:[#allocation13 + $0xb8] sm:$0xf]
        %v1756 = vld [vmem:[#allocation13 + $0xbc] sm:$0xf]
        %v1757 = vld [vmem:[#allocation13 + $0xc0] sm:$0xf]
        %v1758 = vld [vmem:[#allocation13 + $0xc4] sm:$0xf]
        %v1759 = vld [vmem:[#allocation13 + $0xc8] sm:$0xf]
        %v1760 = vld [vmem:[#allocation13 + $0xcc] sm:$0xf]
        %v1761 = vld [vmem:[#allocation13 + $0xd0] sm:$0xf]
        %v1762 = vld [vmem:[#allocation13 + $0xd4] sm:$0xf]
        %v1763 = vld [vmem:[#allocation13 + $0xd8] sm:$0xf]
        %v1764 = vld [vmem:[#allocation13 + $0xdc] sm:$0xf]
        %v1765 = vld [vmem:[#allocation13 + $0xe0] sm:$0xf]
        %v1766 = vld [vmem:[#allocation13 + $0xe4] sm:$0xf]
        %v1767 = vld [vmem:[#allocation13 + $0xe8] sm:$0xf]
        %v1768 = vld [vmem:[#allocation13 + $0xec] sm:$0xf]
        %v1769 = vld [vmem:[#allocation13 + $0xf0] sm:$0xf]
        %v1770 = vld [vmem:[#allocation13 + $0xf4] sm:$0xf]
        %v1771 = vld [vmem:[#allocation13 + $0xf8] sm:$0xf]
        %v1772 = vld [vmem:[#allocation13 + $0xfc] sm:$0xf]
        %v1773 = vld [vmem:[%s9] sm:$0x1]
        %v1775 = vlaneseq
        %v1776 = vshrl.u32 %v1775, 7
        %v1777 = vsub.s32 0, %v1776
        %v1778 = vrot.slane %v1773, %v1777
        %v1844 = vunpack.c.l.b16 %v1709
        %v1845 = vunpack.c.l.b16 %v1710
        %v1846 = vunpack.c.l.b16 %v1711
        %v1847 = vunpack.c.l.b16 %v1712
        %v1848 = vunpack.c.l.b16 %v1713
        %v1849 = vunpack.c.l.b16 %v1714
        %v1850 = vunpack.c.l.b16 %v1715
        %v1851 = vunpack.c.l.b16 %v1716
        %v1852 = vunpack.c.l.b16 %v1717
        %v1853 = vunpack.c.l.b16 %v1718
        %v1854 = vunpack.c.l.b16 %v1719
        %v1855 = vunpack.c.l.b16 %v1720
        %v1856 = vunpack.c.l.b16 %v1721
        %v1857 = vunpack.c.l.b16 %v1722
        %v1858 = vunpack.c.l.b16 %v1723
        %v1859 = vunpack.c.l.b16 %v1724
        %v1860 = vunpack.c.l.b16 %v1725
        %v1861 = vunpack.c.l.b16 %v1726
        %v1862 = vunpack.c.l.b16 %v1727
        %v1863 = vunpack.c.l.b16 %v1728
        %v1864 = vunpack.c.l.b16 %v1729
        %v1865 = vunpack.c.l.b16 %v1730
        %v1866 = vunpack.c.l.b16 %v1731
        %v1867 = vunpack.c.l.b16 %v1732
        %v1868 = vunpack.c.l.b16 %v1733
        %v1869 = vunpack.c.l.b16 %v1734
        %v1870 = vunpack.c.l.b16 %v1735
        %v1871 = vunpack.c.l.b16 %v1736
        %v1872 = vunpack.c.l.b16 %v1737
        %v1873 = vunpack.c.l.b16 %v1738
        %v1874 = vunpack.c.l.b16 %v1739
        %v1875 = vunpack.c.l.b16 %v1740
        %v1876 = vunpack.c.l.b16 %v1741
        %v1877 = vunpack.c.l.b16 %v1742
        %v1878 = vunpack.c.l.b16 %v1743
        %v1879 = vunpack.c.l.b16 %v1744
        %v1880 = vunpack.c.l.b16 %v1745
        %v1881 = vunpack.c.l.b16 %v1746
        %v1882 = vunpack.c.l.b16 %v1747
        %v1883 = vunpack.c.l.b16 %v1748
        %v1884 = vunpack.c.l.b16 %v1749
        %v1885 = vunpack.c.l.b16 %v1750
        %v1886 = vunpack.c.l.b16 %v1751
        %v1887 = vunpack.c.l.b16 %v1752
        %v1888 = vunpack.c.l.b16 %v1753
        %v1889 = vunpack.c.l.b16 %v1754
        %v1890 = vunpack.c.l.b16 %v1755
        %v1891 = vunpack.c.l.b16 %v1756
        %v1892 = vunpack.c.l.b16 %v1757
        %v1893 = vunpack.c.l.b16 %v1758
        %v1894 = vunpack.c.l.b16 %v1759
        %v1895 = vunpack.c.l.b16 %v1760
        %v1896 = vunpack.c.l.b16 %v1761
        %v1897 = vunpack.c.l.b16 %v1762
        %v1898 = vunpack.c.l.b16 %v1763
        %v1899 = vunpack.c.l.b16 %v1764
        %v1900 = vunpack.c.l.b16 %v1765
        %v1901 = vunpack.c.l.b16 %v1766
        %v1902 = vunpack.c.l.b16 %v1767
        %v1903 = vunpack.c.l.b16 %v1768
        %v1904 = vunpack.c.l.b16 %v1769
        %v1905 = vunpack.c.l.b16 %v1770
        %v1906 = vunpack.c.l.b16 %v1771
        %v1907 = vunpack.c.l.b16 %v1772
        %v1908 = vpack.c.b16 %v1845, %v1844
        %v1909 = vpack.c.b16 %v1847, %v1846
        %v1910 = vpack.c.b16 %v1849, %v1848
        %v1911 = vpack.c.b16 %v1851, %v1850
        %v1912 = vpack.c.b16 %v1853, %v1852
        %v1913 = vpack.c.b16 %v1855, %v1854
        %v1914 = vpack.c.b16 %v1857, %v1856
        %v1915 = vpack.c.b16 %v1859, %v1858
        %v1916 = vpack.c.b16 %v1861, %v1860
        %v1917 = vpack.c.b16 %v1863, %v1862
        %v1918 = vpack.c.b16 %v1865, %v1864
        %v1919 = vpack.c.b16 %v1867, %v1866
        %v1920 = vpack.c.b16 %v1869, %v1868
        %v1921 = vpack.c.b16 %v1871, %v1870
        %v1922 = vpack.c.b16 %v1873, %v1872
        %v1923 = vpack.c.b16 %v1875, %v1874
        %v1924 = vpack.c.b16 %v1877, %v1876
        %v1925 = vpack.c.b16 %v1879, %v1878
        %v1926 = vpack.c.b16 %v1881, %v1880
        %v1927 = vpack.c.b16 %v1883, %v1882
        %v1928 = vpack.c.b16 %v1885, %v1884
        %v1929 = vpack.c.b16 %v1887, %v1886
        %v1930 = vpack.c.b16 %v1889, %v1888
        %v1931 = vpack.c.b16 %v1891, %v1890
        %v1932 = vpack.c.b16 %v1893, %v1892
        %v1933 = vpack.c.b16 %v1895, %v1894
        %v1934 = vpack.c.b16 %v1897, %v1896
        %v1935 = vpack.c.b16 %v1899, %v1898
        %v1936 = vpack.c.b16 %v1901, %v1900
        %v1937 = vpack.c.b16 %v1903, %v1902
        %v1938 = vpack.c.b16 %v1905, %v1904
        %v1939 = vpack.c.b16 %v1907, %v1906
        %1972 = vmatprep.subr.bf16.mxu0 0
        %1973 = vmatpush1.bf16.msra.mxu0 %v1915
        %1974 = vmatprep.subr.bf16.mxu0 0
        %1975 = vmatpush1.bf16.msra.mxu0 %v1914
        %1976 = vmatprep.subr.bf16.mxu0 0
        %1977 = vmatpush1.bf16.msra.mxu0 %v1913
        %1978 = vmatprep.subr.bf16.mxu0 0
        %1979 = vmatpush1.bf16.msra.mxu0 %v1912
        %1980 = vmatprep.subr.bf16.mxu0 0
        %1981 = vmatpush1.bf16.msra.mxu0 %v1911
        %1982 = vmatprep.subr.bf16.mxu0 0
        %1983 = vmatpush1.bf16.msra.mxu0 %v1910
        %1984 = vmatprep.subr.bf16.mxu0 0
        %1985 = vmatpush1.bf16.msra.mxu0 %v1909
        %1986 = vmatprep.subr.bf16.mxu0 0
        %1987 = vmatpush1.bf16.msra.mxu0 %v1908
        %1988 = vmatprep.subr.bf16.mxu0 0
        %1989 = vmatpush2.bf16.msra.mxu0 %v1923
        %1990 = vmatprep.subr.bf16.mxu0 0
        %1991 = vmatpush2.bf16.msra.mxu0 %v1922
        %1992 = vmatprep.subr.bf16.mxu0 0
        %1993 = vmatpush2.bf16.msra.mxu0 %v1921
        %1994 = vmatprep.subr.bf16.mxu0 0
        %1995 = vmatpush2.bf16.msra.mxu0 %v1920
        %1996 = vmatprep.subr.bf16.mxu0 0
        %1997 = vmatpush2.bf16.msra.mxu0 %v1919
        %1998 = vmatprep.subr.bf16.mxu0 0
        %1999 = vmatpush2.bf16.msra.mxu0 %v1918
        %2000 = vmatprep.subr.bf16.mxu0 0
        %2001 = vmatpush2.bf16.msra.mxu0 %v1917
        %2002 = vmatprep.subr.bf16.mxu0 0
        %2003 = vmatpush2.bf16.msra.mxu0 %v1916
        %2004 = vmatprep.mubr.bf16.mxu0 %v1706
        %2005 = vmatmul.mubr.bf16.gmra.mxu0 %v1705
        %v2006 = vpop.f32.mrf.mxu0
        %v2007 = vadd.f32 %v1778, %v2006
        %v2008 = vpop.f32.mrf.mxu0
        %v2009 = vpop.f32.mrf.mxu0
        %v2010 = vpop.f32.mrf.mxu0
        %2011 = vdwg.mxu0
        %2012 = vmatprep.subr.bf16.mxu0 0
        %2013 = vmatpush1.bf16.msra.mxu0 %v1931
        %2014 = vmatprep.subr.bf16.mxu0 0
        %2015 = vmatpush1.bf16.msra.mxu0 %v1930
        %2016 = vmatprep.subr.bf16.mxu0 0
        %2017 = vmatpush1.bf16.msra.mxu0 %v1929
        %2018 = vmatprep.subr.bf16.mxu0 0
        %2019 = vmatpush1.bf16.msra.mxu0 %v1928
        %2020 = vmatprep.subr.bf16.mxu0 0
        %2021 = vmatpush1.bf16.msra.mxu0 %v1927
        %2022 = vmatprep.subr.bf16.mxu0 0
        %2023 = vmatpush1.bf16.msra.mxu0 %v1926
        %2024 = vmatprep.subr.bf16.mxu0 0
        %2025 = vmatpush1.bf16.msra.mxu0 %v1925
        %2026 = vmatprep.subr.bf16.mxu0 0
        %2027 = vmatpush1.bf16.msra.mxu0 %v1924
        %2028 = vmatprep.subr.bf16.mxu0 0
        %2029 = vmatpush2.bf16.msra.mxu0 %v1939
        %2030 = vmatprep.subr.bf16.mxu0 0
        %2031 = vmatpush2.bf16.msra.mxu0 %v1938
        %2032 = vmatprep.subr.bf16.mxu0 0
        %2033 = vmatpush2.bf16.msra.mxu0 %v1937
        %2034 = vmatprep.subr.bf16.mxu0 0
        %2035 = vmatpush2.bf16.msra.mxu0 %v1936
        %2036 = vmatprep.subr.bf16.mxu0 0
        %2037 = vmatpush2.bf16.msra.mxu0 %v1935
        %2038 = vmatprep.subr.bf16.mxu0 0
        %2039 = vmatpush2.bf16.msra.mxu0 %v1934
        %2040 = vmatprep.subr.bf16.mxu0 0
        %2041 = vmatpush2.bf16.msra.mxu0 %v1933
        %2042 = vmatprep.subr.bf16.mxu0 0
        %2043 = vmatpush2.bf16.msra.mxu0 %v1932
        %2044 = vmatprep.mubr.bf16.mxu0 %v1708
        %2045 = vmatmul.mubr.bf16.gmra.mxu0 %v1707
        %v2046 = vpop.f32.mrf.mxu0
        %v2047 = vadd.f32 %v2007, %v2046
        %v2048 = vpop.f32.mrf.mxu0
        %v2049 = vpop.f32.mrf.mxu0
        %v2050 = vpop.f32.mrf.mxu0
        %2051 = vdwg.mxu0
        %v2052 = vadd.f32 %v1403, %v2047
        %2053 = vadd.xlane.f32.xlu0 %v2052
        %v2054 = vpop.xlane.xlu0 %2053
        %v2055 = vmul.f32 %v2054, %v1378
        %v2056 = vsub.f32 %v2052, %v2055
        %v2057 = vmul.f32 %v2056, %v2056
        %2058 = vadd.xlane.f32.xlu0 %v2057
        %v2059 = vpop.xlane.xlu0 %2058
        %v2060 = vmul.f32 %v2059, %v1378
        %v2061 = vadd.f32 %v2060, 1e-05
        %v2062 = vrsqrt.pop %v2061
        %v2063 = vmul.f32 %v2056, %v2062
        %v2064 = vld [vmem:[%s10] sm:$0x1]
        %v2066 = vlaneseq
        %v2067 = vshrl.u32 %v2066, 7
        %v2068 = vsub.s32 0, %v2067
        %v2069 = vrot.slane %v2064, %v2068
        %v2071 = vmul.f32 %v2063, %v2069
        %v2072 = vld [vmem:[%s11] sm:$0x1]
        %v2074 = vlaneseq
        %v2075 = vshrl.u32 %v2074, 7
        %v2076 = vsub.s32 0, %v2075
        %v2077 = vrot.slane %v2072, %v2076
        %v2079 = vadd.f32 %v2071, %v2077
        %2080 = vst [vmem:[%s544] sm:$0xff] %v2079
        %s2081 = sand.u32 %s320, 1
        %s2082 = scalar_lea.sflag [#allocation6], %s2081
        %s2083 = sand.u32 %s320, 1
        %s2084 = smul.addr %s2083, 8
        %s2085 = scalar_lea.vmem [#allocation15], %s2084
        // Predicated region
        $region97: #{tpu_custom_call.1} parent=67 // pred_check
          %p2086 = pneg %p330
        $region98: #{tpu_custom_call.1} parent=67 // pred_check_branch
          %2088 = sbr.rel (%p2086) target = $region100
        $region99: #{tpu_custom_call.1} parent=67 // pred_region
          %s2090 = ssub.s32 128, 128
          %2091 = vsyncadd %s2082, %s2090
          %s2092 = smul.addr %s38, 2
          %s2093 = sadd.s32 %s39, %s2092
          %s2094 = smul.addr %s2093, 128
          %s2095 = scalar_lea.hbm %s12, %s2094
          %s2097 = sshll.u32 %s2085, 4
          %s2098 = int_to_ptr.vmem [resolvable:$true] %s2097
          %2100 = dma.vmem_to_hbm [thread:$0]  %s2098, 128, %s2095, %s2082
        $region100: #{tpu_custom_call.1} parent=67 // pred_fallthru
          _
      $region68: #{tpu_custom_call.1} parent=5 // pred_fallthru
        _
      %p2101 = scmp.le.s32.totalorder 2, %s29
      // Predicated region
      $region101: #{tpu_custom_call.1} parent=5 // pred_check
        %p2102 = pneg %p2101
      $region102: #{tpu_custom_call.1} parent=5 // pred_check_branch
        %2104 = sbr.rel (%p2102) target = $region104
      $region103: #{tpu_custom_call.1} parent=5 // pred_region
        %s2105 = ssub.s32 %s29, 2
        // Predicated region
        $region105: #{tpu_custom_call.1} parent=103 // pred_check
          %p2106 = pneg %p336
        $region106: #{tpu_custom_call.1} parent=103 // pred_check_branch
          %2108 = sbr.rel (%p2106) target = $region108
        $region107: #{tpu_custom_call.1} parent=103 // pred_region
          %s2109 = sand.u32 %s321, 1
          %s2110 = scalar_lea.sflag [#allocation6], %s2109
          %s2111 = sand.u32 %s321, 1
          %s2112 = smul.addr %s2111, 8
          %s2113 = scalar_lea.vmem [#allocation15], %s2112
          %2114 = dma.done %s2110, 128
        $region108: #{tpu_custom_call.1} parent=103 // pred_fallthru
          _
      $region104: #{tpu_custom_call.1} parent=5 // pred_fallthru
        _
    $region6: #{tpu_custom_call.1} parent=1 // loop_footer
      %s33 = sadd.s32 1, %s29
    $region7: #{tpu_custom_call.1} parent=1 // loop_footer_branch
      %28 = sbr.rel target = $region3
    $region8: #{tpu_custom_call.1} parent=1 // loop_exit
      _
    %2115 = vsyncpa [#allocation5], 1
    %s2116 = scalar_lea.sflag [#allocation5], 1
    %2117 = vsyncpa %s2116, 1
    %2118 = vsyncpa [#allocation8], 1
    %s2119 = scalar_lea.sflag [#allocation8], 1
    %2120 = vsyncpa %s2119, 1
    %2121 = vsyncpa [#allocation11], 1
    %2122 = vsyncpa [#allocation14], 1
    %2123 = vsyncpa [#allocation6], 1
    %s2124 = scalar_lea.sflag [#allocation6], 1
    %2125 = vsyncpa %s2124, 1

</llo_original>
